<compile_context>
chip_gen: v6e
topology: v6e:2x2x1
jax: 0.10.0
libtpu: 0.0.40
codegen_flags: <defaults>
</compile_context>

<pallas_src>
import functools

import jax
import jax.numpy as jnp
from jax.experimental import pallas as pl
from jax.experimental.pallas import tpu as pltpu

EPS = 1e-5                    # nn.BatchNorm2d default eps
LANE = 128                    # lane width: pad channels to multiples of this
ROW_ALIGN = 16                # sublane alignment safe for bf16 tiles
TILE_M_TARGET = 512           # amortizes pipeline overhead, safe for v7x VMEM
VMEM_LIMIT = 32 * 1024 * 1024


# ----------------------------- Pallas kernels ------------------------------ #

def _store_partial_stats(stats_ref, y):
    """Write this tile's per-channel sum / sum-of-squares (from the f32 y)."""
    stats_ref[0, 0:1, :] = jnp.sum(y, axis=0, keepdims=True)
    stats_ref[0, 1:2, :] = jnp.sum(y * y, axis=0, keepdims=True)


def _bn_scale_shift(stats, g, b, inv_count):
    """Precombined BN affine: scale = gamma*rsqrt(var+eps), shift = beta-scale*mu."""
    mean = stats[0:1, :] * inv_count
    var = jnp.maximum(stats[1:2, :] * inv_count - mean * mean, 0.0)
    scale = g * jax.lax.rsqrt(var + EPS)
    shift = b - scale * mean
    return scale, shift


def _matmul_stats_kernel(x_ref, w_ref, y_ref, stats_ref):
    """1x1 conv as a row-tiled bf16 matmul; emits per-tile BN partial stats."""
    y = jnp.dot(x_ref[...], w_ref[...], preferred_element_type=jnp.float32)
    y_ref[...] = y.astype(y_ref.dtype)
    _store_partial_stats(stats_ref, y)


def _fused_bn_matmul_stats_kernel(y_prev_ref, pstats_ref, g_ref, b_ref, w_ref,
                                  y_ref, stats_ref, *, inv_count, valid_rows,
                                  tile_m):
    """Previous layer's BN+ReLU applied in-VMEM, then 1x1 matmul + new stats."""
    scale, shift = _bn_scale_shift(pstats_ref[...], g_ref[...], b_ref[...],
                                   inv_count)
    a = jnp.maximum(y_prev_ref[...] * scale + shift, 0.0)
    if valid_rows is not None:            # keep padded rows exactly zero
        row = (pl.program_id(0) * tile_m
               + jax.lax.broadcasted_iota(jnp.int32, a.shape, 0))
        a = jnp.where(row < valid_rows, a, 0.0)
    y = jnp.dot(a.astype(jnp.bfloat16), w_ref[...],
                preferred_element_type=jnp.float32)
    y_ref[...] = y.astype(y_ref.dtype)
    _store_partial_stats(stats_ref, y)


def _conv3x3_stats_kernel(x_ref, w_ref, y_ref, stats_ref, acc_ref, *, taps,
                          rows_out):
    """3x3 conv for one image: 9 tap matmuls over pre-shifted slabs (no im2col).

    x_ref: (1, G, R, C) column-shifted slab stack, w_ref: (9, C, Co). Each tap
    is a static 2-D slice -> MXU matmul -> accumulate into a VMEM scratch ref
    (bounded live ranges; no 9-term SSA accumulator).
    """
    acc_ref[...] = jnp.zeros_like(acc_ref)
    for group, row_start, w_idx in taps:
        slab = x_ref[0, group, row_start:row_start + rows_out, :]
        acc_ref[...] += jnp.dot(slab, w_ref[w_idx],
                                preferred_element_type=jnp.float32)
    y = acc_ref[...]
    y_ref[0] = y.astype(y_ref.dtype)
    _store_partial_stats(stats_ref, y)


def _bn_apply_kernel(*refs, inv_count, relu, has_residual, valid_rows, tile_m):
    """Apply BN (training-mode batch stats) as one FMA, + optional residual/ReLU."""
    if has_residual:
        y_ref, stats_ref, g_ref, b_ref, res_ref, o_ref = refs
    else:
        y_ref, stats_ref, g_ref, b_ref, o_ref = refs
        res_ref = None

    scale, shift = _bn_scale_shift(stats_ref[...], g_ref[...], b_ref[...],
                                   inv_count)
    out = y_ref[...] * scale + shift
    if has_residual:
        out = out + res_ref[...]
    if relu:
        out = jnp.maximum(out, 0.0)
    if valid_rows is not None:            # keep padded rows exactly zero
        row = (pl.program_id(0) * tile_m
               + jax.lax.broadcasted_iota(jnp.int32, out.shape, 0))
        out = jnp.where(row < valid_rows, out, 0.0)
    o_ref[...] = out.astype(o_ref.dtype)


# ----------------------------- kernel wrappers ------------------------------ #

def _round_up(x, m):
    return (x + m - 1) // m * m


def _choose_tile(m):
    m_aligned = _round_up(m, ROW_ALIGN)
    tile = min(TILE_M_TARGET, m_aligned)
    return tile, _round_up(m_aligned, tile)


def _params():
    # No resident accumulators anywhere -> all grid axes are parallel
    # (megacore sharding on v7x).
    return pltpu.CompilerParams(dimension_semantics=("parallel",),
                                vmem_limit_bytes=VMEM_LIMIT)


def matmul_bn_stats(x2d, w, tile_m):
    m_pad, k = x2d.shape
    co = w.shape[1]
    nt = m_pad // tile_m
    bytes_accessed = (x2d.size * x2d.dtype.itemsize + w.size * 2
                      + m_pad * co * 2 + nt * 2 * co * 4)
    y, parts = pl.pallas_call(
        _matmul_stats_kernel,
        grid=(nt,),
        in_specs=[pl.BlockSpec((tile_m, k), lambda i: (i, 0)),
                  pl.BlockSpec((k, co), lambda i: (0, 0))],
        out_specs=(pl.BlockSpec((tile_m, co), lambda i: (i, 0)),
                   pl.BlockSpec((1, 2, co), lambda i: (i, 0, 0))),
        out_shape=(jax.ShapeDtypeStruct((m_pad, co), jnp.bfloat16),
                   jax.ShapeDtypeStruct((nt, 2, co), jnp.float32)),
        compiler_params=_params(),
        cost_estimate=pl.CostEstimate(flops=2 * m_pad * k * co,
                                      transcendentals=0,
                                      bytes_accessed=int(bytes_accessed)),
    )(x2d, w)
    return y, jnp.sum(parts, axis=0)


def fused_bn_matmul_stats(y_prev, pstats, gamma, beta, w, *, count, tile_m):
    """BN(prev stats)+ReLU fused into a 1x1 matmul; emits the new layer's stats."""
    m_pad, k = y_prev.shape
    co = w.shape[1]
    nt = m_pad // tile_m
    valid_rows = count if m_pad != count else None
    kernel = functools.partial(_fused_bn_matmul_stats_kernel,
                               inv_count=1.0 / count, valid_rows=valid_rows,
                               tile_m=tile_m)
    bytes_accessed = (y_prev.size * 2 + w.size * 2 + m_pad * co * 2
                      + 4 * k * 4 + nt * 2 * co * 4)
    y, parts = pl.pallas_call(
        kernel,
        grid=(nt,),
        in_specs=[pl.BlockSpec((tile_m, k), lambda i: (i, 0)),
                  pl.BlockSpec((2, k), lambda i: (0, 0)),
                  pl.BlockSpec((1, k), lambda i: (0, 0)),
                  pl.BlockSpec((1, k), lambda i: (0, 0)),
                  pl.BlockSpec((k, co), lambda i: (0, 0))],
        out_specs=(pl.BlockSpec((tile_m, co), lambda i: (i, 0)),
                   pl.BlockSpec((1, 2, co), lambda i: (i, 0, 0))),
        out_shape=(jax.ShapeDtypeStruct((m_pad, co), jnp.bfloat16),
                   jax.ShapeDtypeStruct((nt, 2, co), jnp.float32)),
        compiler_params=_params(),
        cost_estimate=pl.CostEstimate(flops=2 * m_pad * k * co + 4 * m_pad * k,
                                      transcendentals=k,
                                      bytes_accessed=int(bytes_accessed)),
    )(y_prev, pstats, gamma, beta, w)
    return y, jnp.sum(parts, axis=0)


def conv3x3_bn_stats(xin, w9, taps, rows_out):
    n, g, r, c = xin.shape
    co = w9.shape[-1]
    kernel = functools.partial(_conv3x3_stats_kernel, taps=taps,
                               rows_out=rows_out)
    bytes_accessed = (xin.size * 2 + w9.size * 2 + n * rows_out * co * 2
                      + n * 2 * co * 4)
    y, parts = pl.pallas_call(
        kernel,
        grid=(n,),
        in_specs=[pl.BlockSpec((1, g, r, c), lambda i: (i, 0, 0, 0)),
                  pl.BlockSpec((9, c, co), lambda i: (0, 0, 0))],
        out_specs=(pl.BlockSpec((1, rows_out, co), lambda i: (i, 0, 0)),
                   pl.BlockSpec((1, 2, co), lambda i: (i, 0, 0))),
        out_shape=(jax.ShapeDtypeStruct((n, rows_out, co), jnp.bfloat16),
                   jax.ShapeDtypeStruct((n, 2, co), jnp.float32)),
        scratch_shapes=[pltpu.VMEM((rows_out, co), jnp.float32)],
        compiler_params=_params(),
        cost_estimate=pl.CostEstimate(flops=2 * n * rows_out * 9 * c * co,
                                      transcendentals=0,
                                      bytes_accessed=int(bytes_accessed)),
    )(xin, w9)
    return y, jnp.sum(parts, axis=0)


def bn_apply(y2d, stats, gamma, beta, *, count, tile_m, relu, out_dtype,
             residual=None):
    m_pad, co = y2d.shape
    has_res = residual is not None
    valid_rows = count if m_pad != count else None
    kernel = functools.partial(_bn_apply_kernel, inv_count=1.0 / count,
                               relu=relu, has_residual=has_res,
                               valid_rows=valid_rows, tile_m=tile_m)
    in_specs = [pl.BlockSpec((tile_m, co), lambda i: (i, 0)),
                pl.BlockSpec((2, co), lambda i: (0, 0)),
                pl.BlockSpec((1, co), lambda i: (0, 0)),
                pl.BlockSpec((1, co), lambda i: (0, 0))]
    args = [y2d, stats, gamma, beta]
    bytes_accessed = (y2d.size * y2d.dtype.itemsize
                      + m_pad * co * jnp.dtype(out_dtype).itemsize + 4 * co * 4)
    if has_res:
        in_specs.append(pl.BlockSpec((tile_m, co), lambda i: (i, 0)))
        args.append(residual)
        bytes_accessed += residual.size * residual.dtype.itemsize
    return pl.pallas_call(
        kernel,
        grid=(m_pad // tile_m,),
        in_specs=in_specs,
        out_specs=pl.BlockSpec((tile_m, co), lambda i: (i, 0)),
        out_shape=jax.ShapeDtypeStruct((m_pad, co), out_dtype),
        compiler_params=_params(),
        cost_estimate=pl.CostEstimate(flops=4 * m_pad * co,
                                      transcendentals=co,
                                      bytes_accessed=int(bytes_accessed)),
    )(*args)


# ------------------------------ JAX glue ------------------------------------ #

def _pad_channels(a, target):
    pad = target - a.shape[-1]
    if pad == 0:
        return a
    return jnp.pad(a, [(0, 0)] * (a.ndim - 1) + [(0, pad)])


def _prep_w1x1(w, ci_p, co_p):
    # (Co, Ci, 1, 1) -> (Ci, Co), channel-pad with zeros, bf16 for the MXU.
    w2 = jnp.transpose(w[:, :, 0, 0], (1, 0))
    w2 = jnp.pad(w2, ((0, ci_p - w2.shape[0]), (0, co_p - w2.shape[1])))
    return w2.astype(jnp.bfloat16)


def _prep_w3x3(w, ci_p, co_p):
    # (Co, Ci, 3, 3) -> (9, Ci, Co) indexed by tap = dy*3 + dx.
    co, ci = w.shape[0], w.shape[1]
    w2 = jnp.transpose(w, (2, 3, 1, 0)).reshape(9, ci, co)
    w2 = jnp.pad(w2, ((0, 0), (0, ci_p - ci), (0, co_p - co)))
    return w2.astype(jnp.bfloat16)


def _prep_gamma_beta(gamma, beta, co_p):
    g = jnp.pad(gamma, (0, co_p - gamma.shape[0])).reshape(1, co_p)
    b = jnp.pad(beta, (0, co_p - beta.shape[0])).reshape(1, co_p)
    return g.astype(jnp.float32), b.astype(jnp.float32)


def _prep_tap_slabs(a_img, stride):
    """Column-shifted slab layout for the 3x3 tap kernel (replaces im2col).

    Returns xin (N, G, R, C), taps (group, row_start, weight_idx), OH, OW.
    Tap (dy, dx) of the padded conv maps to a contiguous 2-D row range of one
    slab group, so the kernel needs only static slices (no gathers/reshapes).
    """
    n, h, w, c = a_img.shape
    xp = jnp.pad(a_img, ((0, 0), (1, 1), (1, 1), (0, 0)))     # conv padding=1
    oh = (h - 1) // stride + 1
    ow = (w - 1) // stride + 1
    groups, taps = [], []
    if stride == 1:
        for dx in range(3):
            groups.append(xp[:, :, dx:dx + w, :].reshape(n, (h + 2) * w, c))
        for dy in range(3):
            for dx in range(3):
                taps.append((dx, dy * w, dy * 3 + dx))
    else:  # stride == 2: additionally split H into even/odd phases
        r_h = [-(-(h + 2 - py) // 2) for py in (0, 1)]
        r_max = max(r_h)
        for dx in range(3):
            for py in range(2):
                sub = xp[:, py::2, dx::2, :][:, :, :ow, :]
                sub = jnp.pad(sub, ((0, 0), (0, r_max - sub.shape[1]),
                                    (0, 0), (0, 0)))
                groups.append(sub.reshape(n, r_max * ow, c))
        for dy in range(3):
            for dx in range(3):
                taps.append((dx * 2 + dy % 2, (dy // 2) * ow, dy * 3 + dx))
    return jnp.stack(groups, axis=1), tuple(taps), oh, ow


def init_params(key, in_c):
    """Deterministic synthetic parameters matching the PyTorch module shapes."""
    out_c = in_c // 4

    def conv_params(k, ci, co, ksz):
        kw, kb, kg, kbt = jax.random.split(k, 4)
        return dict(
            w=0.1 * jax.random.normal(kw, (co, ci, ksz, ksz), jnp.float32),
            b=0.1 * jax.random.normal(kb, (co,), jnp.float32),
            gamma=1.0 + 0.1 * jax.random.normal(kg, (co,), jnp.float32),
            beta=0.1 * jax.random.normal(kbt, (co,), jnp.float32),
        )

    ks = jax.random.split(key, 5)
    return dict(
        conv1x1_1=conv_params(ks[0], in_c, out_c, 1),
        conv3x3_s1=conv_params(ks[1], out_c, out_c, 3),
        conv1x1_2=conv_params(ks[2], out_c, in_c, 1),
        download=conv_params(ks[3], out_c, out_c, 3),
        download_conv=conv_params(ks[4], out_c, in_c, 1),
    )


def _bottleneck_forward(x_nchw, params, *, is_resnet=True):
    n, c_in, h, w = x_nchw.shape
    c_mid = c_in // 4
    cin_p = _round_up(c_in, LANE)
    cmid_p = _round_up(c_mid, LANE)

    x_nhwc = _pad_channels(jnp.transpose(x_nchw, (0, 2, 3, 1)), cin_p)
    m = n * h * w
    tile_m, m_pad = _choose_tile(m)
    x2d = x_nhwc.reshape(m, cin_p)
    if m_pad != m:
        x2d = jnp.pad(x2d, ((0, m_pad - m), (0, 0)))
    x2d_bf16 = x2d.astype(jnp.bfloat16)   # 2 B/elem matmul read; f32 kept for residual

    # conv1x1_1: Conv 1x1 + BN + ReLU  (bias dropped: cancels under train BN)
    p1 = params["conv1x1_1"]
    y1, s1 = matmul_bn_stats(x2d_bf16, _prep_w1x1(p1["w"], cin_p, cmid_p), tile_m)
    g1, b1 = _prep_gamma_beta(p1["gamma"], p1["beta"], cmid_p)
    a1 = bn_apply(y1, s1, g1, b1, count=m, tile_m=tile_m, relu=True,
                  out_dtype=jnp.bfloat16)
    a1_img = a1[:m].reshape(n, h, w, cmid_p)

    if is_resnet:
        # conv3x3_s1: Conv 3x3 s=1 p=1 (in-kernel 9-tap accumulation, BN fused below)
        p2 = params["conv3x3_s1"]
        xin, taps, oh, ow = _prep_tap_slabs(a1_img, stride=1)
        y2, s2 = conv3x3_bn_stats(xin, _prep_w3x3(p2["w"], cmid_p, cmid_p),
                                  taps, oh * ow)
        g2, b2 = _prep_gamma_beta(p2["gamma"], p2["beta"], cmid_p)
        y2f = y2.reshape(n * oh * ow, cmid_p)
        if m_pad != m:
            y2f = jnp.pad(y2f, ((0, m_pad - m), (0, 0)))

        # conv1x1_2: BN2+ReLU applied in-VMEM inside the matmul kernel (fusion)
        p3 = params["conv1x1_2"]
        y3, s3 = fused_bn_matmul_stats(y2f, s2, g2, b2,
                                       _prep_w1x1(p3["w"], cmid_p, cin_p),
                                       count=m, tile_m=tile_m)
        g3, b3 = _prep_gamma_beta(p3["gamma"], p3["beta"], cin_p)
        out2d = bn_apply(y3, s3, g3, b3, count=m, tile_m=tile_m, relu=True,
                         out_dtype=jnp.float32, residual=x2d)
        out = out2d[:m].reshape(n, h, w, cin_p)[..., :c_in]
        return jnp.transpose(out, (0, 3, 1, 2))

    # download: Conv 3x3 s=2 p=1 (BN fused into the following 1x1 matmul)
    p4 = params["download"]
    xin, taps, oh, ow = _prep_tap_slabs(a1_img, stride=2)
    y4, s4 = conv3x3_bn_stats(xin, _prep_w3x3(p4["w"], cmid_p, cmid_p),
                              taps, oh * ow)
    g4, b4 = _prep_gamma_beta(p4["gamma"], p4["beta"], cmid_p)
    m2 = n * oh * ow
    tile2, m2_pad = _choose_tile(m2)
    y4f = y4.reshape(m2, cmid_p)
    if m2_pad != m2:
        y4f = jnp.pad(y4f, ((0, m2_pad - m2), (0, 0)))

    # download_conv: BN4+ReLU fused into the 1x1 matmul, then its own BN+ReLU
    p5 = params["download_conv"]
    y5, s5 = fused_bn_matmul_stats(y4f, s4, g4, b4,
                                   _prep_w1x1(p5["w"], cmid_p, cin_p),
                                   count=m2, tile_m=tile2)
    g5, b5 = _prep_gamma_beta(p5["gamma"], p5["beta"], cin_p)
    out2d = bn_apply(y5, s5, g5, b5, count=m2, tile_m=tile2, relu=True,
                     out_dtype=jnp.float32)
    out = out2d[:m2].reshape(n, oh, ow, cin_p)[..., :c_in]
    return jnp.transpose(out, (0, 3, 1, 2))


bottleneck_forward = jax.jit(_bottleneck_forward, static_argnames=("is_resnet",))


# --------------------------- pure-JAX reference ------------------------------ #

def _conv_bn_ref(x, p, *, stride, padding, act):
    y = jax.lax.conv_general_dilated(
        x, p["w"], window_strides=(stride, stride),
        padding=[(padding, padding), (padding, padding)],
        dimension_numbers=("NCHW", "OIHW", "NCHW"),
        precision=jax.lax.Precision.HIGHEST)
    y = y + p["b"][None, :, None, None]          # bias kept: cancels under BN
    mu = jnp.mean(y, axis=(0, 2, 3), keepdims=True)
    var = jnp.mean((y - mu) ** 2, axis=(0, 2, 3), keepdims=True)
    y = (p["gamma"][None, :, None, None] * (y - mu) * jax.lax.rsqrt(var + EPS)
         + p["beta"][None, :, None, None])
    return jnp.maximum(y, 0.0) if act else y


def bottleneck_reference(x, params, is_resnet=True):
    x1 = _conv_bn_ref(x, params["conv1x1_1"], stride=1, padding=0, act=True)
    if is_resnet:
        x1 = _conv_bn_ref(x1, params["conv3x3_s1"], stride=1, padding=1, act=True)
        x1 = x + _conv_bn_ref(x1, params["conv1x1_2"], stride=1, padding=0,
                              act=False)
        return jnp.maximum(x1, 0.0)
    x1 = _conv_bn_ref(x1, params["download"], stride=2, padding=1, act=True)
    return _conv_bn_ref(x1, params["download_conv"], stride=1, padding=0, act=True)


if __name__ == "__main__":
    key = jax.random.PRNGKey(0)
    kx, kp = jax.random.split(key)

    n, in_c, h, w = 2, 16, 8, 8  # in_c divisible by 4 (out_c = in_c / 4)
    x = jax.random.normal(kx, (n, in_c, h, w), jnp.float32)
    params = init_params(kp, in_c)

    y_res = jax.block_until_ready(bottleneck_forward(x, params, is_resnet=True))
    y_down = jax.block_until_ready(bottleneck_forward(x, params, is_resnet=False))

    assert y_res.shape == (n, in_c, h, w), y_res.shape
    assert y_down.shape == (n, in_c, h // 2, w // 2), y_down.shape
    assert bool(jnp.all(jnp.isfinite(y_res))) and bool(jnp.all(jnp.isfinite(y_down)))
    assert bool(jnp.all(y_res >= 0.0)) and bool(jnp.all(y_down >= 0.0))

    # numerical check vs. f32 reference (bf16 matmuls + bf16 activations -> loose tol)
    r_res = bottleneck_reference(x, params, is_resnet=True)
    r_down = bottleneck_reference(x, params, is_resnet=False)
    err_res = float(jnp.max(jnp.abs(y_res - r_res)))
    err_down = float(jnp.max(jnp.abs(y_down - r_down)))
    assert err_res < 0.1 and err_down < 0.1, (err_res, err_down)

    print("KERNEL_OK")
</pallas_src>

<mosaic_0001>
module attributes {stable_mosaic.version = 11 : i64} {
  func.func @_bn_apply_kernel(%arg0: i32, %arg1: memref<128x128xbf16, #tpu.memory_space<vmem>>, %arg2: memref<2x128xf32, #tpu.memory_space<vmem>>, %arg3: memref<1x128xf32, #tpu.memory_space<vmem>>, %arg4: memref<1x128xf32, #tpu.memory_space<vmem>>, %arg5: memref<128x128xbf16, #tpu.memory_space<vmem>>) attributes {dimension_semantics = [#tpu.dimension_semantics<parallel>], iteration_bounds = array<i64: 1>, scalar_prefetch = 0 : i64, scratch_operands = 0 : i64, tpu.core_type = #tpu.core_type<tc>, window_params = [{transform_indices = @transform_0, window_bounds = array<i64: 128, 128>}, {pipeline_mode = #tpu.pipeline_mode<synchronous>, transform_indices = @transform_1, window_bounds = array<i64: 2, 128>}, {pipeline_mode = #tpu.pipeline_mode<synchronous>, transform_indices = @transform_2, window_bounds = array<i64: 1, 128>}, {pipeline_mode = #tpu.pipeline_mode<synchronous>, transform_indices = @transform_3, window_bounds = array<i64: 1, 128>}, {transform_indices = @transform_4, window_bounds = array<i64: 128, 128>}]} {
    %c0 = arith.constant 0 : index
    %c0_0 = arith.constant 0 : index
    %0 = vector.load %arg2[%c0, %c0_0] : memref<2x128xf32, #tpu.memory_space<vmem>>, vector<2x128xf32>
    %c0_1 = arith.constant 0 : index
    %c0_2 = arith.constant 0 : index
    %1 = vector.load %arg3[%c0_1, %c0_2] : memref<1x128xf32, #tpu.memory_space<vmem>>, vector<1x128xf32>
    %c0_3 = arith.constant 0 : index
    %c0_4 = arith.constant 0 : index
    %2 = vector.load %arg4[%c0_3, %c0_4] : memref<1x128xf32, #tpu.memory_space<vmem>>, vector<1x128xf32>
    %3 = vector.extract_strided_slice %0 {offsets = [0, 0], sizes = [1, 128], strides = [1, 1]} : vector<2x128xf32> to vector<1x128xf32>
    %cst = arith.constant 7.812500e-03 : f32
    %4 = vector.broadcast %cst : f32 to vector<1x128xf32>
    %5 = arith.mulf %3, %4 : vector<1x128xf32>
    %6 = vector.extract_strided_slice %0 {offsets = [1, 0], sizes = [1, 128], strides = [1, 1]} : vector<2x128xf32> to vector<1x128xf32>
    %cst_5 = arith.constant 7.812500e-03 : f32
    %7 = vector.broadcast %cst_5 : f32 to vector<1x128xf32>
    %8 = arith.mulf %6, %7 : vector<1x128xf32>
    %9 = arith.mulf %5, %5 : vector<1x128xf32>
    %10 = arith.subf %8, %9 : vector<1x128xf32>
    %cst_6 = arith.constant 0.000000e+00 : f32
    %11 = vector.broadcast %cst_6 : f32 to vector<1x128xf32>
    %12 = arith.maximumf %10, %11 : vector<1x128xf32>
    %cst_7 = arith.constant 9.99999974E-6 : f32
    %13 = vector.broadcast %cst_7 : f32 to vector<1x128xf32>
    %14 = arith.addf %12, %13 : vector<1x128xf32>
    %15 = math.rsqrt %14 : vector<1x128xf32>
    %16 = arith.mulf %1, %15 : vector<1x128xf32>
    %17 = arith.mulf %16, %5 : vector<1x128xf32>
    %18 = arith.subf %2, %17 : vector<1x128xf32>
    %c0_8 = arith.constant 0 : index
    %c0_9 = arith.constant 0 : index
    %19 = vector.load %arg1[%c0_8, %c0_9] : memref<128x128xbf16, #tpu.memory_space<vmem>>, vector<128x128xbf16>
    %20 = arith.extf %19 : vector<128x128xbf16> to vector<128x128xf32>
    %21 = vector.broadcast %16 : vector<1x128xf32> to vector<128x128xf32>
    %22 = arith.mulf %20, %21 : vector<128x128xf32>
    %23 = vector.broadcast %18 : vector<1x128xf32> to vector<128x128xf32>
    %24 = arith.addf %22, %23 : vector<128x128xf32>
    %cst_10 = arith.constant 0.000000e+00 : f32
    %25 = vector.broadcast %cst_10 : f32 to vector<128x128xf32>
    %26 = arith.maximumf %24, %25 : vector<128x128xf32>
    %27 = arith.truncf %26 : vector<128x128xf32> to vector<128x128xbf16>
    %c0_11 = arith.constant 0 : index
    %c0_12 = arith.constant 0 : index
    %28 = vector.load %arg5[%c0_11, %c0_12] : memref<128x128xbf16, #tpu.memory_space<vmem>>, vector<128x128xbf16>
    tpu.vector_store %arg5[%c0_11, %c0_12], %27 {strides = array<i32>} : memref<128x128xbf16, #tpu.memory_space<vmem>>, vector<128x128xbf16>,
    return
  }
  func.func @transform_0(%arg0: i32) -> (i32, i32) {
    %c0_i32 = arith.constant 0 : i32
    %c0_i32_0 = arith.constant 0 : i32
    return %arg0, %c0_i32 : i32, i32
  }
  func.func @transform_1(%arg0: i32) -> (i32, i32) {
    %c0_i32 = arith.constant 0 : i32
    %c0_i32_0 = arith.constant 0 : i32
    %c0_i32_1 = arith.constant 0 : i32
    return %c0_i32, %c0_i32_0 : i32, i32
  }
  func.func @transform_2(%arg0: i32) -> (i32, i32) {
    %c0_i32 = arith.constant 0 : i32
    %c0_i32_0 = arith.constant 0 : i32
    %c0_i32_1 = arith.constant 0 : i32
    return %c0_i32, %c0_i32_0 : i32, i32
  }
  func.func @transform_3(%arg0: i32) -> (i32, i32) {
    %c0_i32 = arith.constant 0 : i32
    %c0_i32_0 = arith.constant 0 : i32
    %c0_i32_1 = arith.constant 0 : i32
    return %c0_i32, %c0_i32_0 : i32, i32
  }
  func.func @transform_4(%arg0: i32) -> (i32, i32) {
    %c0_i32 = arith.constant 0 : i32
    %c0_i32_0 = arith.constant 0 : i32
    return %arg0, %c0_i32 : i32, i32
  }
}

module attributes {stable_mosaic.version = 11 : i64} {
  func.func @_matmul_stats_kernel(%arg0: i32, %arg1: memref<128x128xbf16, #tpu.memory_space<vmem>>, %arg2: memref<128x128xbf16, #tpu.memory_space<vmem>>, %arg3: memref<128x128xbf16, #tpu.memory_space<vmem>>, %arg4: memref<1x2x128xf32, #tpu.memory_space<vmem>>) attributes {dimension_semantics = [#tpu.dimension_semantics<parallel>], iteration_bounds = array<i64: 1>, scalar_prefetch = 0 : i64, scratch_operands = 0 : i64, tpu.core_type = #tpu.core_type<tc>, window_params = [{transform_indices = @transform_0, window_bounds = array<i64: 128, 128>}, {pipeline_mode = #tpu.pipeline_mode<synchronous>, transform_indices = @transform_1, window_bounds = array<i64: 128, 128>}, {transform_indices = @transform_2, window_bounds = array<i64: 128, 128>}, {transform_indices = @transform_3, window_bounds = array<i64: 1, 2, 128>}]} {
    %c0 = arith.constant 0 : index
    %c0_0 = arith.constant 0 : index
    %0 = vector.load %arg1[%c0, %c0_0] : memref<128x128xbf16, #tpu.memory_space<vmem>>, vector<128x128xbf16>
    %c0_1 = arith.constant 0 : index
    %c0_2 = arith.constant 0 : index
    %1 = vector.load %arg2[%c0_1, %c0_2] : memref<128x128xbf16, #tpu.memory_space<vmem>>, vector<128x128xbf16>
    %cst = arith.constant dense<0.000000e+00> : vector<128x128xf32>
    %2 = tpu.matmul %0, %1, %cst {dimension_numbers = #tpu.dot_dimension_numbers<[1], [0], [0], [1], [0, 0, 1, 1], [], []>} : vector<128x128xbf16>, vector<128x128xbf16>, vector<128x128xf32> -> vector<128x128xf32>
    %3 = arith.truncf %2 : vector<128x128xf32> to vector<128x128xbf16>
    %c0_3 = arith.constant 0 : index
    %c0_4 = arith.constant 0 : index
    %4 = vector.load %arg3[%c0_3, %c0_4] : memref<128x128xbf16, #tpu.memory_space<vmem>>, vector<128x128xbf16>
    tpu.vector_store %arg3[%c0_3, %c0_4], %3 {strides = array<i32>} : memref<128x128xbf16, #tpu.memory_space<vmem>>, vector<128x128xbf16>,
    %cst_5 = arith.constant dense<0.000000e+00> : vector<128xf32>
    %5 = vector.multi_reduction <add>, %2, %cst_5 [0] : vector<128x128xf32> to vector<128xf32>
    %6 = vector.shape_cast %5 : vector<128xf32> to vector<1x128xf32>
    %c0_6 = arith.constant 0 : index
    %c0_7 = arith.constant 0 : index
    %c0_8 = arith.constant 0 : index
    %7 = vector.load %arg4[%c0_6, %c0_7, %c0_8] : memref<1x2x128xf32, #tpu.memory_space<vmem>>, vector<1x1x128xf32>
    %8 = vector.shape_cast %7 : vector<1x1x128xf32> to vector<1x128xf32>
    %9 = vector.shape_cast %6 : vector<1x128xf32> to vector<1x1x128xf32>
    tpu.vector_store %arg4[%c0_6, %c0_7, %c0_8], %9 {strides = array<i32>} : memref<1x2x128xf32, #tpu.memory_space<vmem>>, vector<1x1x128xf32>,
    %10 = arith.mulf %2, %2 : vector<128x128xf32>
    %cst_9 = arith.constant dense<0.000000e+00> : vector<128xf32>
    %11 = vector.multi_reduction <add>, %10, %cst_9 [0] : vector<128x128xf32> to vector<128xf32>
    %12 = vector.shape_cast %11 : vector<128xf32> to vector<1x128xf32>
    %c0_10 = arith.constant 0 : index
    %c1 = arith.constant 1 : index
    %c0_11 = arith.constant 0 : index
    %13 = vector.load %arg4[%c0_10, %c1, %c0_11] : memref<1x2x128xf32, #tpu.memory_space<vmem>>, vector<1x1x128xf32>
    %14 = vector.shape_cast %13 : vector<1x1x128xf32> to vector<1x128xf32>
    %15 = vector.shape_cast %12 : vector<1x128xf32> to vector<1x1x128xf32>
    tpu.vector_store %arg4[%c0_10, %c1, %c0_11], %15 {strides = array<i32>} : memref<1x2x128xf32, #tpu.memory_space<vmem>>, vector<1x1x128xf32>,
    return
  }
  func.func @transform_0(%arg0: i32) -> (i32, i32) {
    %c0_i32 = arith.constant 0 : i32
    %c0_i32_0 = arith.constant 0 : i32
    return %arg0, %c0_i32 : i32, i32
  }
  func.func @transform_1(%arg0: i32) -> (i32, i32) {
    %c0_i32 = arith.constant 0 : i32
    %c0_i32_0 = arith.constant 0 : i32
    %c0_i32_1 = arith.constant 0 : i32
    return %c0_i32, %c0_i32_0 : i32, i32
  }
  func.func @transform_2(%arg0: i32) -> (i32, i32) {
    %c0_i32 = arith.constant 0 : i32
    %c0_i32_0 = arith.constant 0 : i32
    return %arg0, %c0_i32 : i32, i32
  }
  func.func @transform_3(%arg0: i32) -> (i32, i32, i32) {
    %c0_i32 = arith.constant 0 : i32
    %c0_i32_0 = arith.constant 0 : i32
    %c0_i32_1 = arith.constant 0 : i32
    return %arg0, %c0_i32, %c0_i32_0 : i32, i32, i32
  }
}

module attributes {stable_mosaic.version = 11 : i64} {
  func.func @_conv3x3_stats_kernel(%arg0: i32, %arg1: memref<1x3x80x128xbf16, #tpu.memory_space<vmem>>, %arg2: memref<9x128x128xbf16, #tpu.memory_space<vmem>>, %arg3: memref<1x64x128xbf16, #tpu.memory_space<vmem>>, %arg4: memref<1x2x128xf32, #tpu.memory_space<vmem>>, %arg5: memref<64x128xf32, #tpu.memory_space<vmem>>) attributes {dimension_semantics = [#tpu.dimension_semantics<parallel>], iteration_bounds = array<i64: 2>, scalar_prefetch = 0 : i64, scratch_operands = 1 : i64, tpu.core_type = #tpu.core_type<tc>, window_params = [{transform_indices = @transform_0, window_bounds = array<i64: 1, 3, 80, 128>}, {pipeline_mode = #tpu.pipeline_mode<synchronous>, transform_indices = @transform_1, window_bounds = array<i64: 9, 128, 128>}, {transform_indices = @transform_2, window_bounds = array<i64: 1, 64, 128>}, {transform_indices = @transform_3, window_bounds = array<i64: 1, 2, 128>}]} {
    %cst = arith.constant 0.000000e+00 : f32
    %0 = vector.broadcast %cst : f32 to vector<64x128xf32>
    %c0 = arith.constant 0 : index
    %c0_0 = arith.constant 0 : index
    %1 = vector.load %arg5[%c0, %c0_0] : memref<64x128xf32, #tpu.memory_space<vmem>>, vector<64x128xf32>
    tpu.vector_store %arg5[%c0, %c0_0], %0 {strides = array<i32>} : memref<64x128xf32, #tpu.memory_space<vmem>>, vector<64x128xf32>,
    %c0_1 = arith.constant 0 : index
    %c0_2 = arith.constant 0 : index
    %c0_3 = arith.constant 0 : index
    %c0_4 = arith.constant 0 : index
    %2 = vector.load %arg1[%c0_1, %c0_2, %c0_3, %c0_4] : memref<1x3x80x128xbf16, #tpu.memory_space<vmem>>, vector<1x1x64x128xbf16>
    %3 = vector.shape_cast %2 : vector<1x1x64x128xbf16> to vector<64x128xbf16>
    %c0_5 = arith.constant 0 : index
    %c0_6 = arith.constant 0 : index
    %4 = vector.load %arg5[%c0_5, %c0_6] : memref<64x128xf32, #tpu.memory_space<vmem>>, vector<64x128xf32>
    %c0_7 = arith.constant 0 : index
    %c0_8 = arith.constant 0 : index
    %c0_9 = arith.constant 0 : index
    %5 = vector.load %arg2[%c0_7, %c0_8, %c0_9] : memref<9x128x128xbf16, #tpu.memory_space<vmem>>, vector<1x128x128xbf16>
    %6 = vector.shape_cast %5 : vector<1x128x128xbf16> to vector<128x128xbf16>
    %cst_10 = arith.constant dense<0.000000e+00> : vector<64x128xf32>
    %7 = tpu.matmul %3, %6, %cst_10 {dimension_numbers = #tpu.dot_dimension_numbers<[1], [0], [0], [1], [0, 0, 1, 1], [], []>} : vector<64x128xbf16>, vector<128x128xbf16>, vector<64x128xf32> -> vector<64x128xf32>
    %8 = arith.addf %4, %7 : vector<64x128xf32>
    %c0_11 = arith.constant 0 : index
    %c0_12 = arith.constant 0 : index
    %9 = vector.load %arg5[%c0_11, %c0_12] : memref<64x128xf32, #tpu.memory_space<vmem>>, vector<64x128xf32>
    tpu.vector_store %arg5[%c0_11, %c0_12], %8 {strides = array<i32>} : memref<64x128xf32, #tpu.memory_space<vmem>>, vector<64x128xf32>,
    %c0_13 = arith.constant 0 : index
    %c1 = arith.constant 1 : index
    %c0_14 = arith.constant 0 : index
    %c0_15 = arith.constant 0 : index
    %10 = vector.load %arg1[%c0_13, %c1, %c0_14, %c0_15] : memref<1x3x80x128xbf16, #tpu.memory_space<vmem>>, vector<1x1x64x128xbf16>
    %11 = vector.shape_cast %10 : vector<1x1x64x128xbf16> to vector<64x128xbf16>
    %c0_16 = arith.constant 0 : index
    %c0_17 = arith.constant 0 : index
    %12 = vector.load %arg5[%c0_16, %c0_17] : memref<64x128xf32, #tpu.memory_space<vmem>>, vector<64x128xf32>
    %c1_18 = arith.constant 1 : index
    %c0_19 = arith.constant 0 : index
    %c0_20 = arith.constant 0 : index
    %13 = vector.load %arg2[%c1_18, %c0_19, %c0_20] : memref<9x128x128xbf16, #tpu.memory_space<vmem>>, vector<1x128x128xbf16>
    %14 = vector.shape_cast %13 : vector<1x128x128xbf16> to vector<128x128xbf16>
    %cst_21 = arith.constant dense<0.000000e+00> : vector<64x128xf32>
    %15 = tpu.matmul %11, %14, %cst_21 {dimension_numbers = #tpu.dot_dimension_numbers<[1], [0], [0], [1], [0, 0, 1, 1], [], []>} : vector<64x128xbf16>, vector<128x128xbf16>, vector<64x128xf32> -> vector<64x128xf32>
    %16 = arith.addf %12, %15 : vector<64x128xf32>
    %c0_22 = arith.constant 0 : index
    %c0_23 = arith.constant 0 : index
    %17 = vector.load %arg5[%c0_22, %c0_23] : memref<64x128xf32, #tpu.memory_space<vmem>>, vector<64x128xf32>
    tpu.vector_store %arg5[%c0_22, %c0_23], %16 {strides = array<i32>} : memref<64x128xf32, #tpu.memory_space<vmem>>, vector<64x128xf32>,
    %c0_24 = arith.constant 0 : index
    %c2 = arith.constant 2 : index
    %c0_25 = arith.constant 0 : index
    %c0_26 = arith.constant 0 : index
    %18 = vector.load %arg1[%c0_24, %c2, %c0_25, %c0_26] : memref<1x3x80x128xbf16, #tpu.memory_space<vmem>>, vector<1x1x64x128xbf16>
    %19 = vector.shape_cast %18 : vector<1x1x64x128xbf16> to vector<64x128xbf16>
    %c0_27 = arith.constant 0 : index
    %c0_28 = arith.constant 0 : index
    %20 = vector.load %arg5[%c0_27, %c0_28] : memref<64x128xf32, #tpu.memory_space<vmem>>, vector<64x128xf32>
    %c2_29 = arith.constant 2 : index
    %c0_30 = arith.constant 0 : index
    %c0_31 = arith.constant 0 : index
    %21 = vector.load %arg2[%c2_29, %c0_30, %c0_31] : memref<9x128x128xbf16, #tpu.memory_space<vmem>>, vector<1x128x128xbf16>
    %22 = vector.shape_cast %21 : vector<1x128x128xbf16> to vector<128x128xbf16>
    %cst_32 = arith.constant dense<0.000000e+00> : vector<64x128xf32>
    %23 = tpu.matmul %19, %22, %cst_32 {dimension_numbers = #tpu.dot_dimension_numbers<[1], [0], [0], [1], [0, 0, 1, 1], [], []>} : vector<64x128xbf16>, vector<128x128xbf16>, vector<64x128xf32> -> vector<64x128xf32>
    %24 = arith.addf %20, %23 : vector<64x128xf32>
    %c0_33 = arith.constant 0 : index
    %c0_34 = arith.constant 0 : index
    %25 = vector.load %arg5[%c0_33, %c0_34] : memref<64x128xf32, #tpu.memory_space<vmem>>, vector<64x128xf32>
    tpu.vector_store %arg5[%c0_33, %c0_34], %24 {strides = array<i32>} : memref<64x128xf32, #tpu.memory_space<vmem>>, vector<64x128xf32>,
    %c0_35 = arith.constant 0 : index
    %c0_36 = arith.constant 0 : index
    %c8 = arith.constant 8 : index
    %c0_37 = arith.constant 0 : index
    %26 = vector.load %arg1[%c0_35, %c0_36, %c8, %c0_37] : memref<1x3x80x128xbf16, #tpu.memory_space<vmem>>, vector<1x1x64x128xbf16>
    %27 = vector.shape_cast %26 : vector<1x1x64x128xbf16> to vector<64x128xbf16>
    %c0_38 = arith.constant 0 : index
    %c0_39 = arith.constant 0 : index
    %28 = vector.load %arg5[%c0_38, %c0_39] : memref<64x128xf32, #tpu.memory_space<vmem>>, vector<64x128xf32>
    %c3 = arith.constant 3 : index
    %c0_40 = arith.constant 0 : index
    %c0_41 = arith.constant 0 : index
    %29 = vector.load %arg2[%c3, %c0_40, %c0_41] : memref<9x128x128xbf16, #tpu.memory_space<vmem>>, vector<1x128x128xbf16>
    %30 = vector.shape_cast %29 : vector<1x128x128xbf16> to vector<128x128xbf16>
    %cst_42 = arith.constant dense<0.000000e+00> : vector<64x128xf32>
    %31 = tpu.matmul %27, %30, %cst_42 {dimension_numbers = #tpu.dot_dimension_numbers<[1], [0], [0], [1], [0, 0, 1, 1], [], []>} : vector<64x128xbf16>, vector<128x128xbf16>, vector<64x128xf32> -> vector<64x128xf32>
    %32 = arith.addf %28, %31 : vector<64x128xf32>
    %c0_43 = arith.constant 0 : index
    %c0_44 = arith.constant 0 : index
    %33 = vector.load %arg5[%c0_43, %c0_44] : memref<64x128xf32, #tpu.memory_space<vmem>>, vector<64x128xf32>
    tpu.vector_store %arg5[%c0_43, %c0_44], %32 {strides = array<i32>} : memref<64x128xf32, #tpu.memory_space<vmem>>, vector<64x128xf32>,
    %c0_45 = arith.constant 0 : index
    %c1_46 = arith.constant 1 : index
    %c8_47 = arith.constant 8 : index
    %c0_48 = arith.constant 0 : index
    %34 = vector.load %arg1[%c0_45, %c1_46, %c8_47, %c0_48] : memref<1x3x80x128xbf16, #tpu.memory_space<vmem>>, vector<1x1x64x128xbf16>
    %35 = vector.shape_cast %34 : vector<1x1x64x128xbf16> to vector<64x128xbf16>
    %c0_49 = arith.constant 0 : index
    %c0_50 = arith.constant 0 : index
    %36 = vector.load %arg5[%c0_49, %c0_50] : memref<64x128xf32, #tpu.memory_space<vmem>>, vector<64x128xf32>
    %c4 = arith.constant 4 : index
    %c0_51 = arith.constant 0 : index
    %c0_52 = arith.constant 0 : index
    %37 = vector.load %arg2[%c4, %c0_51, %c0_52] : memref<9x128x128xbf16, #tpu.memory_space<vmem>>, vector<1x128x128xbf16>
    %38 = vector.shape_cast %37 : vector<1x128x128xbf16> to vector<128x128xbf16>
    %cst_53 = arith.constant dense<0.000000e+00> : vector<64x128xf32>
    %39 = tpu.matmul %35, %38, %cst_53 {dimension_numbers = #tpu.dot_dimension_numbers<[1], [0], [0], [1], [0, 0, 1, 1], [], []>} : vector<64x128xbf16>, vector<128x128xbf16>, vector<64x128xf32> -> vector<64x128xf32>
    %40 = arith.addf %36, %39 : vector<64x128xf32>
    %c0_54 = arith.constant 0 : index
    %c0_55 = arith.constant 0 : index
    %41 = vector.load %arg5[%c0_54, %c0_55] : memref<64x128xf32, #tpu.memory_space<vmem>>, vector<64x128xf32>
    tpu.vector_store %arg5[%c0_54, %c0_55], %40 {strides = array<i32>} : memref<64x128xf32, #tpu.memory_space<vmem>>, vector<64x128xf32>,
    %c0_56 = arith.constant 0 : index
    %c2_57 = arith.constant 2 : index
    %c8_58 = arith.constant 8 : index
    %c0_59 = arith.constant 0 : index
    %42 = vector.load %arg1[%c0_56, %c2_57, %c8_58, %c0_59] : memref<1x3x80x128xbf16, #tpu.memory_space<vmem>>, vector<1x1x64x128xbf16>
    %43 = vector.shape_cast %42 : vector<1x1x64x128xbf16> to vector<64x128xbf16>
    %c0_60 = arith.constant 0 : index
    %c0_61 = arith.constant 0 : index
    %44 = vector.load %arg5[%c0_60, %c0_61] : memref<64x128xf32, #tpu.memory_space<vmem>>, vector<64x128xf32>
    %c5 = arith.constant 5 : index
    %c0_62 = arith.constant 0 : index
    %c0_63 = arith.constant 0 : index
    %45 = vector.load %arg2[%c5, %c0_62, %c0_63] : memref<9x128x128xbf16, #tpu.memory_space<vmem>>, vector<1x128x128xbf16>
    %46 = vector.shape_cast %45 : vector<1x128x128xbf16> to vector<128x128xbf16>
    %cst_64 = arith.constant dense<0.000000e+00> : vector<64x128xf32>
    %47 = tpu.matmul %43, %46, %cst_64 {dimension_numbers = #tpu.dot_dimension_numbers<[1], [0], [0], [1], [0, 0, 1, 1], [], []>} : vector<64x128xbf16>, vector<128x128xbf16>, vector<64x128xf32> -> vector<64x128xf32>
    %48 = arith.addf %44, %47 : vector<64x128xf32>
    %c0_65 = arith.constant 0 : index
    %c0_66 = arith.constant 0 : index
    %49 = vector.load %arg5[%c0_65, %c0_66] : memref<64x128xf32, #tpu.memory_space<vmem>>, vector<64x128xf32>
    tpu.vector_store %arg5[%c0_65, %c0_66], %48 {strides = array<i32>} : memref<64x128xf32, #tpu.memory_space<vmem>>, vector<64x128xf32>,
    %c0_67 = arith.constant 0 : index
    %c0_68 = arith.constant 0 : index
    %c16 = arith.constant 16 : index
    %c0_69 = arith.constant 0 : index
    %50 = vector.load %arg1[%c0_67, %c0_68, %c16, %c0_69] : memref<1x3x80x128xbf16, #tpu.memory_space<vmem>>, vector<1x1x64x128xbf16>
    %51 = vector.shape_cast %50 : vector<1x1x64x128xbf16> to vector<64x128xbf16>
    %c0_70 = arith.constant 0 : index
    %c0_71 = arith.constant 0 : index
    %52 = vector.load %arg5[%c0_70, %c0_71] : memref<64x128xf32, #tpu.memory_space<vmem>>, vector<64x128xf32>
    %c6 = arith.constant 6 : index
    %c0_72 = arith.constant 0 : index
    %c0_73 = arith.constant 0 : index
    %53 = vector.load %arg2[%c6, %c0_72, %c0_73] : memref<9x128x128xbf16, #tpu.memory_space<vmem>>, vector<1x128x128xbf16>
    %54 = vector.shape_cast %53 : vector<1x128x128xbf16> to vector<128x128xbf16>
    %cst_74 = arith.constant dense<0.000000e+00> : vector<64x128xf32>
    %55 = tpu.matmul %51, %54, %cst_74 {dimension_numbers = #tpu.dot_dimension_numbers<[1], [0], [0], [1], [0, 0, 1, 1], [], []>} : vector<64x128xbf16>, vector<128x128xbf16>, vector<64x128xf32> -> vector<64x128xf32>
    %56 = arith.addf %52, %55 : vector<64x128xf32>
    %c0_75 = arith.constant 0 : index
    %c0_76 = arith.constant 0 : index
    %57 = vector.load %arg5[%c0_75, %c0_76] : memref<64x128xf32, #tpu.memory_space<vmem>>, vector<64x128xf32>
    tpu.vector_store %arg5[%c0_75, %c0_76], %56 {strides = array<i32>} : memref<64x128xf32, #tpu.memory_space<vmem>>, vector<64x128xf32>,
    %c0_77 = arith.constant 0 : index
    %c1_78 = arith.constant 1 : index
    %c16_79 = arith.constant 16 : index
    %c0_80 = arith.constant 0 : index
    %58 = vector.load %arg1[%c0_77, %c1_78, %c16_79, %c0_80] : memref<1x3x80x128xbf16, #tpu.memory_space<vmem>>, vector<1x1x64x128xbf16>
    %59 = vector.shape_cast %58 : vector<1x1x64x128xbf16> to vector<64x128xbf16>
    %c0_81 = arith.constant 0 : index
    %c0_82 = arith.constant 0 : index
    %60 = vector.load %arg5[%c0_81, %c0_82] : memref<64x128xf32, #tpu.memory_space<vmem>>, vector<64x128xf32>
    %c7 = arith.constant 7 : index
    %c0_83 = arith.constant 0 : index
    %c0_84 = arith.constant 0 : index
    %61 = vector.load %arg2[%c7, %c0_83, %c0_84] : memref<9x128x128xbf16, #tpu.memory_space<vmem>>, vector<1x128x128xbf16>
    %62 = vector.shape_cast %61 : vector<1x128x128xbf16> to vector<128x128xbf16>
    %cst_85 = arith.constant dense<0.000000e+00> : vector<64x128xf32>
    %63 = tpu.matmul %59, %62, %cst_85 {dimension_numbers = #tpu.dot_dimension_numbers<[1], [0], [0], [1], [0, 0, 1, 1], [], []>} : vector<64x128xbf16>, vector<128x128xbf16>, vector<64x128xf32> -> vector<64x128xf32>
    %64 = arith.addf %60, %63 : vector<64x128xf32>
    %c0_86 = arith.constant 0 : index
    %c0_87 = arith.constant 0 : index
    %65 = vector.load %arg5[%c0_86, %c0_87] : memref<64x128xf32, #tpu.memory_space<vmem>>, vector<64x128xf32>
    tpu.vector_store %arg5[%c0_86, %c0_87], %64 {strides = array<i32>} : memref<64x128xf32, #tpu.memory_space<vmem>>, vector<64x128xf32>,
    %c0_88 = arith.constant 0 : index
    %c2_89 = arith.constant 2 : index
    %c16_90 = arith.constant 16 : index
    %c0_91 = arith.constant 0 : index
    %66 = vector.load %arg1[%c0_88, %c2_89, %c16_90, %c0_91] : memref<1x3x80x128xbf16, #tpu.memory_space<vmem>>, vector<1x1x64x128xbf16>
    %67 = vector.shape_cast %66 : vector<1x1x64x128xbf16> to vector<64x128xbf16>
    %c0_92 = arith.constant 0 : index
    %c0_93 = arith.constant 0 : index
    %68 = vector.load %arg5[%c0_92, %c0_93] : memref<64x128xf32, #tpu.memory_space<vmem>>, vector<64x128xf32>
    %c8_94 = arith.constant 8 : index
    %c0_95 = arith.constant 0 : index
    %c0_96 = arith.constant 0 : index
    %69 = vector.load %arg2[%c8_94, %c0_95, %c0_96] : memref<9x128x128xbf16, #tpu.memory_space<vmem>>, vector<1x128x128xbf16>
    %70 = vector.shape_cast %69 : vector<1x128x128xbf16> to vector<128x128xbf16>
    %cst_97 = arith.constant dense<0.000000e+00> : vector<64x128xf32>
    %71 = tpu.matmul %67, %70, %cst_97 {dimension_numbers = #tpu.dot_dimension_numbers<[1], [0], [0], [1], [0, 0, 1, 1], [], []>} : vector<64x128xbf16>, vector<128x128xbf16>, vector<64x128xf32> -> vector<64x128xf32>
    %72 = arith.addf %68, %71 : vector<64x128xf32>
    %c0_98 = arith.constant 0 : index
    %c0_99 = arith.constant 0 : index
    %73 = vector.load %arg5[%c0_98, %c0_99] : memref<64x128xf32, #tpu.memory_space<vmem>>, vector<64x128xf32>
    tpu.vector_store %arg5[%c0_98, %c0_99], %72 {strides = array<i32>} : memref<64x128xf32, #tpu.memory_space<vmem>>, vector<64x128xf32>,
    %c0_100 = arith.constant 0 : index
    %c0_101 = arith.constant 0 : index
    %74 = vector.load %arg5[%c0_100, %c0_101] : memref<64x128xf32, #tpu.memory_space<vmem>>, vector<64x128xf32>
    %75 = arith.truncf %74 : vector<64x128xf32> to vector<64x128xbf16>
    %c0_102 = arith.constant 0 : index
    %c0_103 = arith.constant 0 : index
    %c0_104 = arith.constant 0 : index
    %76 = vector.load %arg3[%c0_102, %c0_103, %c0_104] : memref<1x64x128xbf16, #tpu.memory_space<vmem>>, vector<1x64x128xbf16>
    %77 = vector.shape_cast %76 : vector<1x64x128xbf16> to vector<64x128xbf16>
    %78 = vector.shape_cast %75 : vector<64x128xbf16> to vector<1x64x128xbf16>
    tpu.vector_store %arg3[%c0_102, %c0_103, %c0_104], %78 {strides = array<i32>} : memref<1x64x128xbf16, #tpu.memory_space<vmem>>, vector<1x64x128xbf16>,
    %cst_105 = arith.constant dense<0.000000e+00> : vector<128xf32>
    %79 = vector.multi_reduction <add>, %74, %cst_105 [0] : vector<64x128xf32> to vector<128xf32>
    %80 = vector.shape_cast %79 : vector<128xf32> to vector<1x128xf32>
    %c0_106 = arith.constant 0 : index
    %c0_107 = arith.constant 0 : index
    %c0_108 = arith.constant 0 : index
    %81 = vector.load %arg4[%c0_106, %c0_107, %c0_108] : memref<1x2x128xf32, #tpu.memory_space<vmem>>, vector<1x1x128xf32>
    %82 = vector.shape_cast %81 : vector<1x1x128xf32> to vector<1x128xf32>
    %83 = vector.shape_cast %80 : vector<1x128xf32> to vector<1x1x128xf32>
    tpu.vector_store %arg4[%c0_106, %c0_107, %c0_108], %83 {strides = array<i32>} : memref<1x2x128xf32, #tpu.memory_space<vmem>>, vector<1x1x128xf32>,
    %84 = arith.mulf %74, %74 : vector<64x128xf32>
    %cst_109 = arith.constant dense<0.000000e+00> : vector<128xf32>
    %85 = vector.multi_reduction <add>, %84, %cst_109 [0] : vector<64x128xf32> to vector<128xf32>
    %86 = vector.shape_cast %85 : vector<128xf32> to vector<1x128xf32>
    %c0_110 = arith.constant 0 : index
    %c1_111 = arith.constant 1 : index
    %c0_112 = arith.constant 0 : index
    %87 = vector.load %arg4[%c0_110, %c1_111, %c0_112] : memref<1x2x128xf32, #tpu.memory_space<vmem>>, vector<1x1x128xf32>
    %88 = vector.shape_cast %87 : vector<1x1x128xf32> to vector<1x128xf32>
    %89 = vector.shape_cast %86 : vector<1x128xf32> to vector<1x1x128xf32>
    tpu.vector_store %arg4[%c0_110, %c1_111, %c0_112], %89 {strides = array<i32>} : memref<1x2x128xf32, #tpu.memory_space<vmem>>, vector<1x1x128xf32>,
    return
  }
  func.func @transform_0(%arg0: i32) -> (i32, i32, i32, i32) {
    %c0_i32 = arith.constant 0 : i32
    %c0_i32_0 = arith.constant 0 : i32
    %c0_i32_1 = arith.constant 0 : i32
    %c0_i32_2 = arith.constant 0 : i32
    return %arg0, %c0_i32, %c0_i32_0, %c0_i32_1 : i32, i32, i32, i32
  }
  func.func @transform_1(%arg0: i32) -> (i32, i32, i32) {
    %c0_i32 = arith.constant 0 : i32
    %c0_i32_0 = arith.constant 0 : i32
    %c0_i32_1 = arith.constant 0 : i32
    %c0_i32_2 = arith.constant 0 : i32
    return %c0_i32, %c0_i32_0, %c0_i32_1 : i32, i32, i32
  }
  func.func @transform_2(%arg0: i32) -> (i32, i32, i32) {
    %c0_i32 = arith.constant 0 : i32
    %c0_i32_0 = arith.constant 0 : i32
    %c0_i32_1 = arith.constant 0 : i32
    return %arg0, %c0_i32, %c0_i32_0 : i32, i32, i32
  }
  func.func @transform_3(%arg0: i32) -> (i32, i32, i32) {
    %c0_i32 = arith.constant 0 : i32
    %c0_i32_0 = arith.constant 0 : i32
    %c0_i32_1 = arith.constant 0 : i32
    return %arg0, %c0_i32, %c0_i32_0 : i32, i32, i32
  }
}

module attributes {stable_mosaic.version = 11 : i64} {
  func.func @_bn_apply_kernel(%arg0: i32, %arg1: memref<128x128xbf16, #tpu.memory_space<vmem>>, %arg2: memref<2x128xf32, #tpu.memory_space<vmem>>, %arg3: memref<1x128xf32, #tpu.memory_space<vmem>>, %arg4: memref<1x128xf32, #tpu.memory_space<vmem>>, %arg5: memref<128x128xf32, #tpu.memory_space<vmem>>, %arg6: memref<128x128xf32, #tpu.memory_space<vmem>>) attributes {dimension_semantics = [#tpu.dimension_semantics<parallel>], iteration_bounds = array<i64: 1>, scalar_prefetch = 0 : i64, scratch_operands = 0 : i64, tpu.core_type = #tpu.core_type<tc>, window_params = [{transform_indices = @transform_0, window_bounds = array<i64: 128, 128>}, {pipeline_mode = #tpu.pipeline_mode<synchronous>, transform_indices = @transform_1, window_bounds = array<i64: 2, 128>}, {pipeline_mode = #tpu.pipeline_mode<synchronous>, transform_indices = @transform_2, window_bounds = array<i64: 1, 128>}, {pipeline_mode = #tpu.pipeline_mode<synchronous>, transform_indices = @transform_3, window_bounds = array<i64: 1, 128>}, {transform_indices = @transform_4, window_bounds = array<i64: 128, 128>}, {transform_indices = @transform_5, window_bounds = array<i64: 128, 128>}]} {
    %c0 = arith.constant 0 : index
    %c0_0 = arith.constant 0 : index
    %0 = vector.load %arg2[%c0, %c0_0] : memref<2x128xf32, #tpu.memory_space<vmem>>, vector<2x128xf32>
    %c0_1 = arith.constant 0 : index
    %c0_2 = arith.constant 0 : index
    %1 = vector.load %arg3[%c0_1, %c0_2] : memref<1x128xf32, #tpu.memory_space<vmem>>, vector<1x128xf32>
    %c0_3 = arith.constant 0 : index
    %c0_4 = arith.constant 0 : index
    %2 = vector.load %arg4[%c0_3, %c0_4] : memref<1x128xf32, #tpu.memory_space<vmem>>, vector<1x128xf32>
    %3 = vector.extract_strided_slice %0 {offsets = [0, 0], sizes = [1, 128], strides = [1, 1]} : vector<2x128xf32> to vector<1x128xf32>
    %cst = arith.constant 7.812500e-03 : f32
    %4 = vector.broadcast %cst : f32 to vector<1x128xf32>
    %5 = arith.mulf %3, %4 : vector<1x128xf32>
    %6 = vector.extract_strided_slice %0 {offsets = [1, 0], sizes = [1, 128], strides = [1, 1]} : vector<2x128xf32> to vector<1x128xf32>
    %cst_5 = arith.constant 7.812500e-03 : f32
    %7 = vector.broadcast %cst_5 : f32 to vector<1x128xf32>
    %8 = arith.mulf %6, %7 : vector<1x128xf32>
    %9 = arith.mulf %5, %5 : vector<1x128xf32>
    %10 = arith.subf %8, %9 : vector<1x128xf32>
    %cst_6 = arith.constant 0.000000e+00 : f32
    %11 = vector.broadcast %cst_6 : f32 to vector<1x128xf32>
    %12 = arith.maximumf %10, %11 : vector<1x128xf32>
    %cst_7 = arith.constant 9.99999974E-6 : f32
    %13 = vector.broadcast %cst_7 : f32 to vector<1x128xf32>
    %14 = arith.addf %12, %13 : vector<1x128xf32>
    %15 = math.rsqrt %14 : vector<1x128xf32>
    %16 = arith.mulf %1, %15 : vector<1x128xf32>
    %17 = arith.mulf %16, %5 : vector<1x128xf32>
    %18 = arith.subf %2, %17 : vector<1x128xf32>
    %c0_8 = arith.constant 0 : index
    %c0_9 = arith.constant 0 : index
    %19 = vector.load %arg1[%c0_8, %c0_9] : memref<128x128xbf16, #tpu.memory_space<vmem>>, vector<128x128xbf16>
    %20 = arith.extf %19 : vector<128x128xbf16> to vector<128x128xf32>
    %21 = vector.broadcast %16 : vector<1x128xf32> to vector<128x128xf32>
    %22 = arith.mulf %20, %21 : vector<128x128xf32>
    %23 = vector.broadcast %18 : vector<1x128xf32> to vector<128x128xf32>
    %24 = arith.addf %22, %23 : vector<128x128xf32>
    %c0_10 = arith.constant 0 : index
    %c0_11 = arith.constant 0 : index
    %25 = vector.load %arg5[%c0_10, %c0_11] : memref<128x128xf32, #tpu.memory_space<vmem>>, vector<128x128xf32>
    %26 = arith.addf %24, %25 : vector<128x128xf32>
    %cst_12 = arith.constant 0.000000e+00 : f32
    %27 = vector.broadcast %cst_12 : f32 to vector<128x128xf32>
    %28 = arith.maximumf %26, %27 : vector<128x128xf32>
    %c0_13 = arith.constant 0 : index
    %c0_14 = arith.constant 0 : index
    %29 = vector.load %arg6[%c0_13, %c0_14] : memref<128x128xf32, #tpu.memory_space<vmem>>, vector<128x128xf32>
    tpu.vector_store %arg6[%c0_13, %c0_14], %28 {strides = array<i32>} : memref<128x128xf32, #tpu.memory_space<vmem>>, vector<128x128xf32>,
    return
  }
  func.func @transform_0(%arg0: i32) -> (i32, i32) {
    %c0_i32 = arith.constant 0 : i32
    %c0_i32_0 = arith.constant 0 : i32
    return %arg0, %c0_i32 : i32, i32
  }
  func.func @transform_1(%arg0: i32) -> (i32, i32) {
    %c0_i32 = arith.constant 0 : i32
    %c0_i32_0 = arith.constant 0 : i32
    %c0_i32_1 = arith.constant 0 : i32
    return %c0_i32, %c0_i32_0 : i32, i32
  }
  func.func @transform_2(%arg0: i32) -> (i32, i32) {
    %c0_i32 = arith.constant 0 : i32
    %c0_i32_0 = arith.constant 0 : i32
    %c0_i32_1 = arith.constant 0 : i32
    return %c0_i32, %c0_i32_0 : i32, i32
  }
  func.func @transform_3(%arg0: i32) -> (i32, i32) {
    %c0_i32 = arith.constant 0 : i32
    %c0_i32_0 = arith.constant 0 : i32
    %c0_i32_1 = arith.constant 0 : i32
    return %c0_i32, %c0_i32_0 : i32, i32
  }
  func.func @transform_4(%arg0: i32) -> (i32, i32) {
    %c0_i32 = arith.constant 0 : i32
    %c0_i32_0 = arith.constant 0 : i32
    return %arg0, %c0_i32 : i32, i32
  }
  func.func @transform_5(%arg0: i32) -> (i32, i32) {
    %c0_i32 = arith.constant 0 : i32
    %c0_i32_0 = arith.constant 0 : i32
    return %arg0, %c0_i32 : i32, i32
  }
}

module attributes {stable_mosaic.version = 11 : i64} {
  func.func @_fused_bn_matmul_stats_kernel(%arg0: i32, %arg1: memref<128x128xbf16, #tpu.memory_space<vmem>>, %arg2: memref<2x128xf32, #tpu.memory_space<vmem>>, %arg3: memref<1x128xf32, #tpu.memory_space<vmem>>, %arg4: memref<1x128xf32, #tpu.memory_space<vmem>>, %arg5: memref<128x128xbf16, #tpu.memory_space<vmem>>, %arg6: memref<128x128xbf16, #tpu.memory_space<vmem>>, %arg7: memref<1x2x128xf32, #tpu.memory_space<vmem>>) attributes {dimension_semantics = [#tpu.dimension_semantics<parallel>], iteration_bounds = array<i64: 1>, scalar_prefetch = 0 : i64, scratch_operands = 0 : i64, tpu.core_type = #tpu.core_type<tc>, window_params = [{transform_indices = @transform_0, window_bounds = array<i64: 128, 128>}, {pipeline_mode = #tpu.pipeline_mode<synchronous>, transform_indices = @transform_1, window_bounds = array<i64: 2, 128>}, {pipeline_mode = #tpu.pipeline_mode<synchronous>, transform_indices = @transform_2, window_bounds = array<i64: 1, 128>}, {pipeline_mode = #tpu.pipeline_mode<synchronous>, transform_indices = @transform_3, window_bounds = array<i64: 1, 128>}, {pipeline_mode = #tpu.pipeline_mode<synchronous>, transform_indices = @transform_4, window_bounds = array<i64: 128, 128>}, {transform_indices = @transform_5, window_bounds = array<i64: 128, 128>}, {transform_indices = @transform_6, window_bounds = array<i64: 1, 2, 128>}]} {
    %c0 = arith.constant 0 : index
    %c0_0 = arith.constant 0 : index
    %0 = vector.load %arg2[%c0, %c0_0] : memref<2x128xf32, #tpu.memory_space<vmem>>, vector<2x128xf32>
    %c0_1 = arith.constant 0 : index
    %c0_2 = arith.constant 0 : index
    %1 = vector.load %arg3[%c0_1, %c0_2] : memref<1x128xf32, #tpu.memory_space<vmem>>, vector<1x128xf32>
    %c0_3 = arith.constant 0 : index
    %c0_4 = arith.constant 0 : index
    %2 = vector.load %arg4[%c0_3, %c0_4] : memref<1x128xf32, #tpu.memory_space<vmem>>, vector<1x128xf32>
    %3 = vector.extract_strided_slice %0 {offsets = [0, 0], sizes = [1, 128], strides = [1, 1]} : vector<2x128xf32> to vector<1x128xf32>
    %cst = arith.constant 7.812500e-03 : f32
    %4 = vector.broadcast %cst : f32 to vector<1x128xf32>
    %5 = arith.mulf %3, %4 : vector<1x128xf32>
    %6 = vector.extract_strided_slice %0 {offsets = [1, 0], sizes = [1, 128], strides = [1, 1]} : vector<2x128xf32> to vector<1x128xf32>
    %cst_5 = arith.constant 7.812500e-03 : f32
    %7 = vector.broadcast %cst_5 : f32 to vector<1x128xf32>
    %8 = arith.mulf %6, %7 : vector<1x128xf32>
    %9 = arith.mulf %5, %5 : vector<1x128xf32>
    %10 = arith.subf %8, %9 : vector<1x128xf32>
    %cst_6 = arith.constant 0.000000e+00 : f32
    %11 = vector.broadcast %cst_6 : f32 to vector<1x128xf32>
    %12 = arith.maximumf %10, %11 : vector<1x128xf32>
    %cst_7 = arith.constant 9.99999974E-6 : f32
    %13 = vector.broadcast %cst_7 : f32 to vector<1x128xf32>
    %14 = arith.addf %12, %13 : vector<1x128xf32>
    %15 = math.rsqrt %14 : vector<1x128xf32>
    %16 = arith.mulf %1, %15 : vector<1x128xf32>
    %17 = arith.mulf %16, %5 : vector<1x128xf32>
    %18 = arith.subf %2, %17 : vector<1x128xf32>
    %c0_8 = arith.constant 0 : index
    %c0_9 = arith.constant 0 : index
    %19 = vector.load %arg1[%c0_8, %c0_9] : memref<128x128xbf16, #tpu.memory_space<vmem>>, vector<128x128xbf16>
    %20 = arith.extf %19 : vector<128x128xbf16> to vector<128x128xf32>
    %21 = vector.broadcast %16 : vector<1x128xf32> to vector<128x128xf32>
    %22 = arith.mulf %20, %21 : vector<128x128xf32>
    %23 = vector.broadcast %18 : vector<1x128xf32> to vector<128x128xf32>
    %24 = arith.addf %22, %23 : vector<128x128xf32>
    %cst_10 = arith.constant 0.000000e+00 : f32
    %25 = vector.broadcast %cst_10 : f32 to vector<128x128xf32>
    %26 = arith.maximumf %24, %25 : vector<128x128xf32>
    %27 = arith.truncf %26 : vector<128x128xf32> to vector<128x128xbf16>
    %c0_11 = arith.constant 0 : index
    %c0_12 = arith.constant 0 : index
    %28 = vector.load %arg5[%c0_11, %c0_12] : memref<128x128xbf16, #tpu.memory_space<vmem>>, vector<128x128xbf16>
    %cst_13 = arith.constant dense<0.000000e+00> : vector<128x128xf32>
    %29 = tpu.matmul %27, %28, %cst_13 {dimension_numbers = #tpu.dot_dimension_numbers<[1], [0], [0], [1], [0, 0, 1, 1], [], []>} : vector<128x128xbf16>, vector<128x128xbf16>, vector<128x128xf32> -> vector<128x128xf32>
    %30 = arith.truncf %29 : vector<128x128xf32> to vector<128x128xbf16>
    %c0_14 = arith.constant 0 : index
    %c0_15 = arith.constant 0 : index
    %31 = vector.load %arg6[%c0_14, %c0_15] : memref<128x128xbf16, #tpu.memory_space<vmem>>, vector<128x128xbf16>
    tpu.vector_store %arg6[%c0_14, %c0_15], %30 {strides = array<i32>} : memref<128x128xbf16, #tpu.memory_space<vmem>>, vector<128x128xbf16>,
    %cst_16 = arith.constant dense<0.000000e+00> : vector<128xf32>
    %32 = vector.multi_reduction <add>, %29, %cst_16 [0] : vector<128x128xf32> to vector<128xf32>
    %33 = vector.shape_cast %32 : vector<128xf32> to vector<1x128xf32>
    %c0_17 = arith.constant 0 : index
    %c0_18 = arith.constant 0 : index
    %c0_19 = arith.constant 0 : index
    %34 = vector.load %arg7[%c0_17, %c0_18, %c0_19] : memref<1x2x128xf32, #tpu.memory_space<vmem>>, vector<1x1x128xf32>
    %35 = vector.shape_cast %34 : vector<1x1x128xf32> to vector<1x128xf32>
    %36 = vector.shape_cast %33 : vector<1x128xf32> to vector<1x1x128xf32>
    tpu.vector_store %arg7[%c0_17, %c0_18, %c0_19], %36 {strides = array<i32>} : memref<1x2x128xf32, #tpu.memory_space<vmem>>, vector<1x1x128xf32>,
    %37 = arith.mulf %29, %29 : vector<128x128xf32>
    %cst_20 = arith.constant dense<0.000000e+00> : vector<128xf32>
    %38 = vector.multi_reduction <add>, %37, %cst_20 [0] : vector<128x128xf32> to vector<128xf32>
    %39 = vector.shape_cast %38 : vector<128xf32> to vector<1x128xf32>
    %c0_21 = arith.constant 0 : index
    %c1 = arith.constant 1 : index
    %c0_22 = arith.constant 0 : index
    %40 = vector.load %arg7[%c0_21, %c1, %c0_22] : memref<1x2x128xf32, #tpu.memory_space<vmem>>, vector<1x1x128xf32>
    %41 = vector.shape_cast %40 : vector<1x1x128xf32> to vector<1x128xf32>
    %42 = vector.shape_cast %39 : vector<1x128xf32> to vector<1x1x128xf32>
    tpu.vector_store %arg7[%c0_21, %c1, %c0_22], %42 {strides = array<i32>} : memref<1x2x128xf32, #tpu.memory_space<vmem>>, vector<1x1x128xf32>,
    return
  }
  func.func @transform_0(%arg0: i32) -> (i32, i32) {
    %c0_i32 = arith.constant 0 : i32
    %c0_i32_0 = arith.constant 0 : i32
    return %arg0, %c0_i32 : i32, i32
  }
  func.func @transform_1(%arg0: i32) -> (i32, i32) {
    %c0_i32 = arith.constant 0 : i32
    %c0_i32_0 = arith.constant 0 : i32
    %c0_i32_1 = arith.constant 0 : i32
    return %c0_i32, %c0_i32_0 : i32, i32
  }
  func.func @transform_2(%arg0: i32) -> (i32, i32) {
    %c0_i32 = arith.constant 0 : i32
    %c0_i32_0 = arith.constant 0 : i32
    %c0_i32_1 = arith.constant 0 : i32
    return %c0_i32, %c0_i32_0 : i32, i32
  }
  func.func @transform_3(%arg0: i32) -> (i32, i32) {
    %c0_i32 = arith.constant 0 : i32
    %c0_i32_0 = arith.constant 0 : i32
    %c0_i32_1 = arith.constant 0 : i32
    return %c0_i32, %c0_i32_0 : i32, i32
  }
  func.func @transform_4(%arg0: i32) -> (i32, i32) {
    %c0_i32 = arith.constant 0 : i32
    %c0_i32_0 = arith.constant 0 : i32
    %c0_i32_1 = arith.constant 0 : i32
    return %c0_i32, %c0_i32_0 : i32, i32
  }
  func.func @transform_5(%arg0: i32) -> (i32, i32) {
    %c0_i32 = arith.constant 0 : i32
    %c0_i32_0 = arith.constant 0 : i32
    return %arg0, %c0_i32 : i32, i32
  }
  func.func @transform_6(%arg0: i32) -> (i32, i32, i32) {
    %c0_i32 = arith.constant 0 : i32
    %c0_i32_0 = arith.constant 0 : i32
    %c0_i32_1 = arith.constant 0 : i32
    return %arg0, %c0_i32, %c0_i32_0 : i32, i32, i32
  }
}

</mosaic_0001>

<llo_original>
// kernel: _bottleneck_forward.6
$region0: #{_bottleneck_forward.6}
  #allocation0 [shape = 'u32[]', space=smem, size = 0x4, offset = 0x4, fixed_abs, tag = 'smem constant byte address 0x4 - core index']
  #allocation1 [shape = 'u32[144,128]{1,0:T(1,128)}', space=vmem, size = 0x12000, scoped, tag = 'internal scratch']
  %s0 = inlined_call_operand.vmem [shape: bf16[128,128], index: 0, kind: input, shape index: {}]
  %s1 = inlined_call_operand.vmem [shape: f32[2,128], index: 1, kind: input, shape index: {}]
  %s2 = inlined_call_operand.vmem [shape: f32[1,128], index: 2, kind: input, shape index: {}]
  %s3 = inlined_call_operand.vmem [shape: f32[1,128], index: 3, kind: input, shape index: {}]
  %s4 = inlined_call_operand.vmem [shape: bf16[128,128], index: 4, kind: output, shape index: {}]
  %s5 = sld [smem:[#allocation0]]
  $region26: #{_bottleneck_forward.6} parent=0
    _
  %s7 = ssub.s32 1, %s5
  %s8 = scalar_select 0, %s7, %s5
  // Predicated region
  $region2: #{_bottleneck_forward.6} parent=0 // pred_check
    _
  $region3: #{_bottleneck_forward.6} parent=0 // pred_check_branch
    %10 = sbr.rel (0) target = $region5
  $region4: #{_bottleneck_forward.6} parent=0 // pred_region
    _
  $region5: #{_bottleneck_forward.6} parent=0 // pred_fallthru
    _
  // Predicated region
  $region6: #{_bottleneck_forward.6} parent=0 // pred_check
    _
  $region7: #{_bottleneck_forward.6} parent=0 // pred_check_branch
    %12 = sbr.rel (0) target = $region9
  $region8: #{_bottleneck_forward.6} parent=0 // pred_region
    _
  $region9: #{_bottleneck_forward.6} parent=0 // pred_fallthru
    _
  // Predicated region
  $region10: #{_bottleneck_forward.6} parent=0 // pred_check
    _
  $region11: #{_bottleneck_forward.6} parent=0 // pred_check_branch
    %14 = sbr.rel (0) target = $region13
  $region12: #{_bottleneck_forward.6} parent=0 // pred_region
    _
  $region13: #{_bottleneck_forward.6} parent=0 // pred_fallthru
    _
  // Predicated region
  $region14: #{_bottleneck_forward.6} parent=0 // pred_check
    _
  $region15: #{_bottleneck_forward.6} parent=0 // pred_check_branch
    %16 = sbr.rel (0) target = $region17
  $region16: #{_bottleneck_forward.6} parent=0 // pred_region
    _
  $region17: #{_bottleneck_forward.6} parent=0 // pred_fallthru
    _
  %v17 = vld [vmem:[%s1] sm:$0x3]
  %v18 = vld [vmem:[%s2] sm:$0x1]
  %v19 = vld [vmem:[%s3] sm:$0x1]
  %v20 = vmul.f32 %v17, 0.0078125
  %v21 = vmul.f32 %v20, %v20
  %v23 = vrot.slane %v21, 7
  %v25 = vsub.f32 %v20, %v23
  %v26 = vmax.f32 %v25, 0.0
  %v27 = vadd.f32 %v26, 1e-05
  %v28 = vrsqrt.pop %v27
  %v31 = vunpack.c.l.s4 1966171168
  %v32 = vunpack.c.0.s8 %v31
  %v33 = vlaneseq
  %v34 = vshrl.u32 %v33, 7
  %v35 = vsub.s32 %v32, %v34
  %v36 = vrot.slane %v28, %v35
  %v37 = vcombine.high %v36, %v36
  %v39 = vunpack.c.l.s4 1966171168
  %v40 = vunpack.c.0.s8 %v39
  %v41 = vlaneseq
  %v42 = vshrl.u32 %v41, 7
  %v43 = vsub.s32 %v40, %v42
  %v44 = vrot.slane %v37, %v43
  %v46 = vmul.f32 %v18, %v44
  %v47 = vmul.f32 %v46, %v20
  %v48 = vsub.f32 %v19, %v47
  %v49 = vld [vmem:[%s0] sm:$0xf]
  %v50 = vld [vmem:[%s0 + $0x4] sm:$0xf]
  %v51 = vld [vmem:[%s0 + $0x8] sm:$0xf]
  %v52 = vld [vmem:[%s0 + $0xc] sm:$0xf]
  %v53 = vld [vmem:[%s0 + $0x10] sm:$0xf]
  %v54 = vld [vmem:[%s0 + $0x14] sm:$0xf]
  %v55 = vld [vmem:[%s0 + $0x18] sm:$0xf]
  %v56 = vld [vmem:[%s0 + $0x1c] sm:$0xf]
  %v57 = vld [vmem:[%s0 + $0x20] sm:$0xf]
  %v58 = vld [vmem:[%s0 + $0x24] sm:$0xf]
  %v59 = vld [vmem:[%s0 + $0x28] sm:$0xf]
  %v60 = vld [vmem:[%s0 + $0x2c] sm:$0xf]
  %v61 = vld [vmem:[%s0 + $0x30] sm:$0xf]
  %v62 = vld [vmem:[%s0 + $0x34] sm:$0xf]
  %v63 = vld [vmem:[%s0 + $0x38] sm:$0xf]
  %v64 = vld [vmem:[%s0 + $0x3c] sm:$0xf]
  %v65 = vunpack.c.l.bf16 %v49
  %v66 = vunpack.c.l.bf16 %v50
  %v67 = vunpack.c.l.bf16 %v51
  %v68 = vunpack.c.l.bf16 %v52
  %v69 = vunpack.c.l.bf16 %v53
  %v70 = vunpack.c.l.bf16 %v54
  %v71 = vunpack.c.l.bf16 %v55
  %v72 = vunpack.c.l.bf16 %v56
  %v73 = vunpack.c.l.bf16 %v57
  %v74 = vunpack.c.l.bf16 %v58
  %v75 = vunpack.c.l.bf16 %v59
  %v76 = vunpack.c.l.bf16 %v60
  %v77 = vunpack.c.l.bf16 %v61
  %v78 = vunpack.c.l.bf16 %v62
  %v79 = vunpack.c.l.bf16 %v63
  %v80 = vunpack.c.l.bf16 %v64
  %v82 = vlaneseq
  %v83 = vshrl.u32 %v82, 7
  %v84 = vsub.s32 0, %v83
  %v85 = vrot.slane %v46, %v84
  %v87 = vmul.f32 %v65, %v85
  %v88 = vmul.f32 %v66, %v85
  %v89 = vmul.f32 %v67, %v85
  %v90 = vmul.f32 %v68, %v85
  %v91 = vmul.f32 %v69, %v85
  %v92 = vmul.f32 %v70, %v85
  %v93 = vmul.f32 %v71, %v85
  %v94 = vmul.f32 %v72, %v85
  %v95 = vmul.f32 %v73, %v85
  %v96 = vmul.f32 %v74, %v85
  %v97 = vmul.f32 %v75, %v85
  %v98 = vmul.f32 %v76, %v85
  %v99 = vmul.f32 %v77, %v85
  %v100 = vmul.f32 %v78, %v85
  %v101 = vmul.f32 %v79, %v85
  %v102 = vmul.f32 %v80, %v85
  %v104 = vlaneseq
  %v105 = vshrl.u32 %v104, 7
  %v106 = vsub.s32 0, %v105
  %v107 = vrot.slane %v48, %v106
  %v109 = vadd.f32 %v87, %v107
  %v110 = vadd.f32 %v88, %v107
  %v111 = vadd.f32 %v89, %v107
  %v112 = vadd.f32 %v90, %v107
  %v113 = vadd.f32 %v91, %v107
  %v114 = vadd.f32 %v92, %v107
  %v115 = vadd.f32 %v93, %v107
  %v116 = vadd.f32 %v94, %v107
  %v117 = vadd.f32 %v95, %v107
  %v118 = vadd.f32 %v96, %v107
  %v119 = vadd.f32 %v97, %v107
  %v120 = vadd.f32 %v98, %v107
  %v121 = vadd.f32 %v99, %v107
  %v122 = vadd.f32 %v100, %v107
  %v123 = vadd.f32 %v101, %v107
  %v124 = vadd.f32 %v102, %v107
  %v125 = vmax.f32 %v109, 0.0
  %v126 = vmax.f32 %v110, 0.0
  %v127 = vmax.f32 %v111, 0.0
  %v128 = vmax.f32 %v112, 0.0
  %v129 = vmax.f32 %v113, 0.0
  %v130 = vmax.f32 %v114, 0.0
  %v131 = vmax.f32 %v115, 0.0
  %v132 = vmax.f32 %v116, 0.0
  %v133 = vmax.f32 %v117, 0.0
  %v134 = vmax.f32 %v118, 0.0
  %v135 = vmax.f32 %v119, 0.0
  %v136 = vmax.f32 %v120, 0.0
  %v137 = vmax.f32 %v121, 0.0
  %v138 = vmax.f32 %v122, 0.0
  %v139 = vmax.f32 %v123, 0.0
  %v140 = vmax.f32 %v124, 0.0
  %v141 = vpack.c.bf16 %v126, %v125
  %v142 = vpack.c.bf16 %v128, %v127
  %v143 = vpack.c.bf16 %v130, %v129
  %v144 = vpack.c.bf16 %v132, %v131
  %v145 = vpack.c.bf16 %v134, %v133
  %v146 = vpack.c.bf16 %v136, %v135
  %v147 = vpack.c.bf16 %v138, %v137
  %v148 = vpack.c.bf16 %v140, %v139
  %v157 = vunpack.c.l.b16 %v141
  %v158 = vunpack.c.h.b16 %v141
  %v159 = vunpack.c.l.b16 %v142
  %v160 = vunpack.c.h.b16 %v142
  %v161 = vunpack.c.l.b16 %v143
  %v162 = vunpack.c.h.b16 %v143
  %v163 = vunpack.c.l.b16 %v144
  %v164 = vunpack.c.h.b16 %v144
  %v165 = vunpack.c.l.b16 %v145
  %v166 = vunpack.c.h.b16 %v145
  %v167 = vunpack.c.l.b16 %v146
  %v168 = vunpack.c.h.b16 %v146
  %v169 = vunpack.c.l.b16 %v147
  %v170 = vunpack.c.h.b16 %v147
  %v171 = vunpack.c.l.b16 %v148
  %v172 = vunpack.c.h.b16 %v148
  %v173 = vpack.c.b16 %v157, %v157
  %v174 = vpack.c.b16 %v158, %v158
  %v175 = vpack.c.b16 %v159, %v159
  %v176 = vpack.c.b16 %v160, %v160
  %v177 = vpack.c.b16 %v161, %v161
  %v178 = vpack.c.b16 %v162, %v162
  %v179 = vpack.c.b16 %v163, %v163
  %v180 = vpack.c.b16 %v164, %v164
  %v181 = vpack.c.b16 %v165, %v165
  %v182 = vpack.c.b16 %v166, %v166
  %v183 = vpack.c.b16 %v167, %v167
  %v184 = vpack.c.b16 %v168, %v168
  %v185 = vpack.c.b16 %v169, %v169
  %v186 = vpack.c.b16 %v170, %v170
  %v187 = vpack.c.b16 %v171, %v171
  %v188 = vpack.c.b16 %v172, %v172
  %205 = vst [vmem:[%s4] sm:$0xf] %v173
  %206 = vst [vmem:[%s4 + $0x4] sm:$0xf] %v174
  %207 = vst [vmem:[%s4 + $0x8] sm:$0xf] %v175
  %208 = vst [vmem:[%s4 + $0xc] sm:$0xf] %v176
  %209 = vst [vmem:[%s4 + $0x10] sm:$0xf] %v177
  %210 = vst [vmem:[%s4 + $0x14] sm:$0xf] %v178
  %211 = vst [vmem:[%s4 + $0x18] sm:$0xf] %v179
  %212 = vst [vmem:[%s4 + $0x1c] sm:$0xf] %v180
  %213 = vst [vmem:[%s4 + $0x20] sm:$0xf] %v181
  %214 = vst [vmem:[%s4 + $0x24] sm:$0xf] %v182
  %215 = vst [vmem:[%s4 + $0x28] sm:$0xf] %v183
  %216 = vst [vmem:[%s4 + $0x2c] sm:$0xf] %v184
  %217 = vst [vmem:[%s4 + $0x30] sm:$0xf] %v185
  %218 = vst [vmem:[%s4 + $0x34] sm:$0xf] %v186
  %219 = vst [vmem:[%s4 + $0x38] sm:$0xf] %v187
  %220 = vst [vmem:[%s4 + $0x3c] sm:$0xf] %v188
  // Predicated region
  $region18: #{_bottleneck_forward.6} parent=0 // pred_check
    _
  $region19: #{_bottleneck_forward.6} parent=0 // pred_check_branch
    %222 = sbr.rel (0) target = $region21
  $region20: #{_bottleneck_forward.6} parent=0 // pred_region
    _
  $region21: #{_bottleneck_forward.6} parent=0 // pred_fallthru
    _
  // Predicated region
  $region22: #{_bottleneck_forward.6} parent=0 // pred_check
    _
  $region23: #{_bottleneck_forward.6} parent=0 // pred_check_branch
    %224 = sbr.rel (0) target = $region25
  $region24: #{_bottleneck_forward.6} parent=0 // pred_region
    _
  $region25: #{_bottleneck_forward.6} parent=0 // pred_fallthru
    _

// kernel: _bottleneck_forward.5
$region0: #{_bottleneck_forward.5}
  #allocation0 [shape = 'u32[]', space=smem, size = 0x4, offset = 0x4, fixed_abs, tag = 'smem constant byte address 0x4 - core index']
  #allocation1 [shape = 'u32[144,128]{1,0:T(1,128)}', space=vmem, size = 0x12000, scoped, tag = 'internal scratch']
  %s0 = inlined_call_operand.vmem [shape: bf16[128,128], index: 0, kind: input, shape index: {}]
  %s1 = inlined_call_operand.vmem [shape: bf16[128,128], index: 1, kind: input, shape index: {}]
  %s2 = inlined_call_operand.vmem [shape: bf16[128,128], index: 2, kind: output, shape index: {0}]
  %s3 = inlined_call_operand.vmem [shape: f32[1,2,128], index: 3, kind: output, shape index: {1}]
  %4 = xla_tuple %s2, %s3
  %s5 = sld [smem:[#allocation0]]
  $region26: #{_bottleneck_forward.5} parent=0
    _
  %s7 = ssub.s32 1, %s5
  %s8 = scalar_select 0, %s7, %s5
  // Predicated region
  $region2: #{_bottleneck_forward.5} parent=0 // pred_check
    _
  $region3: #{_bottleneck_forward.5} parent=0 // pred_check_branch
    %10 = sbr.rel (0) target = $region5
  $region4: #{_bottleneck_forward.5} parent=0 // pred_region
    _
  $region5: #{_bottleneck_forward.5} parent=0 // pred_fallthru
    _
  // Predicated region
  $region6: #{_bottleneck_forward.5} parent=0 // pred_check
    _
  $region7: #{_bottleneck_forward.5} parent=0 // pred_check_branch
    %12 = sbr.rel (0) target = $region9
  $region8: #{_bottleneck_forward.5} parent=0 // pred_region
    _
  $region9: #{_bottleneck_forward.5} parent=0 // pred_fallthru
    _
  %v14 = vld [vmem:[%s0] sm:$0xf]
  %v15 = vld [vmem:[%s0 + $0x4] sm:$0xf]
  %v16 = vld [vmem:[%s0 + $0x8] sm:$0xf]
  %v17 = vld [vmem:[%s0 + $0xc] sm:$0xf]
  %v18 = vld [vmem:[%s0 + $0x10] sm:$0xf]
  %v19 = vld [vmem:[%s0 + $0x14] sm:$0xf]
  %v20 = vld [vmem:[%s0 + $0x18] sm:$0xf]
  %v21 = vld [vmem:[%s0 + $0x1c] sm:$0xf]
  %v22 = vld [vmem:[%s0 + $0x20] sm:$0xf]
  %v23 = vld [vmem:[%s0 + $0x24] sm:$0xf]
  %v24 = vld [vmem:[%s0 + $0x28] sm:$0xf]
  %v25 = vld [vmem:[%s0 + $0x2c] sm:$0xf]
  %v26 = vld [vmem:[%s0 + $0x30] sm:$0xf]
  %v27 = vld [vmem:[%s0 + $0x34] sm:$0xf]
  %v28 = vld [vmem:[%s0 + $0x38] sm:$0xf]
  %v29 = vld [vmem:[%s0 + $0x3c] sm:$0xf]
  %v30 = vld [vmem:[%s1] sm:$0xf]
  %v31 = vld [vmem:[%s1 + $0x4] sm:$0xf]
  %v32 = vld [vmem:[%s1 + $0x8] sm:$0xf]
  %v33 = vld [vmem:[%s1 + $0xc] sm:$0xf]
  %v34 = vld [vmem:[%s1 + $0x10] sm:$0xf]
  %v35 = vld [vmem:[%s1 + $0x14] sm:$0xf]
  %v36 = vld [vmem:[%s1 + $0x18] sm:$0xf]
  %v37 = vld [vmem:[%s1 + $0x1c] sm:$0xf]
  %v38 = vld [vmem:[%s1 + $0x20] sm:$0xf]
  %v39 = vld [vmem:[%s1 + $0x24] sm:$0xf]
  %v40 = vld [vmem:[%s1 + $0x28] sm:$0xf]
  %v41 = vld [vmem:[%s1 + $0x2c] sm:$0xf]
  %v42 = vld [vmem:[%s1 + $0x30] sm:$0xf]
  %v43 = vld [vmem:[%s1 + $0x34] sm:$0xf]
  %v44 = vld [vmem:[%s1 + $0x38] sm:$0xf]
  %v45 = vld [vmem:[%s1 + $0x3c] sm:$0xf]
  %v62 = vunpack.c.l.b16 %v14
  %v63 = vunpack.c.l.b16 %v15
  %v64 = vunpack.c.l.b16 %v16
  %v65 = vunpack.c.l.b16 %v17
  %v66 = vunpack.c.l.b16 %v18
  %v67 = vunpack.c.l.b16 %v19
  %v68 = vunpack.c.l.b16 %v20
  %v69 = vunpack.c.l.b16 %v21
  %v70 = vunpack.c.l.b16 %v22
  %v71 = vunpack.c.l.b16 %v23
  %v72 = vunpack.c.l.b16 %v24
  %v73 = vunpack.c.l.b16 %v25
  %v74 = vunpack.c.l.b16 %v26
  %v75 = vunpack.c.l.b16 %v27
  %v76 = vunpack.c.l.b16 %v28
  %v77 = vunpack.c.l.b16 %v29
  %v78 = vpack.c.b16 %v63, %v62
  %v79 = vpack.c.b16 %v65, %v64
  %v80 = vpack.c.b16 %v67, %v66
  %v81 = vpack.c.b16 %v69, %v68
  %v82 = vpack.c.b16 %v71, %v70
  %v83 = vpack.c.b16 %v73, %v72
  %v84 = vpack.c.b16 %v75, %v74
  %v85 = vpack.c.b16 %v77, %v76
  %v110 = vunpack.c.l.b16 %v30
  %v111 = vunpack.c.l.b16 %v31
  %v112 = vunpack.c.l.b16 %v32
  %v113 = vunpack.c.l.b16 %v33
  %v114 = vunpack.c.l.b16 %v34
  %v115 = vunpack.c.l.b16 %v35
  %v116 = vunpack.c.l.b16 %v36
  %v117 = vunpack.c.l.b16 %v37
  %v118 = vunpack.c.l.b16 %v38
  %v119 = vunpack.c.l.b16 %v39
  %v120 = vunpack.c.l.b16 %v40
  %v121 = vunpack.c.l.b16 %v41
  %v122 = vunpack.c.l.b16 %v42
  %v123 = vunpack.c.l.b16 %v43
  %v124 = vunpack.c.l.b16 %v44
  %v125 = vunpack.c.l.b16 %v45
  %v126 = vpack.c.b16 %v111, %v110
  %v127 = vpack.c.b16 %v113, %v112
  %v128 = vpack.c.b16 %v115, %v114
  %v129 = vpack.c.b16 %v117, %v116
  %v130 = vpack.c.b16 %v119, %v118
  %v131 = vpack.c.b16 %v121, %v120
  %v132 = vpack.c.b16 %v123, %v122
  %v133 = vpack.c.b16 %v125, %v124
  %142 = vmatprep.subr.bf16.mxu0 0
  %143 = vmatpush1.bf16.msra.mxu0 %v133
  %144 = vmatprep.subr.bf16.mxu0 0
  %145 = vmatpush1.bf16.msra.mxu0 %v132
  %146 = vmatprep.subr.bf16.mxu0 0
  %147 = vmatpush1.bf16.msra.mxu0 %v131
  %148 = vmatprep.subr.bf16.mxu0 0
  %149 = vmatpush1.bf16.msra.mxu0 %v130
  %150 = vmatprep.subr.bf16.mxu0 0
  %151 = vmatpush1.bf16.msra.mxu0 %v129
  %152 = vmatprep.subr.bf16.mxu0 0
  %153 = vmatpush1.bf16.msra.mxu0 %v128
  %154 = vmatprep.subr.bf16.mxu0 0
  %155 = vmatpush1.bf16.msra.mxu0 %v127
  %156 = vmatprep.subr.bf16.mxu0 0
  %157 = vmatpush1.bf16.msra.mxu0 %v126
  %158 = vmatprep.subr.bf16.mxu0 0
  %159 = vmatpush2.bf16.msra.mxu0 0
  %160 = vmatprep.subr.bf16.mxu0 0
  %161 = vmatpush2.bf16.msra.mxu0 0
  %162 = vmatprep.subr.bf16.mxu0 0
  %163 = vmatpush2.bf16.msra.mxu0 0
  %164 = vmatprep.subr.bf16.mxu0 0
  %165 = vmatpush2.bf16.msra.mxu0 0
  %166 = vmatprep.subr.bf16.mxu0 0
  %167 = vmatpush2.bf16.msra.mxu0 0
  %168 = vmatprep.subr.bf16.mxu0 0
  %169 = vmatpush2.bf16.msra.mxu0 0
  %170 = vmatprep.subr.bf16.mxu0 0
  %171 = vmatpush2.bf16.msra.mxu0 0
  %172 = vmatprep.subr.bf16.mxu0 0
  %173 = vmatpush2.bf16.msra.mxu0 0
  %174 = vmatprep.mubr.bf16.mxu0 0
  %175 = vmatmul.mubr.bf16.gmra.mxu0 %v78
  %v176 = vpop.f32.mrf.mxu0
  %v177 = vadd.f32 0.0, %v176
  %v178 = vpop.f32.mrf.mxu0
  %v179 = vpop.f32.mrf.mxu0
  %v180 = vadd.f32 0.0, %v179
  %v181 = vpop.f32.mrf.mxu0
  %182 = vmatprep.mubr.bf16.mxu0 0
  %183 = vmatmul.mubr.bf16.gmra.mxu0 %v79
  %v184 = vpop.f32.mrf.mxu0
  %v185 = vadd.f32 0.0, %v184
  %v186 = vpop.f32.mrf.mxu0
  %v187 = vpop.f32.mrf.mxu0
  %v188 = vadd.f32 0.0, %v187
  %v189 = vpop.f32.mrf.mxu0
  %190 = vmatprep.mubr.bf16.mxu0 0
  %191 = vmatmul.mubr.bf16.gmra.mxu0 %v80
  %v192 = vpop.f32.mrf.mxu0
  %v193 = vadd.f32 0.0, %v192
  %v194 = vpop.f32.mrf.mxu0
  %v195 = vpop.f32.mrf.mxu0
  %v196 = vadd.f32 0.0, %v195
  %v197 = vpop.f32.mrf.mxu0
  %198 = vmatprep.mubr.bf16.mxu0 0
  %199 = vmatmul.mubr.bf16.gmra.mxu0 %v81
  %v200 = vpop.f32.mrf.mxu0
  %v201 = vadd.f32 0.0, %v200
  %v202 = vpop.f32.mrf.mxu0
  %v203 = vpop.f32.mrf.mxu0
  %v204 = vadd.f32 0.0, %v203
  %v205 = vpop.f32.mrf.mxu0
  %206 = vmatprep.mubr.bf16.mxu0 0
  %207 = vmatmul.mubr.bf16.gmra.mxu0 %v82
  %v208 = vpop.f32.mrf.mxu0
  %v209 = vadd.f32 0.0, %v208
  %v210 = vpop.f32.mrf.mxu0
  %v211 = vpop.f32.mrf.mxu0
  %v212 = vadd.f32 0.0, %v211
  %v213 = vpop.f32.mrf.mxu0
  %214 = vmatprep.mubr.bf16.mxu0 0
  %215 = vmatmul.mubr.bf16.gmra.mxu0 %v83
  %v216 = vpop.f32.mrf.mxu0
  %v217 = vadd.f32 0.0, %v216
  %v218 = vpop.f32.mrf.mxu0
  %v219 = vpop.f32.mrf.mxu0
  %v220 = vadd.f32 0.0, %v219
  %v221 = vpop.f32.mrf.mxu0
  %222 = vmatprep.mubr.bf16.mxu0 0
  %223 = vmatmul.mubr.bf16.gmra.mxu0 %v84
  %v224 = vpop.f32.mrf.mxu0
  %v225 = vadd.f32 0.0, %v224
  %v226 = vpop.f32.mrf.mxu0
  %v227 = vpop.f32.mrf.mxu0
  %v228 = vadd.f32 0.0, %v227
  %v229 = vpop.f32.mrf.mxu0
  %230 = vmatprep.mubr.bf16.mxu0 0
  %231 = vmatmul.mubr.bf16.gmra.mxu0 %v85
  %v232 = vpop.f32.mrf.mxu0
  %v233 = vadd.f32 0.0, %v232
  %v234 = vpop.f32.mrf.mxu0
  %v235 = vpop.f32.mrf.mxu0
  %v236 = vadd.f32 0.0, %v235
  %v237 = vpop.f32.mrf.mxu0
  %238 = vdwg.mxu0
  %v239 = vpack.c.bf16 %v180, %v177
  %v240 = vpack.c.bf16 %v188, %v185
  %v241 = vpack.c.bf16 %v196, %v193
  %v242 = vpack.c.bf16 %v204, %v201
  %v243 = vpack.c.bf16 %v212, %v209
  %v244 = vpack.c.bf16 %v220, %v217
  %v245 = vpack.c.bf16 %v228, %v225
  %v246 = vpack.c.bf16 %v236, %v233
  %v255 = vunpack.c.l.b16 %v239
  %v256 = vunpack.c.h.b16 %v239
  %v257 = vunpack.c.l.b16 %v240
  %v258 = vunpack.c.h.b16 %v240
  %v259 = vunpack.c.l.b16 %v241
  %v260 = vunpack.c.h.b16 %v241
  %v261 = vunpack.c.l.b16 %v242
  %v262 = vunpack.c.h.b16 %v242
  %v263 = vunpack.c.l.b16 %v243
  %v264 = vunpack.c.h.b16 %v243
  %v265 = vunpack.c.l.b16 %v244
  %v266 = vunpack.c.h.b16 %v244
  %v267 = vunpack.c.l.b16 %v245
  %v268 = vunpack.c.h.b16 %v245
  %v269 = vunpack.c.l.b16 %v246
  %v270 = vunpack.c.h.b16 %v246
  %v271 = vpack.c.b16 %v255, %v255
  %v272 = vpack.c.b16 %v256, %v256
  %v273 = vpack.c.b16 %v257, %v257
  %v274 = vpack.c.b16 %v258, %v258
  %v275 = vpack.c.b16 %v259, %v259
  %v276 = vpack.c.b16 %v260, %v260
  %v277 = vpack.c.b16 %v261, %v261
  %v278 = vpack.c.b16 %v262, %v262
  %v279 = vpack.c.b16 %v263, %v263
  %v280 = vpack.c.b16 %v264, %v264
  %v281 = vpack.c.b16 %v265, %v265
  %v282 = vpack.c.b16 %v266, %v266
  %v283 = vpack.c.b16 %v267, %v267
  %v284 = vpack.c.b16 %v268, %v268
  %v285 = vpack.c.b16 %v269, %v269
  %v286 = vpack.c.b16 %v270, %v270
  %303 = vst [vmem:[%s2] sm:$0xf] %v271
  %304 = vst [vmem:[%s2 + $0x4] sm:$0xf] %v272
  %305 = vst [vmem:[%s2 + $0x8] sm:$0xf] %v273
  %306 = vst [vmem:[%s2 + $0xc] sm:$0xf] %v274
  %307 = vst [vmem:[%s2 + $0x10] sm:$0xf] %v275
  %308 = vst [vmem:[%s2 + $0x14] sm:$0xf] %v276
  %309 = vst [vmem:[%s2 + $0x18] sm:$0xf] %v277
  %310 = vst [vmem:[%s2 + $0x1c] sm:$0xf] %v278
  %311 = vst [vmem:[%s2 + $0x20] sm:$0xf] %v279
  %312 = vst [vmem:[%s2 + $0x24] sm:$0xf] %v280
  %313 = vst [vmem:[%s2 + $0x28] sm:$0xf] %v281
  %314 = vst [vmem:[%s2 + $0x2c] sm:$0xf] %v282
  %315 = vst [vmem:[%s2 + $0x30] sm:$0xf] %v283
  %316 = vst [vmem:[%s2 + $0x34] sm:$0xf] %v284
  %317 = vst [vmem:[%s2 + $0x38] sm:$0xf] %v285
  %318 = vst [vmem:[%s2 + $0x3c] sm:$0xf] %v286
  %v319 = vadd.f32 %v177, %v180
  %v320 = vadd.f32 %v319, %v185
  %v321 = vadd.f32 %v320, %v188
  %v322 = vadd.f32 %v321, %v193
  %v323 = vadd.f32 %v322, %v196
  %v324 = vadd.f32 %v323, %v201
  %v325 = vadd.f32 %v324, %v204
  %v326 = vadd.f32 %v325, %v209
  %v327 = vadd.f32 %v326, %v212
  %v328 = vadd.f32 %v327, %v217
  %v329 = vadd.f32 %v328, %v220
  %v330 = vadd.f32 %v329, %v225
  %v331 = vadd.f32 %v330, %v228
  %v332 = vadd.f32 %v331, %v233
  %v333 = vadd.f32 %v332, %v236
  %v334 = vrot.slane %v333, 4
  %v335 = vadd.f32 %v333, %v334
  %v336 = vrot.slane %v335, 2
  %v337 = vadd.f32 %v335, %v336
  %v338 = vrot.slane %v337, 1
  %v339 = vadd.f32 %v337, %v338
  %340 = vst [vmem:[%s3] sm:$0x1] %v339
  %v341 = vmul.f32 %v177, %v177
  %v342 = vmul.f32 %v180, %v180
  %v343 = vmul.f32 %v185, %v185
  %v344 = vmul.f32 %v188, %v188
  %v345 = vmul.f32 %v193, %v193
  %v346 = vmul.f32 %v196, %v196
  %v347 = vmul.f32 %v201, %v201
  %v348 = vmul.f32 %v204, %v204
  %v349 = vmul.f32 %v209, %v209
  %v350 = vmul.f32 %v212, %v212
  %v351 = vmul.f32 %v217, %v217
  %v352 = vmul.f32 %v220, %v220
  %v353 = vmul.f32 %v225, %v225
  %v354 = vmul.f32 %v228, %v228
  %v355 = vmul.f32 %v233, %v233
  %v356 = vmul.f32 %v236, %v236
  %v357 = vadd.f32 %v341, %v342
  %v358 = vadd.f32 %v357, %v343
  %v359 = vadd.f32 %v358, %v344
  %v360 = vadd.f32 %v359, %v345
  %v361 = vadd.f32 %v360, %v346
  %v362 = vadd.f32 %v361, %v347
  %v363 = vadd.f32 %v362, %v348
  %v364 = vadd.f32 %v363, %v349
  %v365 = vadd.f32 %v364, %v350
  %v366 = vadd.f32 %v365, %v351
  %v367 = vadd.f32 %v366, %v352
  %v368 = vadd.f32 %v367, %v353
  %v369 = vadd.f32 %v368, %v354
  %v370 = vadd.f32 %v369, %v355
  %v371 = vadd.f32 %v370, %v356
  %v372 = vrot.slane %v371, 4
  %v373 = vadd.f32 %v371, %v372
  %v374 = vrot.slane %v373, 2
  %v375 = vadd.f32 %v373, %v374
  %v376 = vrot.slane %v375, 1
  %v377 = vadd.f32 %v375, %v376
  %378 = vst [vmem:[%s3 + $0x1] sm:$0x1] %v377
  // Predicated region
  $region10: #{_bottleneck_forward.5} parent=0 // pred_check
    _
  $region11: #{_bottleneck_forward.5} parent=0 // pred_check_branch
    %380 = sbr.rel (0) target = $region13
  $region12: #{_bottleneck_forward.5} parent=0 // pred_region
    _
  $region13: #{_bottleneck_forward.5} parent=0 // pred_fallthru
    _
  // Predicated region
  $region14: #{_bottleneck_forward.5} parent=0 // pred_check
    _
  $region15: #{_bottleneck_forward.5} parent=0 // pred_check_branch
    %382 = sbr.rel (0) target = $region17
  $region16: #{_bottleneck_forward.5} parent=0 // pred_region
    _
  $region17: #{_bottleneck_forward.5} parent=0 // pred_fallthru
    _
  // Predicated region
  $region18: #{_bottleneck_forward.5} parent=0 // pred_check
    _
  $region19: #{_bottleneck_forward.5} parent=0 // pred_check_branch
    %384 = sbr.rel (0) target = $region21
  $region20: #{_bottleneck_forward.5} parent=0 // pred_region
    _
  $region21: #{_bottleneck_forward.5} parent=0 // pred_fallthru
    _
  // Predicated region
  $region22: #{_bottleneck_forward.5} parent=0 // pred_check
    _
  $region23: #{_bottleneck_forward.5} parent=0 // pred_check_branch
    %386 = sbr.rel (0) target = $region25
  $region24: #{_bottleneck_forward.5} parent=0 // pred_region
    _
  $region25: #{_bottleneck_forward.5} parent=0 // pred_fallthru
    _

// kernel: _bottleneck_forward.9
$region0: #{_bottleneck_forward.9}
  #allocation0 [shape = 'u32[]', space=smem, size = 0x4, offset = 0x4, fixed_abs, tag = 'smem constant byte address 0x4 - core index']
  #allocation1 [shape = 'u32[144,128]{1,0:T(1,128)}', space=vmem, size = 0x12000, scoped, tag = 'internal scratch']
  %s0 = inlined_call_operand.vmem [shape: bf16[128,128], index: 0, kind: input, shape index: {}]
  %s1 = inlined_call_operand.vmem [shape: f32[2,128], index: 1, kind: input, shape index: {}]
  %s2 = inlined_call_operand.vmem [shape: f32[1,128], index: 2, kind: input, shape index: {}]
  %s3 = inlined_call_operand.vmem [shape: f32[1,128], index: 3, kind: input, shape index: {}]
  %s4 = inlined_call_operand.vmem [shape: f32[128,128], index: 4, kind: input, shape index: {}]
  %s5 = inlined_call_operand.vmem [shape: f32[128,128], index: 5, kind: output, shape index: {}]
  %s6 = sld [smem:[#allocation0]]
  $region30: #{_bottleneck_forward.9} parent=0
    _
  %s8 = ssub.s32 1, %s6
  %s9 = scalar_select 0, %s8, %s6
  // Predicated region
  $region2: #{_bottleneck_forward.9} parent=0 // pred_check
    _
  $region3: #{_bottleneck_forward.9} parent=0 // pred_check_branch
    %11 = sbr.rel (0) target = $region5
  $region4: #{_bottleneck_forward.9} parent=0 // pred_region
    _
  $region5: #{_bottleneck_forward.9} parent=0 // pred_fallthru
    _
  // Predicated region
  $region6: #{_bottleneck_forward.9} parent=0 // pred_check
    _
  $region7: #{_bottleneck_forward.9} parent=0 // pred_check_branch
    %13 = sbr.rel (0) target = $region9
  $region8: #{_bottleneck_forward.9} parent=0 // pred_region
    _
  $region9: #{_bottleneck_forward.9} parent=0 // pred_fallthru
    _
  // Predicated region
  $region10: #{_bottleneck_forward.9} parent=0 // pred_check
    _
  $region11: #{_bottleneck_forward.9} parent=0 // pred_check_branch
    %15 = sbr.rel (0) target = $region13
  $region12: #{_bottleneck_forward.9} parent=0 // pred_region
    _
  $region13: #{_bottleneck_forward.9} parent=0 // pred_fallthru
    _
  // Predicated region
  $region14: #{_bottleneck_forward.9} parent=0 // pred_check
    _
  $region15: #{_bottleneck_forward.9} parent=0 // pred_check_branch
    %17 = sbr.rel (0) target = $region17
  $region16: #{_bottleneck_forward.9} parent=0 // pred_region
    _
  $region17: #{_bottleneck_forward.9} parent=0 // pred_fallthru
    _
  // Predicated region
  $region18: #{_bottleneck_forward.9} parent=0 // pred_check
    _
  $region19: #{_bottleneck_forward.9} parent=0 // pred_check_branch
    %19 = sbr.rel (0) target = $region21
  $region20: #{_bottleneck_forward.9} parent=0 // pred_region
    _
  $region21: #{_bottleneck_forward.9} parent=0 // pred_fallthru
    _
  %v20 = vld [vmem:[%s1] sm:$0x3]
  %v21 = vld [vmem:[%s2] sm:$0x1]
  %v22 = vld [vmem:[%s3] sm:$0x1]
  %v23 = vmul.f32 %v20, 0.0078125
  %v24 = vmul.f32 %v23, %v23
  %v26 = vrot.slane %v24, 7
  %v28 = vsub.f32 %v23, %v26
  %v29 = vmax.f32 %v28, 0.0
  %v30 = vadd.f32 %v29, 1e-05
  %v31 = vrsqrt.pop %v30
  %v34 = vunpack.c.l.s4 1966171168
  %v35 = vunpack.c.0.s8 %v34
  %v36 = vlaneseq
  %v37 = vshrl.u32 %v36, 7
  %v38 = vsub.s32 %v35, %v37
  %v39 = vrot.slane %v31, %v38
  %v40 = vcombine.high %v39, %v39
  %v42 = vunpack.c.l.s4 1966171168
  %v43 = vunpack.c.0.s8 %v42
  %v44 = vlaneseq
  %v45 = vshrl.u32 %v44, 7
  %v46 = vsub.s32 %v43, %v45
  %v47 = vrot.slane %v40, %v46
  %v49 = vmul.f32 %v21, %v47
  %v50 = vmul.f32 %v49, %v23
  %v51 = vsub.f32 %v22, %v50
  %v52 = vld [vmem:[%s0] sm:$0xf]
  %v53 = vld [vmem:[%s0 + $0x4] sm:$0xf]
  %v54 = vld [vmem:[%s0 + $0x8] sm:$0xf]
  %v55 = vld [vmem:[%s0 + $0xc] sm:$0xf]
  %v56 = vld [vmem:[%s0 + $0x10] sm:$0xf]
  %v57 = vld [vmem:[%s0 + $0x14] sm:$0xf]
  %v58 = vld [vmem:[%s0 + $0x18] sm:$0xf]
  %v59 = vld [vmem:[%s0 + $0x1c] sm:$0xf]
  %v60 = vld [vmem:[%s0 + $0x20] sm:$0xf]
  %v61 = vld [vmem:[%s0 + $0x24] sm:$0xf]
  %v62 = vld [vmem:[%s0 + $0x28] sm:$0xf]
  %v63 = vld [vmem:[%s0 + $0x2c] sm:$0xf]
  %v64 = vld [vmem:[%s0 + $0x30] sm:$0xf]
  %v65 = vld [vmem:[%s0 + $0x34] sm:$0xf]
  %v66 = vld [vmem:[%s0 + $0x38] sm:$0xf]
  %v67 = vld [vmem:[%s0 + $0x3c] sm:$0xf]
  %v68 = vunpack.c.l.bf16 %v52
  %v69 = vunpack.c.l.bf16 %v53
  %v70 = vunpack.c.l.bf16 %v54
  %v71 = vunpack.c.l.bf16 %v55
  %v72 = vunpack.c.l.bf16 %v56
  %v73 = vunpack.c.l.bf16 %v57
  %v74 = vunpack.c.l.bf16 %v58
  %v75 = vunpack.c.l.bf16 %v59
  %v76 = vunpack.c.l.bf16 %v60
  %v77 = vunpack.c.l.bf16 %v61
  %v78 = vunpack.c.l.bf16 %v62
  %v79 = vunpack.c.l.bf16 %v63
  %v80 = vunpack.c.l.bf16 %v64
  %v81 = vunpack.c.l.bf16 %v65
  %v82 = vunpack.c.l.bf16 %v66
  %v83 = vunpack.c.l.bf16 %v67
  %v85 = vlaneseq
  %v86 = vshrl.u32 %v85, 7
  %v87 = vsub.s32 0, %v86
  %v88 = vrot.slane %v49, %v87
  %v90 = vmul.f32 %v68, %v88
  %v91 = vmul.f32 %v69, %v88
  %v92 = vmul.f32 %v70, %v88
  %v93 = vmul.f32 %v71, %v88
  %v94 = vmul.f32 %v72, %v88
  %v95 = vmul.f32 %v73, %v88
  %v96 = vmul.f32 %v74, %v88
  %v97 = vmul.f32 %v75, %v88
  %v98 = vmul.f32 %v76, %v88
  %v99 = vmul.f32 %v77, %v88
  %v100 = vmul.f32 %v78, %v88
  %v101 = vmul.f32 %v79, %v88
  %v102 = vmul.f32 %v80, %v88
  %v103 = vmul.f32 %v81, %v88
  %v104 = vmul.f32 %v82, %v88
  %v105 = vmul.f32 %v83, %v88
  %v107 = vlaneseq
  %v108 = vshrl.u32 %v107, 7
  %v109 = vsub.s32 0, %v108
  %v110 = vrot.slane %v51, %v109
  %v112 = vadd.f32 %v90, %v110
  %v113 = vadd.f32 %v91, %v110
  %v114 = vadd.f32 %v92, %v110
  %v115 = vadd.f32 %v93, %v110
  %v116 = vadd.f32 %v94, %v110
  %v117 = vadd.f32 %v95, %v110
  %v118 = vadd.f32 %v96, %v110
  %v119 = vadd.f32 %v97, %v110
  %v120 = vadd.f32 %v98, %v110
  %v121 = vadd.f32 %v99, %v110
  %v122 = vadd.f32 %v100, %v110
  %v123 = vadd.f32 %v101, %v110
  %v124 = vadd.f32 %v102, %v110
  %v125 = vadd.f32 %v103, %v110
  %v126 = vadd.f32 %v104, %v110
  %v127 = vadd.f32 %v105, %v110
  %v128 = vld [vmem:[%s4] sm:$0xff]
  %v129 = vld [vmem:[%s4 + $0x8] sm:$0xff]
  %v130 = vld [vmem:[%s4 + $0x10] sm:$0xff]
  %v131 = vld [vmem:[%s4 + $0x18] sm:$0xff]
  %v132 = vld [vmem:[%s4 + $0x20] sm:$0xff]
  %v133 = vld [vmem:[%s4 + $0x28] sm:$0xff]
  %v134 = vld [vmem:[%s4 + $0x30] sm:$0xff]
  %v135 = vld [vmem:[%s4 + $0x38] sm:$0xff]
  %v136 = vld [vmem:[%s4 + $0x40] sm:$0xff]
  %v137 = vld [vmem:[%s4 + $0x48] sm:$0xff]
  %v138 = vld [vmem:[%s4 + $0x50] sm:$0xff]
  %v139 = vld [vmem:[%s4 + $0x58] sm:$0xff]
  %v140 = vld [vmem:[%s4 + $0x60] sm:$0xff]
  %v141 = vld [vmem:[%s4 + $0x68] sm:$0xff]
  %v142 = vld [vmem:[%s4 + $0x70] sm:$0xff]
  %v143 = vld [vmem:[%s4 + $0x78] sm:$0xff]
  %v144 = vadd.f32 %v112, %v128
  %v145 = vadd.f32 %v113, %v129
  %v146 = vadd.f32 %v114, %v130
  %v147 = vadd.f32 %v115, %v131
  %v148 = vadd.f32 %v116, %v132
  %v149 = vadd.f32 %v117, %v133
  %v150 = vadd.f32 %v118, %v134
  %v151 = vadd.f32 %v119, %v135
  %v152 = vadd.f32 %v120, %v136
  %v153 = vadd.f32 %v121, %v137
  %v154 = vadd.f32 %v122, %v138
  %v155 = vadd.f32 %v123, %v139
  %v156 = vadd.f32 %v124, %v140
  %v157 = vadd.f32 %v125, %v141
  %v158 = vadd.f32 %v126, %v142
  %v159 = vadd.f32 %v127, %v143
  %v160 = vmax.f32 %v144, 0.0
  %v161 = vmax.f32 %v145, 0.0
  %v162 = vmax.f32 %v146, 0.0
  %v163 = vmax.f32 %v147, 0.0
  %v164 = vmax.f32 %v148, 0.0
  %v165 = vmax.f32 %v149, 0.0
  %v166 = vmax.f32 %v150, 0.0
  %v167 = vmax.f32 %v151, 0.0
  %v168 = vmax.f32 %v152, 0.0
  %v169 = vmax.f32 %v153, 0.0
  %v170 = vmax.f32 %v154, 0.0
  %v171 = vmax.f32 %v155, 0.0
  %v172 = vmax.f32 %v156, 0.0
  %v173 = vmax.f32 %v157, 0.0
  %v174 = vmax.f32 %v158, 0.0
  %v175 = vmax.f32 %v159, 0.0
  %176 = vst [vmem:[%s5] sm:$0xff] %v160
  %177 = vst [vmem:[%s5 + $0x8] sm:$0xff] %v161
  %178 = vst [vmem:[%s5 + $0x10] sm:$0xff] %v162
  %179 = vst [vmem:[%s5 + $0x18] sm:$0xff] %v163
  %180 = vst [vmem:[%s5 + $0x20] sm:$0xff] %v164
  %181 = vst [vmem:[%s5 + $0x28] sm:$0xff] %v165
  %182 = vst [vmem:[%s5 + $0x30] sm:$0xff] %v166
  %183 = vst [vmem:[%s5 + $0x38] sm:$0xff] %v167
  %184 = vst [vmem:[%s5 + $0x40] sm:$0xff] %v168
  %185 = vst [vmem:[%s5 + $0x48] sm:$0xff] %v169
  %186 = vst [vmem:[%s5 + $0x50] sm:$0xff] %v170
  %187 = vst [vmem:[%s5 + $0x58] sm:$0xff] %v171
  %188 = vst [vmem:[%s5 + $0x60] sm:$0xff] %v172
  %189 = vst [vmem:[%s5 + $0x68] sm:$0xff] %v173
  %190 = vst [vmem:[%s5 + $0x70] sm:$0xff] %v174
  %191 = vst [vmem:[%s5 + $0x78] sm:$0xff] %v175
  // Predicated region
  $region22: #{_bottleneck_forward.9} parent=0 // pred_check
    _
  $region23: #{_bottleneck_forward.9} parent=0 // pred_check_branch
    %193 = sbr.rel (0) target = $region25
  $region24: #{_bottleneck_forward.9} parent=0 // pred_region
    _
  $region25: #{_bottleneck_forward.9} parent=0 // pred_fallthru
    _
  // Predicated region
  $region26: #{_bottleneck_forward.9} parent=0 // pred_check
    _
  $region27: #{_bottleneck_forward.9} parent=0 // pred_check_branch
    %195 = sbr.rel (0) target = $region29
  $region28: #{_bottleneck_forward.9} parent=0 // pred_region
    _
  $region29: #{_bottleneck_forward.9} parent=0 // pred_fallthru
    _

// kernel: _bottleneck_forward.7
$region0: #{_bottleneck_forward.7}
  #allocation0 [shape = 'u32[]', space=smem, size = 0x4, offset = 0x4, fixed_abs, tag = 'smem constant byte address 0x4 - core index']
  #allocation1 [shape = 'u32[144,128]{1,0:T(1,128)}', space=vmem, size = 0x12000, scoped, tag = 'internal scratch']
  #allocation2 [shape = 'f32[64,128]{1,0:T(8,128)}', space=vmem, size = 0x8000, scoped, tag = 'scratch operand']
  %s0 = inlined_call_operand.vmem [shape: bf16[2,3,80,128], index: 0, kind: input, shape index: {}]
  %s1 = inlined_call_operand.vmem [shape: bf16[9,128,128], index: 1, kind: input, shape index: {}]
  %s2 = inlined_call_operand.vmem [shape: bf16[2,64,128], index: 2, kind: output, shape index: {0}]
  %s3 = inlined_call_operand.vmem [shape: f32[2,2,128], index: 3, kind: output, shape index: {1}]
  %4 = xla_tuple %s2, %s3
  %s5 = sld [smem:[#allocation0]]
  $region49: #{_bottleneck_forward.7} parent=0
    _
  %s7 = ssub.s32 1, %s5
  %s8 = scalar_select 0, %s7, %s5
  loop: start=0, step=1, limit=4
  $region2: #{_bottleneck_forward.7} parent=0 // loop_pre_header
    _
  $region3: #{_bottleneck_forward.7} parent=0 // loop_header
    %s10 = sphi 0, %s14
    %p11 = scmp.ge.s32.totalorder %s10, 4
    %s20 = sphi 0, %s22
    %s23 = sphi 0, %s20
    %s24 = sphi 0, %s23
    %s40 = sphi 0, %s24
    %s44 = sphi 0, %s44
    %s46 = sphi 0, %s44
    %s47 = sphi 0, %s46
    %s61 = sphi 0, %s47
    %s67 = sphi 0, %s69
    %s70 = sphi 0, %s67
    %s71 = sphi 0, %s70
    %s87 = sphi 0, %s71
    %s93 = sphi 0, %s95
    %s96 = sphi 0, %s93
    %s97 = sphi 0, %s96
    %s113 = sphi 0, %s97
  $region4: #{_bottleneck_forward.7} parent=0 // loop_header_branch
    %13 = sbr.rel (%p11) target = $region8
  $region5: #{_bottleneck_forward.7} parent=0 // loop_body
    %s15 = ssub.s32 %s10, 1
    %s16 = ssub.s32 %s10, 2
    %s17 = sadd.s32 %s10, 1
    %s18 = ssub.s32 %s10, %s17
    %p19 = scmp.eq.s32.totalorder %s18, 0
    %s21 = sadd.s32 %s20, 1
    %s22 = scalar_select %p19, %s20, %s21
    %p25 = pneg %p19
    %p26 = scmp.eq.s32.totalorder %s10, 1
    %p27 = por %p25, %p26
    %p28 = scmp.ne.s32.totalorder %s20, %s23
    %p29 = scmp.eq.s32.totalorder %s10, 0
    %p30 = por %p28, %p29
    %p31 = scmp.ne.s32.totalorder %s20, %s23
    %p32 = scmp.eq.s32.totalorder %s15, 1
    %p33 = por %p31, %p32
    %p34 = scmp.ne.s32.totalorder %s23, %s24
    %p35 = scmp.eq.s32.totalorder %s15, 0
    %p36 = por %p34, %p35
    %p37 = scmp.ne.s32.totalorder %s23, %s24
    %p38 = scmp.eq.s32.totalorder %s16, 1
    %p39 = por %p37, %p38
    %p41 = scmp.ne.s32.totalorder %s24, %s40
    %p42 = scmp.eq.s32.totalorder %s16, 0
    %p43 = por %p41, %p42
    %s45 = sadd.s32 %s44, 1
    %p48 = scmp.eq.s32.totalorder %s10, 1
    %p49 = scmp.ne.s32.totalorder %s44, %s46
    %p50 = scmp.eq.s32.totalorder %s10, 0
    %p51 = por %p49, %p50
    %p52 = scmp.ne.s32.totalorder %s44, %s46
    %p53 = scmp.eq.s32.totalorder %s15, 1
    %p54 = por %p52, %p53
    %p55 = scmp.ne.s32.totalorder %s46, %s47
    %p56 = scmp.eq.s32.totalorder %s15, 0
    %p57 = por %p55, %p56
    %p58 = scmp.ne.s32.totalorder %s46, %s47
    %p59 = scmp.eq.s32.totalorder %s16, 1
    %p60 = por %p58, %p59
    %p62 = scmp.ne.s32.totalorder %s47, %s61
    %p63 = scmp.eq.s32.totalorder %s16, 0
    %p64 = por %p62, %p63
    %s65 = ssub.s32 %s10, %s17
    %p66 = scmp.eq.s32.totalorder %s65, 0
    %s68 = sadd.s32 %s67, 1
    %s69 = scalar_select %p66, %s67, %s68
    %p72 = pneg %p66
    %p73 = scmp.eq.s32.totalorder %s10, 1
    %p74 = por %p72, %p73
    %p75 = scmp.ne.s32.totalorder %s67, %s70
    %p76 = scmp.eq.s32.totalorder %s10, 0
    %p77 = por %p75, %p76
    %p78 = scmp.ne.s32.totalorder %s67, %s70
    %p79 = scmp.eq.s32.totalorder %s15, 1
    %p80 = por %p78, %p79
    %p81 = scmp.ne.s32.totalorder %s70, %s71
    %p82 = scmp.eq.s32.totalorder %s15, 0
    %p83 = por %p81, %p82
    %p84 = scmp.ne.s32.totalorder %s70, %s71
    %p85 = scmp.eq.s32.totalorder %s16, 1
    %p86 = por %p84, %p85
    %p88 = scmp.ne.s32.totalorder %s71, %s87
    %p89 = scmp.eq.s32.totalorder %s16, 0
    %p90 = por %p88, %p89
    %s91 = ssub.s32 %s10, %s17
    %p92 = scmp.eq.s32.totalorder %s91, 0
    %s94 = sadd.s32 %s93, 1
    %s95 = scalar_select %p92, %s93, %s94
    %p98 = pneg %p92
    %p99 = scmp.eq.s32.totalorder %s10, 1
    %p100 = por %p98, %p99
    %p101 = scmp.ne.s32.totalorder %s93, %s96
    %p102 = scmp.eq.s32.totalorder %s10, 0
    %p103 = por %p101, %p102
    %p104 = scmp.ne.s32.totalorder %s93, %s96
    %p105 = scmp.eq.s32.totalorder %s15, 1
    %p106 = por %p104, %p105
    %p107 = scmp.ne.s32.totalorder %s96, %s97
    %p108 = scmp.eq.s32.totalorder %s15, 0
    %p109 = por %p107, %p108
    %p110 = scmp.ne.s32.totalorder %s96, %s97
    %p111 = scmp.eq.s32.totalorder %s16, 1
    %p112 = por %p110, %p111
    %p114 = scmp.ne.s32.totalorder %s97, %s113
    %p115 = scmp.eq.s32.totalorder %s16, 0
    %p116 = por %p114, %p115
    %p117 = scmp.le.s32.totalorder 1, %s10
    %p118 = scmp.lt.s32.totalorder %s10, 3
    %p119 = pnand %p117, %p118
    %p120 = pneg %p119
    // Predicated region
    $region9: #{_bottleneck_forward.7} parent=5 // pred_check
      _
    $region10: #{_bottleneck_forward.7} parent=5 // pred_check_branch
      %122 = sbr.rel (%p119) target = $region12
    $region11: #{_bottleneck_forward.7} parent=5 // pred_region
      %s123 = ssub.s32 %s10, 1
      // Predicated region
      $region13: #{_bottleneck_forward.7} parent=11 // pred_check
        %p124 = pneg %p57
      $region14: #{_bottleneck_forward.7} parent=11 // pred_check_branch
        %126 = sbr.rel (%p124) target = $region16
      $region15: #{_bottleneck_forward.7} parent=11 // pred_region
        _
      $region16: #{_bottleneck_forward.7} parent=11 // pred_fallthru
        _
    $region12: #{_bottleneck_forward.7} parent=5 // pred_fallthru
      _
    %p127 = scmp.lt.s32.totalorder %s10, 2
    // Predicated region
    $region17: #{_bottleneck_forward.7} parent=5 // pred_check
      %p128 = pneg %p127
    $region18: #{_bottleneck_forward.7} parent=5 // pred_check_branch
      %130 = sbr.rel (%p128) target = $region20
    $region19: #{_bottleneck_forward.7} parent=5 // pred_region
      // Predicated region
      $region21: #{_bottleneck_forward.7} parent=19 // pred_check
        %p131 = pneg %p30
      $region22: #{_bottleneck_forward.7} parent=19 // pred_check_branch
        %133 = sbr.rel (%p131) target = $region24
      $region23: #{_bottleneck_forward.7} parent=19 // pred_region
        %p134 = scmp.lt.s32.totalorder %s10, 1
        %s135 = scalar_select %p134, %s10, 1
        %s136 = smul.addr %s135, 30
        %s137 = smul.addr %s136, 4
        %s138 = scalar_lea.vmem %s0, %s137
      $region24: #{_bottleneck_forward.7} parent=19 // pred_fallthru
        _
    $region20: #{_bottleneck_forward.7} parent=5 // pred_fallthru
      _
    %p139 = scmp.le.s32.totalorder 1, %s10
    %p140 = scmp.lt.s32.totalorder %s10, 3
    %p141 = pnand %p139, %p140
    %p142 = pneg %p141
    // Predicated region
    $region25: #{_bottleneck_forward.7} parent=5 // pred_check
      _
    $region26: #{_bottleneck_forward.7} parent=5 // pred_check_branch
      %144 = sbr.rel (%p141) target = $region28
    $region27: #{_bottleneck_forward.7} parent=5 // pred_region
      %s145 = ssub.s32 %s10, 1
      %p146 = scmp.lt.s32.totalorder %s15, 1
      %s147 = scalar_select %p146, %s15, 1
      %s148 = smul.addr %s147, 30
      %s149 = smul.addr %s148, 4
      %s150 = scalar_lea.vmem %s0, %s149
      %p151 = pneg %p36
      %p152 = pneg %p33
      %p153 = pneg %p57
      %p154 = pneg %p54
      %p155 = pneg %p83
      %p156 = pneg %p80
      %p157 = scmp.lt.s32.totalorder %s15, 1
      %s158 = scalar_select %p157, %s15, 1
      %s159 = smul.addr %s158, 8
      %s160 = smul.addr %s159, 4
      %s161 = scalar_lea.vmem %s2, %s160
      %p162 = pneg %p109
      %p163 = pneg %p106
      %p164 = scmp.lt.s32.totalorder %s15, 1
      %s165 = scalar_select %p164, %s15, 1
      %s166 = smul.addr %s165, 2
      %s167 = scalar_lea.vmem %s3, %s166
      %p168 = scmp.lt.s32.totalorder %s15, 1
      %s169 = scalar_select %p168, %s15, 1
      %s170 = smul.addr %s169, 30
      %s171 = smul.addr %s170, 4
      %s172 = scalar_lea.vmem %s0, %s171
      %p173 = scmp.lt.s32.totalorder %s15, 1
      %s174 = scalar_select %p173, %s15, 1
      %s175 = smul.addr %s174, 8
      %s176 = smul.addr %s175, 4
      %s177 = scalar_lea.vmem %s2, %s176
      %p178 = scmp.lt.s32.totalorder %s15, 1
      %s179 = scalar_select %p178, %s15, 1
      %s180 = smul.addr %s179, 2
      %s181 = scalar_lea.vmem %s3, %s180
      %183 = vst [vmem:[#allocation2] sm:$0xff] 0.0
      %184 = vst [vmem:[#allocation2 + $0x8] sm:$0xff] 0.0
      %185 = vst [vmem:[#allocation2 + $0x10] sm:$0xff] 0.0
      %186 = vst [vmem:[#allocation2 + $0x18] sm:$0xff] 0.0
      %187 = vst [vmem:[#allocation2 + $0x20] sm:$0xff] 0.0
      %188 = vst [vmem:[#allocation2 + $0x28] sm:$0xff] 0.0
      %189 = vst [vmem:[#allocation2 + $0x30] sm:$0xff] 0.0
      %190 = vst [vmem:[#allocation2 + $0x38] sm:$0xff] 0.0
      %v191 = vld [vmem:[%s172] sm:$0xf]
      %v192 = vld [vmem:[%s172 + $0x4] sm:$0xf]
      %v193 = vld [vmem:[%s172 + $0x8] sm:$0xf]
      %v194 = vld [vmem:[%s172 + $0xc] sm:$0xf]
      %v195 = vld [vmem:[%s172 + $0x10] sm:$0xf]
      %v196 = vld [vmem:[%s172 + $0x14] sm:$0xf]
      %v197 = vld [vmem:[%s172 + $0x18] sm:$0xf]
      %v198 = vld [vmem:[%s172 + $0x1c] sm:$0xf]
      %v199 = vld [vmem:[#allocation2] sm:$0xff]
      %v200 = vld [vmem:[#allocation2 + $0x8] sm:$0xff]
      %v201 = vld [vmem:[#allocation2 + $0x10] sm:$0xff]
      %v202 = vld [vmem:[#allocation2 + $0x18] sm:$0xff]
      %v203 = vld [vmem:[#allocation2 + $0x20] sm:$0xff]
      %v204 = vld [vmem:[#allocation2 + $0x28] sm:$0xff]
      %v205 = vld [vmem:[#allocation2 + $0x30] sm:$0xff]
      %v206 = vld [vmem:[#allocation2 + $0x38] sm:$0xff]
      %v207 = vld [vmem:[%s1] sm:$0xf]
      %v208 = vld [vmem:[%s1 + $0x4] sm:$0xf]
      %v209 = vld [vmem:[%s1 + $0x8] sm:$0xf]
      %v210 = vld [vmem:[%s1 + $0xc] sm:$0xf]
      %v211 = vld [vmem:[%s1 + $0x10] sm:$0xf]
      %v212 = vld [vmem:[%s1 + $0x14] sm:$0xf]
      %v213 = vld [vmem:[%s1 + $0x18] sm:$0xf]
      %v214 = vld [vmem:[%s1 + $0x1c] sm:$0xf]
      %v215 = vld [vmem:[%s1 + $0x20] sm:$0xf]
      %v216 = vld [vmem:[%s1 + $0x24] sm:$0xf]
      %v217 = vld [vmem:[%s1 + $0x28] sm:$0xf]
      %v218 = vld [vmem:[%s1 + $0x2c] sm:$0xf]
      %v219 = vld [vmem:[%s1 + $0x30] sm:$0xf]
      %v220 = vld [vmem:[%s1 + $0x34] sm:$0xf]
      %v221 = vld [vmem:[%s1 + $0x38] sm:$0xf]
      %v222 = vld [vmem:[%s1 + $0x3c] sm:$0xf]
      %v231 = vunpack.c.l.b16 %v191
      %v232 = vunpack.c.l.b16 %v192
      %v233 = vunpack.c.l.b16 %v193
      %v234 = vunpack.c.l.b16 %v194
      %v235 = vunpack.c.l.b16 %v195
      %v236 = vunpack.c.l.b16 %v196
      %v237 = vunpack.c.l.b16 %v197
      %v238 = vunpack.c.l.b16 %v198
      %v239 = vpack.c.b16 %v232, %v231
      %v240 = vpack.c.b16 %v234, %v233
      %v241 = vpack.c.b16 %v236, %v235
      %v242 = vpack.c.b16 %v238, %v237
      %v263 = vunpack.c.l.b16 %v207
      %v264 = vunpack.c.l.b16 %v208
      %v265 = vunpack.c.l.b16 %v209
      %v266 = vunpack.c.l.b16 %v210
      %v267 = vunpack.c.l.b16 %v211
      %v268 = vunpack.c.l.b16 %v212
      %v269 = vunpack.c.l.b16 %v213
      %v270 = vunpack.c.l.b16 %v214
      %v271 = vunpack.c.l.b16 %v215
      %v272 = vunpack.c.l.b16 %v216
      %v273 = vunpack.c.l.b16 %v217
      %v274 = vunpack.c.l.b16 %v218
      %v275 = vunpack.c.l.b16 %v219
      %v276 = vunpack.c.l.b16 %v220
      %v277 = vunpack.c.l.b16 %v221
      %v278 = vunpack.c.l.b16 %v222
      %v279 = vpack.c.b16 %v264, %v263
      %v280 = vpack.c.b16 %v266, %v265
      %v281 = vpack.c.b16 %v268, %v267
      %v282 = vpack.c.b16 %v270, %v269
      %v283 = vpack.c.b16 %v272, %v271
      %v284 = vpack.c.b16 %v274, %v273
      %v285 = vpack.c.b16 %v276, %v275
      %v286 = vpack.c.b16 %v278, %v277
      %295 = vmatprep.subr.bf16.mxu0 0
      %296 = vmatpush1.bf16.msra.mxu0 %v286
      %297 = vmatprep.subr.bf16.mxu0 0
      %298 = vmatpush1.bf16.msra.mxu0 %v285
      %299 = vmatprep.subr.bf16.mxu0 0
      %300 = vmatpush1.bf16.msra.mxu0 %v284
      %301 = vmatprep.subr.bf16.mxu0 0
      %302 = vmatpush1.bf16.msra.mxu0 %v283
      %303 = vmatprep.subr.bf16.mxu0 0
      %304 = vmatpush1.bf16.msra.mxu0 %v282
      %305 = vmatprep.subr.bf16.mxu0 0
      %306 = vmatpush1.bf16.msra.mxu0 %v281
      %307 = vmatprep.subr.bf16.mxu0 0
      %308 = vmatpush1.bf16.msra.mxu0 %v280
      %309 = vmatprep.subr.bf16.mxu0 0
      %310 = vmatpush1.bf16.msra.mxu0 %v279
      %311 = vmatprep.subr.bf16.mxu0 0
      %312 = vmatpush2.bf16.msra.mxu0 0
      %313 = vmatprep.subr.bf16.mxu0 0
      %314 = vmatpush2.bf16.msra.mxu0 0
      %315 = vmatprep.subr.bf16.mxu0 0
      %316 = vmatpush2.bf16.msra.mxu0 0
      %317 = vmatprep.subr.bf16.mxu0 0
      %318 = vmatpush2.bf16.msra.mxu0 0
      %319 = vmatprep.subr.bf16.mxu0 0
      %320 = vmatpush2.bf16.msra.mxu0 0
      %321 = vmatprep.subr.bf16.mxu0 0
      %322 = vmatpush2.bf16.msra.mxu0 0
      %323 = vmatprep.subr.bf16.mxu0 0
      %324 = vmatpush2.bf16.msra.mxu0 0
      %325 = vmatprep.subr.bf16.mxu0 0
      %326 = vmatpush2.bf16.msra.mxu0 0
      %327 = vmatprep.mubr.bf16.mxu0 0
      %328 = vmatmul.mubr.bf16.gmra.mxu0 %v239
      %v329 = vpop.f32.mrf.mxu0
      %v330 = vadd.f32 0.0, %v329
      %v331 = vpop.f32.mrf.mxu0
      %v332 = vpop.f32.mrf.mxu0
      %v333 = vadd.f32 0.0, %v332
      %v334 = vpop.f32.mrf.mxu0
      %335 = vmatprep.mubr.bf16.mxu0 0
      %336 = vmatmul.mubr.bf16.gmra.mxu0 %v240
      %v337 = vpop.f32.mrf.mxu0
      %v338 = vadd.f32 0.0, %v337
      %v339 = vpop.f32.mrf.mxu0
      %v340 = vpop.f32.mrf.mxu0
      %v341 = vadd.f32 0.0, %v340
      %v342 = vpop.f32.mrf.mxu0
      %343 = vmatprep.mubr.bf16.mxu0 0
      %344 = vmatmul.mubr.bf16.gmra.mxu0 %v241
      %v345 = vpop.f32.mrf.mxu0
      %v346 = vadd.f32 0.0, %v345
      %v347 = vpop.f32.mrf.mxu0
      %v348 = vpop.f32.mrf.mxu0
      %v349 = vadd.f32 0.0, %v348
      %v350 = vpop.f32.mrf.mxu0
      %351 = vmatprep.mubr.bf16.mxu0 0
      %352 = vmatmul.mubr.bf16.gmra.mxu0 %v242
      %v353 = vpop.f32.mrf.mxu0
      %v354 = vadd.f32 0.0, %v353
      %v355 = vpop.f32.mrf.mxu0
      %v356 = vpop.f32.mrf.mxu0
      %v357 = vadd.f32 0.0, %v356
      %v358 = vpop.f32.mrf.mxu0
      %359 = vdwg.mxu0
      %v360 = vadd.f32 %v199, %v330
      %v361 = vadd.f32 %v200, %v333
      %v362 = vadd.f32 %v201, %v338
      %v363 = vadd.f32 %v202, %v341
      %v364 = vadd.f32 %v203, %v346
      %v365 = vadd.f32 %v204, %v349
      %v366 = vadd.f32 %v205, %v354
      %v367 = vadd.f32 %v206, %v357
      %368 = vst [vmem:[#allocation2] sm:$0xff] %v360
      %369 = vst [vmem:[#allocation2 + $0x8] sm:$0xff] %v361
      %370 = vst [vmem:[#allocation2 + $0x10] sm:$0xff] %v362
      %371 = vst [vmem:[#allocation2 + $0x18] sm:$0xff] %v363
      %372 = vst [vmem:[#allocation2 + $0x20] sm:$0xff] %v364
      %373 = vst [vmem:[#allocation2 + $0x28] sm:$0xff] %v365
      %374 = vst [vmem:[#allocation2 + $0x30] sm:$0xff] %v366
      %375 = vst [vmem:[#allocation2 + $0x38] sm:$0xff] %v367
      %s376 = scalar_lea.vmem %s172, 40
      %v377 = vld [vmem:[%s376] sm:$0xf]
      %v378 = vld [vmem:[%s376 + $0x4] sm:$0xf]
      %v379 = vld [vmem:[%s376 + $0x8] sm:$0xf]
      %v380 = vld [vmem:[%s376 + $0xc] sm:$0xf]
      %v381 = vld [vmem:[%s376 + $0x10] sm:$0xf]
      %v382 = vld [vmem:[%s376 + $0x14] sm:$0xf]
      %v383 = vld [vmem:[%s376 + $0x18] sm:$0xf]
      %v384 = vld [vmem:[%s376 + $0x1c] sm:$0xf]
      %v385 = vld [vmem:[#allocation2] sm:$0xff]
      %v386 = vld [vmem:[#allocation2 + $0x8] sm:$0xff]
      %v387 = vld [vmem:[#allocation2 + $0x10] sm:$0xff]
      %v388 = vld [vmem:[#allocation2 + $0x18] sm:$0xff]
      %v389 = vld [vmem:[#allocation2 + $0x20] sm:$0xff]
      %v390 = vld [vmem:[#allocation2 + $0x28] sm:$0xff]
      %v391 = vld [vmem:[#allocation2 + $0x30] sm:$0xff]
      %v392 = vld [vmem:[#allocation2 + $0x38] sm:$0xff]
      %s393 = scalar_lea.vmem %s1, 64
      %v394 = vld [vmem:[%s393] sm:$0xf]
      %v395 = vld [vmem:[%s393 + $0x4] sm:$0xf]
      %v396 = vld [vmem:[%s393 + $0x8] sm:$0xf]
      %v397 = vld [vmem:[%s393 + $0xc] sm:$0xf]
      %v398 = vld [vmem:[%s393 + $0x10] sm:$0xf]
      %v399 = vld [vmem:[%s393 + $0x14] sm:$0xf]
      %v400 = vld [vmem:[%s393 + $0x18] sm:$0xf]
      %v401 = vld [vmem:[%s393 + $0x1c] sm:$0xf]
      %v402 = vld [vmem:[%s393 + $0x20] sm:$0xf]
      %v403 = vld [vmem:[%s393 + $0x24] sm:$0xf]
      %v404 = vld [vmem:[%s393 + $0x28] sm:$0xf]
      %v405 = vld [vmem:[%s393 + $0x2c] sm:$0xf]
      %v406 = vld [vmem:[%s393 + $0x30] sm:$0xf]
      %v407 = vld [vmem:[%s393 + $0x34] sm:$0xf]
      %v408 = vld [vmem:[%s393 + $0x38] sm:$0xf]
      %v409 = vld [vmem:[%s393 + $0x3c] sm:$0xf]
      %v418 = vunpack.c.l.b16 %v377
      %v419 = vunpack.c.l.b16 %v378
      %v420 = vunpack.c.l.b16 %v379
      %v421 = vunpack.c.l.b16 %v380
      %v422 = vunpack.c.l.b16 %v381
      %v423 = vunpack.c.l.b16 %v382
      %v424 = vunpack.c.l.b16 %v383
      %v425 = vunpack.c.l.b16 %v384
      %v426 = vpack.c.b16 %v419, %v418
      %v427 = vpack.c.b16 %v421, %v420
      %v428 = vpack.c.b16 %v423, %v422
      %v429 = vpack.c.b16 %v425, %v424
      %v450 = vunpack.c.l.b16 %v394
      %v451 = vunpack.c.l.b16 %v395
      %v452 = vunpack.c.l.b16 %v396
      %v453 = vunpack.c.l.b16 %v397
      %v454 = vunpack.c.l.b16 %v398
      %v455 = vunpack.c.l.b16 %v399
      %v456 = vunpack.c.l.b16 %v400
      %v457 = vunpack.c.l.b16 %v401
      %v458 = vunpack.c.l.b16 %v402
      %v459 = vunpack.c.l.b16 %v403
      %v460 = vunpack.c.l.b16 %v404
      %v461 = vunpack.c.l.b16 %v405
      %v462 = vunpack.c.l.b16 %v406
      %v463 = vunpack.c.l.b16 %v407
      %v464 = vunpack.c.l.b16 %v408
      %v465 = vunpack.c.l.b16 %v409
      %v466 = vpack.c.b16 %v451, %v450
      %v467 = vpack.c.b16 %v453, %v452
      %v468 = vpack.c.b16 %v455, %v454
      %v469 = vpack.c.b16 %v457, %v456
      %v470 = vpack.c.b16 %v459, %v458
      %v471 = vpack.c.b16 %v461, %v460
      %v472 = vpack.c.b16 %v463, %v462
      %v473 = vpack.c.b16 %v465, %v464
      %482 = vmatprep.subr.bf16.mxu0 0
      %483 = vmatpush1.bf16.msra.mxu0 %v473
      %484 = vmatprep.subr.bf16.mxu0 0
      %485 = vmatpush1.bf16.msra.mxu0 %v472
      %486 = vmatprep.subr.bf16.mxu0 0
      %487 = vmatpush1.bf16.msra.mxu0 %v471
      %488 = vmatprep.subr.bf16.mxu0 0
      %489 = vmatpush1.bf16.msra.mxu0 %v470
      %490 = vmatprep.subr.bf16.mxu0 0
      %491 = vmatpush1.bf16.msra.mxu0 %v469
      %492 = vmatprep.subr.bf16.mxu0 0
      %493 = vmatpush1.bf16.msra.mxu0 %v468
      %494 = vmatprep.subr.bf16.mxu0 0
      %495 = vmatpush1.bf16.msra.mxu0 %v467
      %496 = vmatprep.subr.bf16.mxu0 0
      %497 = vmatpush1.bf16.msra.mxu0 %v466
      %498 = vmatprep.subr.bf16.mxu0 0
      %499 = vmatpush2.bf16.msra.mxu0 0
      %500 = vmatprep.subr.bf16.mxu0 0
      %501 = vmatpush2.bf16.msra.mxu0 0
      %502 = vmatprep.subr.bf16.mxu0 0
      %503 = vmatpush2.bf16.msra.mxu0 0
      %504 = vmatprep.subr.bf16.mxu0 0
      %505 = vmatpush2.bf16.msra.mxu0 0
      %506 = vmatprep.subr.bf16.mxu0 0
      %507 = vmatpush2.bf16.msra.mxu0 0
      %508 = vmatprep.subr.bf16.mxu0 0
      %509 = vmatpush2.bf16.msra.mxu0 0
      %510 = vmatprep.subr.bf16.mxu0 0
      %511 = vmatpush2.bf16.msra.mxu0 0
      %512 = vmatprep.subr.bf16.mxu0 0
      %513 = vmatpush2.bf16.msra.mxu0 0
      %514 = vmatprep.mubr.bf16.mxu0 0
      %515 = vmatmul.mubr.bf16.gmra.mxu0 %v426
      %v516 = vpop.f32.mrf.mxu0
      %v517 = vadd.f32 0.0, %v516
      %v518 = vpop.f32.mrf.mxu0
      %v519 = vpop.f32.mrf.mxu0
      %v520 = vadd.f32 0.0, %v519
      %v521 = vpop.f32.mrf.mxu0
      %522 = vmatprep.mubr.bf16.mxu0 0
      %523 = vmatmul.mubr.bf16.gmra.mxu0 %v427
      %v524 = vpop.f32.mrf.mxu0
      %v525 = vadd.f32 0.0, %v524
      %v526 = vpop.f32.mrf.mxu0
      %v527 = vpop.f32.mrf.mxu0
      %v528 = vadd.f32 0.0, %v527
      %v529 = vpop.f32.mrf.mxu0
      %530 = vmatprep.mubr.bf16.mxu0 0
      %531 = vmatmul.mubr.bf16.gmra.mxu0 %v428
      %v532 = vpop.f32.mrf.mxu0
      %v533 = vadd.f32 0.0, %v532
      %v534 = vpop.f32.mrf.mxu0
      %v535 = vpop.f32.mrf.mxu0
      %v536 = vadd.f32 0.0, %v535
      %v537 = vpop.f32.mrf.mxu0
      %538 = vmatprep.mubr.bf16.mxu0 0
      %539 = vmatmul.mubr.bf16.gmra.mxu0 %v429
      %v540 = vpop.f32.mrf.mxu0
      %v541 = vadd.f32 0.0, %v540
      %v542 = vpop.f32.mrf.mxu0
      %v543 = vpop.f32.mrf.mxu0
      %v544 = vadd.f32 0.0, %v543
      %v545 = vpop.f32.mrf.mxu0
      %546 = vdwg.mxu0
      %v547 = vadd.f32 %v385, %v517
      %v548 = vadd.f32 %v386, %v520
      %v549 = vadd.f32 %v387, %v525
      %v550 = vadd.f32 %v388, %v528
      %v551 = vadd.f32 %v389, %v533
      %v552 = vadd.f32 %v390, %v536
      %v553 = vadd.f32 %v391, %v541
      %v554 = vadd.f32 %v392, %v544
      %555 = vst [vmem:[#allocation2] sm:$0xff] %v547
      %556 = vst [vmem:[#allocation2 + $0x8] sm:$0xff] %v548
      %557 = vst [vmem:[#allocation2 + $0x10] sm:$0xff] %v549
      %558 = vst [vmem:[#allocation2 + $0x18] sm:$0xff] %v550
      %559 = vst [vmem:[#allocation2 + $0x20] sm:$0xff] %v551
      %560 = vst [vmem:[#allocation2 + $0x28] sm:$0xff] %v552
      %561 = vst [vmem:[#allocation2 + $0x30] sm:$0xff] %v553
      %562 = vst [vmem:[#allocation2 + $0x38] sm:$0xff] %v554
      %s563 = scalar_lea.vmem %s172, 80
      %v564 = vld [vmem:[%s563] sm:$0xf]
      %v565 = vld [vmem:[%s563 + $0x4] sm:$0xf]
      %v566 = vld [vmem:[%s563 + $0x8] sm:$0xf]
      %v567 = vld [vmem:[%s563 + $0xc] sm:$0xf]
      %v568 = vld [vmem:[%s563 + $0x10] sm:$0xf]
      %v569 = vld [vmem:[%s563 + $0x14] sm:$0xf]
      %v570 = vld [vmem:[%s563 + $0x18] sm:$0xf]
      %v571 = vld [vmem:[%s563 + $0x1c] sm:$0xf]
      %v572 = vld [vmem:[#allocation2] sm:$0xff]
      %v573 = vld [vmem:[#allocation2 + $0x8] sm:$0xff]
      %v574 = vld [vmem:[#allocation2 + $0x10] sm:$0xff]
      %v575 = vld [vmem:[#allocation2 + $0x18] sm:$0xff]
      %v576 = vld [vmem:[#allocation2 + $0x20] sm:$0xff]
      %v577 = vld [vmem:[#allocation2 + $0x28] sm:$0xff]
      %v578 = vld [vmem:[#allocation2 + $0x30] sm:$0xff]
      %v579 = vld [vmem:[#allocation2 + $0x38] sm:$0xff]
      %s580 = scalar_lea.vmem %s1, 128
      %v581 = vld [vmem:[%s580] sm:$0xf]
      %v582 = vld [vmem:[%s580 + $0x4] sm:$0xf]
      %v583 = vld [vmem:[%s580 + $0x8] sm:$0xf]
      %v584 = vld [vmem:[%s580 + $0xc] sm:$0xf]
      %v585 = vld [vmem:[%s580 + $0x10] sm:$0xf]
      %v586 = vld [vmem:[%s580 + $0x14] sm:$0xf]
      %v587 = vld [vmem:[%s580 + $0x18] sm:$0xf]
      %v588 = vld [vmem:[%s580 + $0x1c] sm:$0xf]
      %v589 = vld [vmem:[%s580 + $0x20] sm:$0xf]
      %v590 = vld [vmem:[%s580 + $0x24] sm:$0xf]
      %v591 = vld [vmem:[%s580 + $0x28] sm:$0xf]
      %v592 = vld [vmem:[%s580 + $0x2c] sm:$0xf]
      %v593 = vld [vmem:[%s580 + $0x30] sm:$0xf]
      %v594 = vld [vmem:[%s580 + $0x34] sm:$0xf]
      %v595 = vld [vmem:[%s580 + $0x38] sm:$0xf]
      %v596 = vld [vmem:[%s580 + $0x3c] sm:$0xf]
      %v605 = vunpack.c.l.b16 %v564
      %v606 = vunpack.c.l.b16 %v565
      %v607 = vunpack.c.l.b16 %v566
      %v608 = vunpack.c.l.b16 %v567
      %v609 = vunpack.c.l.b16 %v568
      %v610 = vunpack.c.l.b16 %v569
      %v611 = vunpack.c.l.b16 %v570
      %v612 = vunpack.c.l.b16 %v571
      %v613 = vpack.c.b16 %v606, %v605
      %v614 = vpack.c.b16 %v608, %v607
      %v615 = vpack.c.b16 %v610, %v609
      %v616 = vpack.c.b16 %v612, %v611
      %v637 = vunpack.c.l.b16 %v581
      %v638 = vunpack.c.l.b16 %v582
      %v639 = vunpack.c.l.b16 %v583
      %v640 = vunpack.c.l.b16 %v584
      %v641 = vunpack.c.l.b16 %v585
      %v642 = vunpack.c.l.b16 %v586
      %v643 = vunpack.c.l.b16 %v587
      %v644 = vunpack.c.l.b16 %v588
      %v645 = vunpack.c.l.b16 %v589
      %v646 = vunpack.c.l.b16 %v590
      %v647 = vunpack.c.l.b16 %v591
      %v648 = vunpack.c.l.b16 %v592
      %v649 = vunpack.c.l.b16 %v593
      %v650 = vunpack.c.l.b16 %v594
      %v651 = vunpack.c.l.b16 %v595
      %v652 = vunpack.c.l.b16 %v596
      %v653 = vpack.c.b16 %v638, %v637
      %v654 = vpack.c.b16 %v640, %v639
      %v655 = vpack.c.b16 %v642, %v641
      %v656 = vpack.c.b16 %v644, %v643
      %v657 = vpack.c.b16 %v646, %v645
      %v658 = vpack.c.b16 %v648, %v647
      %v659 = vpack.c.b16 %v650, %v649
      %v660 = vpack.c.b16 %v652, %v651
      %669 = vmatprep.subr.bf16.mxu0 0
      %670 = vmatpush1.bf16.msra.mxu0 %v660
      %671 = vmatprep.subr.bf16.mxu0 0
      %672 = vmatpush1.bf16.msra.mxu0 %v659
      %673 = vmatprep.subr.bf16.mxu0 0
      %674 = vmatpush1.bf16.msra.mxu0 %v658
      %675 = vmatprep.subr.bf16.mxu0 0
      %676 = vmatpush1.bf16.msra.mxu0 %v657
      %677 = vmatprep.subr.bf16.mxu0 0
      %678 = vmatpush1.bf16.msra.mxu0 %v656
      %679 = vmatprep.subr.bf16.mxu0 0
      %680 = vmatpush1.bf16.msra.mxu0 %v655
      %681 = vmatprep.subr.bf16.mxu0 0
      %682 = vmatpush1.bf16.msra.mxu0 %v654
      %683 = vmatprep.subr.bf16.mxu0 0
      %684 = vmatpush1.bf16.msra.mxu0 %v653
      %685 = vmatprep.subr.bf16.mxu0 0
      %686 = vmatpush2.bf16.msra.mxu0 0
      %687 = vmatprep.subr.bf16.mxu0 0
      %688 = vmatpush2.bf16.msra.mxu0 0
      %689 = vmatprep.subr.bf16.mxu0 0
      %690 = vmatpush2.bf16.msra.mxu0 0
      %691 = vmatprep.subr.bf16.mxu0 0
      %692 = vmatpush2.bf16.msra.mxu0 0
      %693 = vmatprep.subr.bf16.mxu0 0
      %694 = vmatpush2.bf16.msra.mxu0 0
      %695 = vmatprep.subr.bf16.mxu0 0
      %696 = vmatpush2.bf16.msra.mxu0 0
      %697 = vmatprep.subr.bf16.mxu0 0
      %698 = vmatpush2.bf16.msra.mxu0 0
      %699 = vmatprep.subr.bf16.mxu0 0
      %700 = vmatpush2.bf16.msra.mxu0 0
      %701 = vmatprep.mubr.bf16.mxu0 0
      %702 = vmatmul.mubr.bf16.gmra.mxu0 %v613
      %v703 = vpop.f32.mrf.mxu0
      %v704 = vadd.f32 0.0, %v703
      %v705 = vpop.f32.mrf.mxu0
      %v706 = vpop.f32.mrf.mxu0
      %v707 = vadd.f32 0.0, %v706
      %v708 = vpop.f32.mrf.mxu0
      %709 = vmatprep.mubr.bf16.mxu0 0
      %710 = vmatmul.mubr.bf16.gmra.mxu0 %v614
      %v711 = vpop.f32.mrf.mxu0
      %v712 = vadd.f32 0.0, %v711
      %v713 = vpop.f32.mrf.mxu0
      %v714 = vpop.f32.mrf.mxu0
      %v715 = vadd.f32 0.0, %v714
      %v716 = vpop.f32.mrf.mxu0
      %717 = vmatprep.mubr.bf16.mxu0 0
      %718 = vmatmul.mubr.bf16.gmra.mxu0 %v615
      %v719 = vpop.f32.mrf.mxu0
      %v720 = vadd.f32 0.0, %v719
      %v721 = vpop.f32.mrf.mxu0
      %v722 = vpop.f32.mrf.mxu0
      %v723 = vadd.f32 0.0, %v722
      %v724 = vpop.f32.mrf.mxu0
      %725 = vmatprep.mubr.bf16.mxu0 0
      %726 = vmatmul.mubr.bf16.gmra.mxu0 %v616
      %v727 = vpop.f32.mrf.mxu0
      %v728 = vadd.f32 0.0, %v727
      %v729 = vpop.f32.mrf.mxu0
      %v730 = vpop.f32.mrf.mxu0
      %v731 = vadd.f32 0.0, %v730
      %v732 = vpop.f32.mrf.mxu0
      %733 = vdwg.mxu0
      %v734 = vadd.f32 %v572, %v704
      %v735 = vadd.f32 %v573, %v707
      %v736 = vadd.f32 %v574, %v712
      %v737 = vadd.f32 %v575, %v715
      %v738 = vadd.f32 %v576, %v720
      %v739 = vadd.f32 %v577, %v723
      %v740 = vadd.f32 %v578, %v728
      %v741 = vadd.f32 %v579, %v731
      %742 = vst [vmem:[#allocation2] sm:$0xff] %v734
      %743 = vst [vmem:[#allocation2 + $0x8] sm:$0xff] %v735
      %744 = vst [vmem:[#allocation2 + $0x10] sm:$0xff] %v736
      %745 = vst [vmem:[#allocation2 + $0x18] sm:$0xff] %v737
      %746 = vst [vmem:[#allocation2 + $0x20] sm:$0xff] %v738
      %747 = vst [vmem:[#allocation2 + $0x28] sm:$0xff] %v739
      %748 = vst [vmem:[#allocation2 + $0x30] sm:$0xff] %v740
      %749 = vst [vmem:[#allocation2 + $0x38] sm:$0xff] %v741
      %v750 = vld [vmem:[%s172 + $0x4] sm:$0xf]
      %v751 = vld [vmem:[%s172 + $0x8] sm:$0xf]
      %v752 = vld [vmem:[%s172 + $0xc] sm:$0xf]
      %v753 = vld [vmem:[%s172 + $0x10] sm:$0xf]
      %v754 = vld [vmem:[%s172 + $0x14] sm:$0xf]
      %v755 = vld [vmem:[%s172 + $0x18] sm:$0xf]
      %v756 = vld [vmem:[%s172 + $0x1c] sm:$0xf]
      %v757 = vld [vmem:[%s172 + $0x20] sm:$0xf]
      %v758 = vld [vmem:[#allocation2] sm:$0xff]
      %v759 = vld [vmem:[#allocation2 + $0x8] sm:$0xff]
      %v760 = vld [vmem:[#allocation2 + $0x10] sm:$0xff]
      %v761 = vld [vmem:[#allocation2 + $0x18] sm:$0xff]
      %v762 = vld [vmem:[#allocation2 + $0x20] sm:$0xff]
      %v763 = vld [vmem:[#allocation2 + $0x28] sm:$0xff]
      %v764 = vld [vmem:[#allocation2 + $0x30] sm:$0xff]
      %v765 = vld [vmem:[#allocation2 + $0x38] sm:$0xff]
      %s766 = scalar_lea.vmem %s1, 192
      %v767 = vld [vmem:[%s766] sm:$0xf]
      %v768 = vld [vmem:[%s766 + $0x4] sm:$0xf]
      %v769 = vld [vmem:[%s766 + $0x8] sm:$0xf]
      %v770 = vld [vmem:[%s766 + $0xc] sm:$0xf]
      %v771 = vld [vmem:[%s766 + $0x10] sm:$0xf]
      %v772 = vld [vmem:[%s766 + $0x14] sm:$0xf]
      %v773 = vld [vmem:[%s766 + $0x18] sm:$0xf]
      %v774 = vld [vmem:[%s766 + $0x1c] sm:$0xf]
      %v775 = vld [vmem:[%s766 + $0x20] sm:$0xf]
      %v776 = vld [vmem:[%s766 + $0x24] sm:$0xf]
      %v777 = vld [vmem:[%s766 + $0x28] sm:$0xf]
      %v778 = vld [vmem:[%s766 + $0x2c] sm:$0xf]
      %v779 = vld [vmem:[%s766 + $0x30] sm:$0xf]
      %v780 = vld [vmem:[%s766 + $0x34] sm:$0xf]
      %v781 = vld [vmem:[%s766 + $0x38] sm:$0xf]
      %v782 = vld [vmem:[%s766 + $0x3c] sm:$0xf]
      %v791 = vunpack.c.l.b16 %v750
      %v792 = vunpack.c.l.b16 %v751
      %v793 = vunpack.c.l.b16 %v752
      %v794 = vunpack.c.l.b16 %v753
      %v795 = vunpack.c.l.b16 %v754
      %v796 = vunpack.c.l.b16 %v755
      %v797 = vunpack.c.l.b16 %v756
      %v798 = vunpack.c.l.b16 %v757
      %v799 = vpack.c.b16 %v792, %v791
      %v800 = vpack.c.b16 %v794, %v793
      %v801 = vpack.c.b16 %v796, %v795
      %v802 = vpack.c.b16 %v798, %v797
      %v823 = vunpack.c.l.b16 %v767
      %v824 = vunpack.c.l.b16 %v768
      %v825 = vunpack.c.l.b16 %v769
      %v826 = vunpack.c.l.b16 %v770
      %v827 = vunpack.c.l.b16 %v771
      %v828 = vunpack.c.l.b16 %v772
      %v829 = vunpack.c.l.b16 %v773
      %v830 = vunpack.c.l.b16 %v774
      %v831 = vunpack.c.l.b16 %v775
      %v832 = vunpack.c.l.b16 %v776
      %v833 = vunpack.c.l.b16 %v777
      %v834 = vunpack.c.l.b16 %v778
      %v835 = vunpack.c.l.b16 %v779
      %v836 = vunpack.c.l.b16 %v780
      %v837 = vunpack.c.l.b16 %v781
      %v838 = vunpack.c.l.b16 %v782
      %v839 = vpack.c.b16 %v824, %v823
      %v840 = vpack.c.b16 %v826, %v825
      %v841 = vpack.c.b16 %v828, %v827
      %v842 = vpack.c.b16 %v830, %v829
      %v843 = vpack.c.b16 %v832, %v831
      %v844 = vpack.c.b16 %v834, %v833
      %v845 = vpack.c.b16 %v836, %v835
      %v846 = vpack.c.b16 %v838, %v837
      %855 = vmatprep.subr.bf16.mxu0 0
      %856 = vmatpush1.bf16.msra.mxu0 %v846
      %857 = vmatprep.subr.bf16.mxu0 0
      %858 = vmatpush1.bf16.msra.mxu0 %v845
      %859 = vmatprep.subr.bf16.mxu0 0
      %860 = vmatpush1.bf16.msra.mxu0 %v844
      %861 = vmatprep.subr.bf16.mxu0 0
      %862 = vmatpush1.bf16.msra.mxu0 %v843
      %863 = vmatprep.subr.bf16.mxu0 0
      %864 = vmatpush1.bf16.msra.mxu0 %v842
      %865 = vmatprep.subr.bf16.mxu0 0
      %866 = vmatpush1.bf16.msra.mxu0 %v841
      %867 = vmatprep.subr.bf16.mxu0 0
      %868 = vmatpush1.bf16.msra.mxu0 %v840
      %869 = vmatprep.subr.bf16.mxu0 0
      %870 = vmatpush1.bf16.msra.mxu0 %v839
      %871 = vmatprep.subr.bf16.mxu0 0
      %872 = vmatpush2.bf16.msra.mxu0 0
      %873 = vmatprep.subr.bf16.mxu0 0
      %874 = vmatpush2.bf16.msra.mxu0 0
      %875 = vmatprep.subr.bf16.mxu0 0
      %876 = vmatpush2.bf16.msra.mxu0 0
      %877 = vmatprep.subr.bf16.mxu0 0
      %878 = vmatpush2.bf16.msra.mxu0 0
      %879 = vmatprep.subr.bf16.mxu0 0
      %880 = vmatpush2.bf16.msra.mxu0 0
      %881 = vmatprep.subr.bf16.mxu0 0
      %882 = vmatpush2.bf16.msra.mxu0 0
      %883 = vmatprep.subr.bf16.mxu0 0
      %884 = vmatpush2.bf16.msra.mxu0 0
      %885 = vmatprep.subr.bf16.mxu0 0
      %886 = vmatpush2.bf16.msra.mxu0 0
      %887 = vmatprep.mubr.bf16.mxu0 0
      %888 = vmatmul.mubr.bf16.gmra.mxu0 %v799
      %v889 = vpop.f32.mrf.mxu0
      %v890 = vadd.f32 0.0, %v889
      %v891 = vpop.f32.mrf.mxu0
      %v892 = vpop.f32.mrf.mxu0
      %v893 = vadd.f32 0.0, %v892
      %v894 = vpop.f32.mrf.mxu0
      %895 = vmatprep.mubr.bf16.mxu0 0
      %896 = vmatmul.mubr.bf16.gmra.mxu0 %v800
      %v897 = vpop.f32.mrf.mxu0
      %v898 = vadd.f32 0.0, %v897
      %v899 = vpop.f32.mrf.mxu0
      %v900 = vpop.f32.mrf.mxu0
      %v901 = vadd.f32 0.0, %v900
      %v902 = vpop.f32.mrf.mxu0
      %903 = vmatprep.mubr.bf16.mxu0 0
      %904 = vmatmul.mubr.bf16.gmra.mxu0 %v801
      %v905 = vpop.f32.mrf.mxu0
      %v906 = vadd.f32 0.0, %v905
      %v907 = vpop.f32.mrf.mxu0
      %v908 = vpop.f32.mrf.mxu0
      %v909 = vadd.f32 0.0, %v908
      %v910 = vpop.f32.mrf.mxu0
      %911 = vmatprep.mubr.bf16.mxu0 0
      %912 = vmatmul.mubr.bf16.gmra.mxu0 %v802
      %v913 = vpop.f32.mrf.mxu0
      %v914 = vadd.f32 0.0, %v913
      %v915 = vpop.f32.mrf.mxu0
      %v916 = vpop.f32.mrf.mxu0
      %v917 = vadd.f32 0.0, %v916
      %v918 = vpop.f32.mrf.mxu0
      %919 = vdwg.mxu0
      %v920 = vadd.f32 %v758, %v890
      %v921 = vadd.f32 %v759, %v893
      %v922 = vadd.f32 %v760, %v898
      %v923 = vadd.f32 %v761, %v901
      %v924 = vadd.f32 %v762, %v906
      %v925 = vadd.f32 %v763, %v909
      %v926 = vadd.f32 %v764, %v914
      %v927 = vadd.f32 %v765, %v917
      %928 = vst [vmem:[#allocation2] sm:$0xff] %v920
      %929 = vst [vmem:[#allocation2 + $0x8] sm:$0xff] %v921
      %930 = vst [vmem:[#allocation2 + $0x10] sm:$0xff] %v922
      %931 = vst [vmem:[#allocation2 + $0x18] sm:$0xff] %v923
      %932 = vst [vmem:[#allocation2 + $0x20] sm:$0xff] %v924
      %933 = vst [vmem:[#allocation2 + $0x28] sm:$0xff] %v925
      %934 = vst [vmem:[#allocation2 + $0x30] sm:$0xff] %v926
      %935 = vst [vmem:[#allocation2 + $0x38] sm:$0xff] %v927
      %v936 = vld [vmem:[%s376 + $0x4] sm:$0xf]
      %v937 = vld [vmem:[%s376 + $0x8] sm:$0xf]
      %v938 = vld [vmem:[%s376 + $0xc] sm:$0xf]
      %v939 = vld [vmem:[%s376 + $0x10] sm:$0xf]
      %v940 = vld [vmem:[%s376 + $0x14] sm:$0xf]
      %v941 = vld [vmem:[%s376 + $0x18] sm:$0xf]
      %v942 = vld [vmem:[%s376 + $0x1c] sm:$0xf]
      %v943 = vld [vmem:[%s376 + $0x20] sm:$0xf]
      %v944 = vld [vmem:[#allocation2] sm:$0xff]
      %v945 = vld [vmem:[#allocation2 + $0x8] sm:$0xff]
      %v946 = vld [vmem:[#allocation2 + $0x10] sm:$0xff]
      %v947 = vld [vmem:[#allocation2 + $0x18] sm:$0xff]
      %v948 = vld [vmem:[#allocation2 + $0x20] sm:$0xff]
      %v949 = vld [vmem:[#allocation2 + $0x28] sm:$0xff]
      %v950 = vld [vmem:[#allocation2 + $0x30] sm:$0xff]
      %v951 = vld [vmem:[#allocation2 + $0x38] sm:$0xff]
      %s952 = scalar_lea.vmem %s1, 256
      %v953 = vld [vmem:[%s952] sm:$0xf]
      %v954 = vld [vmem:[%s952 + $0x4] sm:$0xf]
      %v955 = vld [vmem:[%s952 + $0x8] sm:$0xf]
      %v956 = vld [vmem:[%s952 + $0xc] sm:$0xf]
      %v957 = vld [vmem:[%s952 + $0x10] sm:$0xf]
      %v958 = vld [vmem:[%s952 + $0x14] sm:$0xf]
      %v959 = vld [vmem:[%s952 + $0x18] sm:$0xf]
      %v960 = vld [vmem:[%s952 + $0x1c] sm:$0xf]
      %v961 = vld [vmem:[%s952 + $0x20] sm:$0xf]
      %v962 = vld [vmem:[%s952 + $0x24] sm:$0xf]
      %v963 = vld [vmem:[%s952 + $0x28] sm:$0xf]
      %v964 = vld [vmem:[%s952 + $0x2c] sm:$0xf]
      %v965 = vld [vmem:[%s952 + $0x30] sm:$0xf]
      %v966 = vld [vmem:[%s952 + $0x34] sm:$0xf]
      %v967 = vld [vmem:[%s952 + $0x38] sm:$0xf]
      %v968 = vld [vmem:[%s952 + $0x3c] sm:$0xf]
      %v977 = vunpack.c.l.b16 %v936
      %v978 = vunpack.c.l.b16 %v937
      %v979 = vunpack.c.l.b16 %v938
      %v980 = vunpack.c.l.b16 %v939
      %v981 = vunpack.c.l.b16 %v940
      %v982 = vunpack.c.l.b16 %v941
      %v983 = vunpack.c.l.b16 %v942
      %v984 = vunpack.c.l.b16 %v943
      %v985 = vpack.c.b16 %v978, %v977
      %v986 = vpack.c.b16 %v980, %v979
      %v987 = vpack.c.b16 %v982, %v981
      %v988 = vpack.c.b16 %v984, %v983
      %v1009 = vunpack.c.l.b16 %v953
      %v1010 = vunpack.c.l.b16 %v954
      %v1011 = vunpack.c.l.b16 %v955
      %v1012 = vunpack.c.l.b16 %v956
      %v1013 = vunpack.c.l.b16 %v957
      %v1014 = vunpack.c.l.b16 %v958
      %v1015 = vunpack.c.l.b16 %v959
      %v1016 = vunpack.c.l.b16 %v960
      %v1017 = vunpack.c.l.b16 %v961
      %v1018 = vunpack.c.l.b16 %v962
      %v1019 = vunpack.c.l.b16 %v963
      %v1020 = vunpack.c.l.b16 %v964
      %v1021 = vunpack.c.l.b16 %v965
      %v1022 = vunpack.c.l.b16 %v966
      %v1023 = vunpack.c.l.b16 %v967
      %v1024 = vunpack.c.l.b16 %v968
      %v1025 = vpack.c.b16 %v1010, %v1009
      %v1026 = vpack.c.b16 %v1012, %v1011
      %v1027 = vpack.c.b16 %v1014, %v1013
      %v1028 = vpack.c.b16 %v1016, %v1015
      %v1029 = vpack.c.b16 %v1018, %v1017
      %v1030 = vpack.c.b16 %v1020, %v1019
      %v1031 = vpack.c.b16 %v1022, %v1021
      %v1032 = vpack.c.b16 %v1024, %v1023
      %1041 = vmatprep.subr.bf16.mxu0 0
      %1042 = vmatpush1.bf16.msra.mxu0 %v1032
      %1043 = vmatprep.subr.bf16.mxu0 0
      %1044 = vmatpush1.bf16.msra.mxu0 %v1031
      %1045 = vmatprep.subr.bf16.mxu0 0
      %1046 = vmatpush1.bf16.msra.mxu0 %v1030
      %1047 = vmatprep.subr.bf16.mxu0 0
      %1048 = vmatpush1.bf16.msra.mxu0 %v1029
      %1049 = vmatprep.subr.bf16.mxu0 0
      %1050 = vmatpush1.bf16.msra.mxu0 %v1028
      %1051 = vmatprep.subr.bf16.mxu0 0
      %1052 = vmatpush1.bf16.msra.mxu0 %v1027
      %1053 = vmatprep.subr.bf16.mxu0 0
      %1054 = vmatpush1.bf16.msra.mxu0 %v1026
      %1055 = vmatprep.subr.bf16.mxu0 0
      %1056 = vmatpush1.bf16.msra.mxu0 %v1025
      %1057 = vmatprep.subr.bf16.mxu0 0
      %1058 = vmatpush2.bf16.msra.mxu0 0
      %1059 = vmatprep.subr.bf16.mxu0 0
      %1060 = vmatpush2.bf16.msra.mxu0 0
      %1061 = vmatprep.subr.bf16.mxu0 0
      %1062 = vmatpush2.bf16.msra.mxu0 0
      %1063 = vmatprep.subr.bf16.mxu0 0
      %1064 = vmatpush2.bf16.msra.mxu0 0
      %1065 = vmatprep.subr.bf16.mxu0 0
      %1066 = vmatpush2.bf16.msra.mxu0 0
      %1067 = vmatprep.subr.bf16.mxu0 0
      %1068 = vmatpush2.bf16.msra.mxu0 0
      %1069 = vmatprep.subr.bf16.mxu0 0
      %1070 = vmatpush2.bf16.msra.mxu0 0
      %1071 = vmatprep.subr.bf16.mxu0 0
      %1072 = vmatpush2.bf16.msra.mxu0 0
      %1073 = vmatprep.mubr.bf16.mxu0 0
      %1074 = vmatmul.mubr.bf16.gmra.mxu0 %v985
      %v1075 = vpop.f32.mrf.mxu0
      %v1076 = vadd.f32 0.0, %v1075
      %v1077 = vpop.f32.mrf.mxu0
      %v1078 = vpop.f32.mrf.mxu0
      %v1079 = vadd.f32 0.0, %v1078
      %v1080 = vpop.f32.mrf.mxu0
      %1081 = vmatprep.mubr.bf16.mxu0 0
      %1082 = vmatmul.mubr.bf16.gmra.mxu0 %v986
      %v1083 = vpop.f32.mrf.mxu0
      %v1084 = vadd.f32 0.0, %v1083
      %v1085 = vpop.f32.mrf.mxu0
      %v1086 = vpop.f32.mrf.mxu0
      %v1087 = vadd.f32 0.0, %v1086
      %v1088 = vpop.f32.mrf.mxu0
      %1089 = vmatprep.mubr.bf16.mxu0 0
      %1090 = vmatmul.mubr.bf16.gmra.mxu0 %v987
      %v1091 = vpop.f32.mrf.mxu0
      %v1092 = vadd.f32 0.0, %v1091
      %v1093 = vpop.f32.mrf.mxu0
      %v1094 = vpop.f32.mrf.mxu0
      %v1095 = vadd.f32 0.0, %v1094
      %v1096 = vpop.f32.mrf.mxu0
      %1097 = vmatprep.mubr.bf16.mxu0 0
      %1098 = vmatmul.mubr.bf16.gmra.mxu0 %v988
      %v1099 = vpop.f32.mrf.mxu0
      %v1100 = vadd.f32 0.0, %v1099
      %v1101 = vpop.f32.mrf.mxu0
      %v1102 = vpop.f32.mrf.mxu0
      %v1103 = vadd.f32 0.0, %v1102
      %v1104 = vpop.f32.mrf.mxu0
      %1105 = vdwg.mxu0
      %v1106 = vadd.f32 %v944, %v1076
      %v1107 = vadd.f32 %v945, %v1079
      %v1108 = vadd.f32 %v946, %v1084
      %v1109 = vadd.f32 %v947, %v1087
      %v1110 = vadd.f32 %v948, %v1092
      %v1111 = vadd.f32 %v949, %v1095
      %v1112 = vadd.f32 %v950, %v1100
      %v1113 = vadd.f32 %v951, %v1103
      %1114 = vst [vmem:[#allocation2] sm:$0xff] %v1106
      %1115 = vst [vmem:[#allocation2 + $0x8] sm:$0xff] %v1107
      %1116 = vst [vmem:[#allocation2 + $0x10] sm:$0xff] %v1108
      %1117 = vst [vmem:[#allocation2 + $0x18] sm:$0xff] %v1109
      %1118 = vst [vmem:[#allocation2 + $0x20] sm:$0xff] %v1110
      %1119 = vst [vmem:[#allocation2 + $0x28] sm:$0xff] %v1111
      %1120 = vst [vmem:[#allocation2 + $0x30] sm:$0xff] %v1112
      %1121 = vst [vmem:[#allocation2 + $0x38] sm:$0xff] %v1113
      %v1122 = vld [vmem:[%s563 + $0x4] sm:$0xf]
      %v1123 = vld [vmem:[%s563 + $0x8] sm:$0xf]
      %v1124 = vld [vmem:[%s563 + $0xc] sm:$0xf]
      %v1125 = vld [vmem:[%s563 + $0x10] sm:$0xf]
      %v1126 = vld [vmem:[%s563 + $0x14] sm:$0xf]
      %v1127 = vld [vmem:[%s563 + $0x18] sm:$0xf]
      %v1128 = vld [vmem:[%s563 + $0x1c] sm:$0xf]
      %v1129 = vld [vmem:[%s563 + $0x20] sm:$0xf]
      %v1130 = vld [vmem:[#allocation2] sm:$0xff]
      %v1131 = vld [vmem:[#allocation2 + $0x8] sm:$0xff]
      %v1132 = vld [vmem:[#allocation2 + $0x10] sm:$0xff]
      %v1133 = vld [vmem:[#allocation2 + $0x18] sm:$0xff]
      %v1134 = vld [vmem:[#allocation2 + $0x20] sm:$0xff]
      %v1135 = vld [vmem:[#allocation2 + $0x28] sm:$0xff]
      %v1136 = vld [vmem:[#allocation2 + $0x30] sm:$0xff]
      %v1137 = vld [vmem:[#allocation2 + $0x38] sm:$0xff]
      %s1138 = scalar_lea.vmem %s1, 320
      %v1139 = vld [vmem:[%s1138] sm:$0xf]
      %v1140 = vld [vmem:[%s1138 + $0x4] sm:$0xf]
      %v1141 = vld [vmem:[%s1138 + $0x8] sm:$0xf]
      %v1142 = vld [vmem:[%s1138 + $0xc] sm:$0xf]
      %v1143 = vld [vmem:[%s1138 + $0x10] sm:$0xf]
      %v1144 = vld [vmem:[%s1138 + $0x14] sm:$0xf]
      %v1145 = vld [vmem:[%s1138 + $0x18] sm:$0xf]
      %v1146 = vld [vmem:[%s1138 + $0x1c] sm:$0xf]
      %v1147 = vld [vmem:[%s1138 + $0x20] sm:$0xf]
      %v1148 = vld [vmem:[%s1138 + $0x24] sm:$0xf]
      %v1149 = vld [vmem:[%s1138 + $0x28] sm:$0xf]
      %v1150 = vld [vmem:[%s1138 + $0x2c] sm:$0xf]
      %v1151 = vld [vmem:[%s1138 + $0x30] sm:$0xf]
      %v1152 = vld [vmem:[%s1138 + $0x34] sm:$0xf]
      %v1153 = vld [vmem:[%s1138 + $0x38] sm:$0xf]
      %v1154 = vld [vmem:[%s1138 + $0x3c] sm:$0xf]
      %v1163 = vunpack.c.l.b16 %v1122
      %v1164 = vunpack.c.l.b16 %v1123
      %v1165 = vunpack.c.l.b16 %v1124
      %v1166 = vunpack.c.l.b16 %v1125
      %v1167 = vunpack.c.l.b16 %v1126
      %v1168 = vunpack.c.l.b16 %v1127
      %v1169 = vunpack.c.l.b16 %v1128
      %v1170 = vunpack.c.l.b16 %v1129
      %v1171 = vpack.c.b16 %v1164, %v1163
      %v1172 = vpack.c.b16 %v1166, %v1165
      %v1173 = vpack.c.b16 %v1168, %v1167
      %v1174 = vpack.c.b16 %v1170, %v1169
      %v1195 = vunpack.c.l.b16 %v1139
      %v1196 = vunpack.c.l.b16 %v1140
      %v1197 = vunpack.c.l.b16 %v1141
      %v1198 = vunpack.c.l.b16 %v1142
      %v1199 = vunpack.c.l.b16 %v1143
      %v1200 = vunpack.c.l.b16 %v1144
      %v1201 = vunpack.c.l.b16 %v1145
      %v1202 = vunpack.c.l.b16 %v1146
      %v1203 = vunpack.c.l.b16 %v1147
      %v1204 = vunpack.c.l.b16 %v1148
      %v1205 = vunpack.c.l.b16 %v1149
      %v1206 = vunpack.c.l.b16 %v1150
      %v1207 = vunpack.c.l.b16 %v1151
      %v1208 = vunpack.c.l.b16 %v1152
      %v1209 = vunpack.c.l.b16 %v1153
      %v1210 = vunpack.c.l.b16 %v1154
      %v1211 = vpack.c.b16 %v1196, %v1195
      %v1212 = vpack.c.b16 %v1198, %v1197
      %v1213 = vpack.c.b16 %v1200, %v1199
      %v1214 = vpack.c.b16 %v1202, %v1201
      %v1215 = vpack.c.b16 %v1204, %v1203
      %v1216 = vpack.c.b16 %v1206, %v1205
      %v1217 = vpack.c.b16 %v1208, %v1207
      %v1218 = vpack.c.b16 %v1210, %v1209
      %1227 = vmatprep.subr.bf16.mxu0 0
      %1228 = vmatpush1.bf16.msra.mxu0 %v1218
      %1229 = vmatprep.subr.bf16.mxu0 0
      %1230 = vmatpush1.bf16.msra.mxu0 %v1217
      %1231 = vmatprep.subr.bf16.mxu0 0
      %1232 = vmatpush1.bf16.msra.mxu0 %v1216
      %1233 = vmatprep.subr.bf16.mxu0 0
      %1234 = vmatpush1.bf16.msra.mxu0 %v1215
      %1235 = vmatprep.subr.bf16.mxu0 0
      %1236 = vmatpush1.bf16.msra.mxu0 %v1214
      %1237 = vmatprep.subr.bf16.mxu0 0
      %1238 = vmatpush1.bf16.msra.mxu0 %v1213
      %1239 = vmatprep.subr.bf16.mxu0 0
      %1240 = vmatpush1.bf16.msra.mxu0 %v1212
      %1241 = vmatprep.subr.bf16.mxu0 0
      %1242 = vmatpush1.bf16.msra.mxu0 %v1211
      %1243 = vmatprep.subr.bf16.mxu0 0
      %1244 = vmatpush2.bf16.msra.mxu0 0
      %1245 = vmatprep.subr.bf16.mxu0 0
      %1246 = vmatpush2.bf16.msra.mxu0 0
      %1247 = vmatprep.subr.bf16.mxu0 0
      %1248 = vmatpush2.bf16.msra.mxu0 0
      %1249 = vmatprep.subr.bf16.mxu0 0
      %1250 = vmatpush2.bf16.msra.mxu0 0
      %1251 = vmatprep.subr.bf16.mxu0 0
      %1252 = vmatpush2.bf16.msra.mxu0 0
      %1253 = vmatprep.subr.bf16.mxu0 0
      %1254 = vmatpush2.bf16.msra.mxu0 0
      %1255 = vmatprep.subr.bf16.mxu0 0
      %1256 = vmatpush2.bf16.msra.mxu0 0
      %1257 = vmatprep.subr.bf16.mxu0 0
      %1258 = vmatpush2.bf16.msra.mxu0 0
      %1259 = vmatprep.mubr.bf16.mxu0 0
      %1260 = vmatmul.mubr.bf16.gmra.mxu0 %v1171
      %v1261 = vpop.f32.mrf.mxu0
      %v1262 = vadd.f32 0.0, %v1261
      %v1263 = vpop.f32.mrf.mxu0
      %v1264 = vpop.f32.mrf.mxu0
      %v1265 = vadd.f32 0.0, %v1264
      %v1266 = vpop.f32.mrf.mxu0
      %1267 = vmatprep.mubr.bf16.mxu0 0
      %1268 = vmatmul.mubr.bf16.gmra.mxu0 %v1172
      %v1269 = vpop.f32.mrf.mxu0
      %v1270 = vadd.f32 0.0, %v1269
      %v1271 = vpop.f32.mrf.mxu0
      %v1272 = vpop.f32.mrf.mxu0
      %v1273 = vadd.f32 0.0, %v1272
      %v1274 = vpop.f32.mrf.mxu0
      %1275 = vmatprep.mubr.bf16.mxu0 0
      %1276 = vmatmul.mubr.bf16.gmra.mxu0 %v1173
      %v1277 = vpop.f32.mrf.mxu0
      %v1278 = vadd.f32 0.0, %v1277
      %v1279 = vpop.f32.mrf.mxu0
      %v1280 = vpop.f32.mrf.mxu0
      %v1281 = vadd.f32 0.0, %v1280
      %v1282 = vpop.f32.mrf.mxu0
      %1283 = vmatprep.mubr.bf16.mxu0 0
      %1284 = vmatmul.mubr.bf16.gmra.mxu0 %v1174
      %v1285 = vpop.f32.mrf.mxu0
      %v1286 = vadd.f32 0.0, %v1285
      %v1287 = vpop.f32.mrf.mxu0
      %v1288 = vpop.f32.mrf.mxu0
      %v1289 = vadd.f32 0.0, %v1288
      %v1290 = vpop.f32.mrf.mxu0
      %1291 = vdwg.mxu0
      %v1292 = vadd.f32 %v1130, %v1262
      %v1293 = vadd.f32 %v1131, %v1265
      %v1294 = vadd.f32 %v1132, %v1270
      %v1295 = vadd.f32 %v1133, %v1273
      %v1296 = vadd.f32 %v1134, %v1278
      %v1297 = vadd.f32 %v1135, %v1281
      %v1298 = vadd.f32 %v1136, %v1286
      %v1299 = vadd.f32 %v1137, %v1289
      %1300 = vst [vmem:[#allocation2] sm:$0xff] %v1292
      %1301 = vst [vmem:[#allocation2 + $0x8] sm:$0xff] %v1293
      %1302 = vst [vmem:[#allocation2 + $0x10] sm:$0xff] %v1294
      %1303 = vst [vmem:[#allocation2 + $0x18] sm:$0xff] %v1295
      %1304 = vst [vmem:[#allocation2 + $0x20] sm:$0xff] %v1296
      %1305 = vst [vmem:[#allocation2 + $0x28] sm:$0xff] %v1297
      %1306 = vst [vmem:[#allocation2 + $0x30] sm:$0xff] %v1298
      %1307 = vst [vmem:[#allocation2 + $0x38] sm:$0xff] %v1299
      %v1308 = vld [vmem:[%s172 + $0x8] sm:$0xf]
      %v1309 = vld [vmem:[%s172 + $0xc] sm:$0xf]
      %v1310 = vld [vmem:[%s172 + $0x10] sm:$0xf]
      %v1311 = vld [vmem:[%s172 + $0x14] sm:$0xf]
      %v1312 = vld [vmem:[%s172 + $0x18] sm:$0xf]
      %v1313 = vld [vmem:[%s172 + $0x1c] sm:$0xf]
      %v1314 = vld [vmem:[%s172 + $0x20] sm:$0xf]
      %v1315 = vld [vmem:[%s172 + $0x24] sm:$0xf]
      %v1316 = vld [vmem:[#allocation2] sm:$0xff]
      %v1317 = vld [vmem:[#allocation2 + $0x8] sm:$0xff]
      %v1318 = vld [vmem:[#allocation2 + $0x10] sm:$0xff]
      %v1319 = vld [vmem:[#allocation2 + $0x18] sm:$0xff]
      %v1320 = vld [vmem:[#allocation2 + $0x20] sm:$0xff]
      %v1321 = vld [vmem:[#allocation2 + $0x28] sm:$0xff]
      %v1322 = vld [vmem:[#allocation2 + $0x30] sm:$0xff]
      %v1323 = vld [vmem:[#allocation2 + $0x38] sm:$0xff]
      %s1324 = scalar_lea.vmem %s1, 384
      %v1325 = vld [vmem:[%s1324] sm:$0xf]
      %v1326 = vld [vmem:[%s1324 + $0x4] sm:$0xf]
      %v1327 = vld [vmem:[%s1324 + $0x8] sm:$0xf]
      %v1328 = vld [vmem:[%s1324 + $0xc] sm:$0xf]
      %v1329 = vld [vmem:[%s1324 + $0x10] sm:$0xf]
      %v1330 = vld [vmem:[%s1324 + $0x14] sm:$0xf]
      %v1331 = vld [vmem:[%s1324 + $0x18] sm:$0xf]
      %v1332 = vld [vmem:[%s1324 + $0x1c] sm:$0xf]
      %v1333 = vld [vmem:[%s1324 + $0x20] sm:$0xf]
      %v1334 = vld [vmem:[%s1324 + $0x24] sm:$0xf]
      %v1335 = vld [vmem:[%s1324 + $0x28] sm:$0xf]
      %v1336 = vld [vmem:[%s1324 + $0x2c] sm:$0xf]
      %v1337 = vld [vmem:[%s1324 + $0x30] sm:$0xf]
      %v1338 = vld [vmem:[%s1324 + $0x34] sm:$0xf]
      %v1339 = vld [vmem:[%s1324 + $0x38] sm:$0xf]
      %v1340 = vld [vmem:[%s1324 + $0x3c] sm:$0xf]
      %v1349 = vunpack.c.l.b16 %v1308
      %v1350 = vunpack.c.l.b16 %v1309
      %v1351 = vunpack.c.l.b16 %v1310
      %v1352 = vunpack.c.l.b16 %v1311
      %v1353 = vunpack.c.l.b16 %v1312
      %v1354 = vunpack.c.l.b16 %v1313
      %v1355 = vunpack.c.l.b16 %v1314
      %v1356 = vunpack.c.l.b16 %v1315
      %v1357 = vpack.c.b16 %v1350, %v1349
      %v1358 = vpack.c.b16 %v1352, %v1351
      %v1359 = vpack.c.b16 %v1354, %v1353
      %v1360 = vpack.c.b16 %v1356, %v1355
      %v1381 = vunpack.c.l.b16 %v1325
      %v1382 = vunpack.c.l.b16 %v1326
      %v1383 = vunpack.c.l.b16 %v1327
      %v1384 = vunpack.c.l.b16 %v1328
      %v1385 = vunpack.c.l.b16 %v1329
      %v1386 = vunpack.c.l.b16 %v1330
      %v1387 = vunpack.c.l.b16 %v1331
      %v1388 = vunpack.c.l.b16 %v1332
      %v1389 = vunpack.c.l.b16 %v1333
      %v1390 = vunpack.c.l.b16 %v1334
      %v1391 = vunpack.c.l.b16 %v1335
      %v1392 = vunpack.c.l.b16 %v1336
      %v1393 = vunpack.c.l.b16 %v1337
      %v1394 = vunpack.c.l.b16 %v1338
      %v1395 = vunpack.c.l.b16 %v1339
      %v1396 = vunpack.c.l.b16 %v1340
      %v1397 = vpack.c.b16 %v1382, %v1381
      %v1398 = vpack.c.b16 %v1384, %v1383
      %v1399 = vpack.c.b16 %v1386, %v1385
      %v1400 = vpack.c.b16 %v1388, %v1387
      %v1401 = vpack.c.b16 %v1390, %v1389
      %v1402 = vpack.c.b16 %v1392, %v1391
      %v1403 = vpack.c.b16 %v1394, %v1393
      %v1404 = vpack.c.b16 %v1396, %v1395
      %1413 = vmatprep.subr.bf16.mxu0 0
      %1414 = vmatpush1.bf16.msra.mxu0 %v1404
      %1415 = vmatprep.subr.bf16.mxu0 0
      %1416 = vmatpush1.bf16.msra.mxu0 %v1403
      %1417 = vmatprep.subr.bf16.mxu0 0
      %1418 = vmatpush1.bf16.msra.mxu0 %v1402
      %1419 = vmatprep.subr.bf16.mxu0 0
      %1420 = vmatpush1.bf16.msra.mxu0 %v1401
      %1421 = vmatprep.subr.bf16.mxu0 0
      %1422 = vmatpush1.bf16.msra.mxu0 %v1400
      %1423 = vmatprep.subr.bf16.mxu0 0
      %1424 = vmatpush1.bf16.msra.mxu0 %v1399
      %1425 = vmatprep.subr.bf16.mxu0 0
      %1426 = vmatpush1.bf16.msra.mxu0 %v1398
      %1427 = vmatprep.subr.bf16.mxu0 0
      %1428 = vmatpush1.bf16.msra.mxu0 %v1397
      %1429 = vmatprep.subr.bf16.mxu0 0
      %1430 = vmatpush2.bf16.msra.mxu0 0
      %1431 = vmatprep.subr.bf16.mxu0 0
      %1432 = vmatpush2.bf16.msra.mxu0 0
      %1433 = vmatprep.subr.bf16.mxu0 0
      %1434 = vmatpush2.bf16.msra.mxu0 0
      %1435 = vmatprep.subr.bf16.mxu0 0
      %1436 = vmatpush2.bf16.msra.mxu0 0
      %1437 = vmatprep.subr.bf16.mxu0 0
      %1438 = vmatpush2.bf16.msra.mxu0 0
      %1439 = vmatprep.subr.bf16.mxu0 0
      %1440 = vmatpush2.bf16.msra.mxu0 0
      %1441 = vmatprep.subr.bf16.mxu0 0
      %1442 = vmatpush2.bf16.msra.mxu0 0
      %1443 = vmatprep.subr.bf16.mxu0 0
      %1444 = vmatpush2.bf16.msra.mxu0 0
      %1445 = vmatprep.mubr.bf16.mxu0 0
      %1446 = vmatmul.mubr.bf16.gmra.mxu0 %v1357
      %v1447 = vpop.f32.mrf.mxu0
      %v1448 = vadd.f32 0.0, %v1447
      %v1449 = vpop.f32.mrf.mxu0
      %v1450 = vpop.f32.mrf.mxu0
      %v1451 = vadd.f32 0.0, %v1450
      %v1452 = vpop.f32.mrf.mxu0
      %1453 = vmatprep.mubr.bf16.mxu0 0
      %1454 = vmatmul.mubr.bf16.gmra.mxu0 %v1358
      %v1455 = vpop.f32.mrf.mxu0
      %v1456 = vadd.f32 0.0, %v1455
      %v1457 = vpop.f32.mrf.mxu0
      %v1458 = vpop.f32.mrf.mxu0
      %v1459 = vadd.f32 0.0, %v1458
      %v1460 = vpop.f32.mrf.mxu0
      %1461 = vmatprep.mubr.bf16.mxu0 0
      %1462 = vmatmul.mubr.bf16.gmra.mxu0 %v1359
      %v1463 = vpop.f32.mrf.mxu0
      %v1464 = vadd.f32 0.0, %v1463
      %v1465 = vpop.f32.mrf.mxu0
      %v1466 = vpop.f32.mrf.mxu0
      %v1467 = vadd.f32 0.0, %v1466
      %v1468 = vpop.f32.mrf.mxu0
      %1469 = vmatprep.mubr.bf16.mxu0 0
      %1470 = vmatmul.mubr.bf16.gmra.mxu0 %v1360
      %v1471 = vpop.f32.mrf.mxu0
      %v1472 = vadd.f32 0.0, %v1471
      %v1473 = vpop.f32.mrf.mxu0
      %v1474 = vpop.f32.mrf.mxu0
      %v1475 = vadd.f32 0.0, %v1474
      %v1476 = vpop.f32.mrf.mxu0
      %1477 = vdwg.mxu0
      %v1478 = vadd.f32 %v1316, %v1448
      %v1479 = vadd.f32 %v1317, %v1451
      %v1480 = vadd.f32 %v1318, %v1456
      %v1481 = vadd.f32 %v1319, %v1459
      %v1482 = vadd.f32 %v1320, %v1464
      %v1483 = vadd.f32 %v1321, %v1467
      %v1484 = vadd.f32 %v1322, %v1472
      %v1485 = vadd.f32 %v1323, %v1475
      %1486 = vst [vmem:[#allocation2] sm:$0xff] %v1478
      %1487 = vst [vmem:[#allocation2 + $0x8] sm:$0xff] %v1479
      %1488 = vst [vmem:[#allocation2 + $0x10] sm:$0xff] %v1480
      %1489 = vst [vmem:[#allocation2 + $0x18] sm:$0xff] %v1481
      %1490 = vst [vmem:[#allocation2 + $0x20] sm:$0xff] %v1482
      %1491 = vst [vmem:[#allocation2 + $0x28] sm:$0xff] %v1483
      %1492 = vst [vmem:[#allocation2 + $0x30] sm:$0xff] %v1484
      %1493 = vst [vmem:[#allocation2 + $0x38] sm:$0xff] %v1485
      %v1494 = vld [vmem:[%s376 + $0x8] sm:$0xf]
      %v1495 = vld [vmem:[%s376 + $0xc] sm:$0xf]
      %v1496 = vld [vmem:[%s376 + $0x10] sm:$0xf]
      %v1497 = vld [vmem:[%s376 + $0x14] sm:$0xf]
      %v1498 = vld [vmem:[%s376 + $0x18] sm:$0xf]
      %v1499 = vld [vmem:[%s376 + $0x1c] sm:$0xf]
      %v1500 = vld [vmem:[%s376 + $0x20] sm:$0xf]
      %v1501 = vld [vmem:[%s376 + $0x24] sm:$0xf]
      %v1502 = vld [vmem:[#allocation2] sm:$0xff]
      %v1503 = vld [vmem:[#allocation2 + $0x8] sm:$0xff]
      %v1504 = vld [vmem:[#allocation2 + $0x10] sm:$0xff]
      %v1505 = vld [vmem:[#allocation2 + $0x18] sm:$0xff]
      %v1506 = vld [vmem:[#allocation2 + $0x20] sm:$0xff]
      %v1507 = vld [vmem:[#allocation2 + $0x28] sm:$0xff]
      %v1508 = vld [vmem:[#allocation2 + $0x30] sm:$0xff]
      %v1509 = vld [vmem:[#allocation2 + $0x38] sm:$0xff]
      %s1510 = scalar_lea.vmem %s1, 448
      %v1511 = vld [vmem:[%s1510] sm:$0xf]
      %v1512 = vld [vmem:[%s1510 + $0x4] sm:$0xf]
      %v1513 = vld [vmem:[%s1510 + $0x8] sm:$0xf]
      %v1514 = vld [vmem:[%s1510 + $0xc] sm:$0xf]
      %v1515 = vld [vmem:[%s1510 + $0x10] sm:$0xf]
      %v1516 = vld [vmem:[%s1510 + $0x14] sm:$0xf]
      %v1517 = vld [vmem:[%s1510 + $0x18] sm:$0xf]
      %v1518 = vld [vmem:[%s1510 + $0x1c] sm:$0xf]
      %v1519 = vld [vmem:[%s1510 + $0x20] sm:$0xf]
      %v1520 = vld [vmem:[%s1510 + $0x24] sm:$0xf]
      %v1521 = vld [vmem:[%s1510 + $0x28] sm:$0xf]
      %v1522 = vld [vmem:[%s1510 + $0x2c] sm:$0xf]
      %v1523 = vld [vmem:[%s1510 + $0x30] sm:$0xf]
      %v1524 = vld [vmem:[%s1510 + $0x34] sm:$0xf]
      %v1525 = vld [vmem:[%s1510 + $0x38] sm:$0xf]
      %v1526 = vld [vmem:[%s1510 + $0x3c] sm:$0xf]
      %v1535 = vunpack.c.l.b16 %v1494
      %v1536 = vunpack.c.l.b16 %v1495
      %v1537 = vunpack.c.l.b16 %v1496
      %v1538 = vunpack.c.l.b16 %v1497
      %v1539 = vunpack.c.l.b16 %v1498
      %v1540 = vunpack.c.l.b16 %v1499
      %v1541 = vunpack.c.l.b16 %v1500
      %v1542 = vunpack.c.l.b16 %v1501
      %v1543 = vpack.c.b16 %v1536, %v1535
      %v1544 = vpack.c.b16 %v1538, %v1537
      %v1545 = vpack.c.b16 %v1540, %v1539
      %v1546 = vpack.c.b16 %v1542, %v1541
      %v1567 = vunpack.c.l.b16 %v1511
      %v1568 = vunpack.c.l.b16 %v1512
      %v1569 = vunpack.c.l.b16 %v1513
      %v1570 = vunpack.c.l.b16 %v1514
      %v1571 = vunpack.c.l.b16 %v1515
      %v1572 = vunpack.c.l.b16 %v1516
      %v1573 = vunpack.c.l.b16 %v1517
      %v1574 = vunpack.c.l.b16 %v1518
      %v1575 = vunpack.c.l.b16 %v1519
      %v1576 = vunpack.c.l.b16 %v1520
      %v1577 = vunpack.c.l.b16 %v1521
      %v1578 = vunpack.c.l.b16 %v1522
      %v1579 = vunpack.c.l.b16 %v1523
      %v1580 = vunpack.c.l.b16 %v1524
      %v1581 = vunpack.c.l.b16 %v1525
      %v1582 = vunpack.c.l.b16 %v1526
      %v1583 = vpack.c.b16 %v1568, %v1567
      %v1584 = vpack.c.b16 %v1570, %v1569
      %v1585 = vpack.c.b16 %v1572, %v1571
      %v1586 = vpack.c.b16 %v1574, %v1573
      %v1587 = vpack.c.b16 %v1576, %v1575
      %v1588 = vpack.c.b16 %v1578, %v1577
      %v1589 = vpack.c.b16 %v1580, %v1579
      %v1590 = vpack.c.b16 %v1582, %v1581
      %1599 = vmatprep.subr.bf16.mxu0 0
      %1600 = vmatpush1.bf16.msra.mxu0 %v1590
      %1601 = vmatprep.subr.bf16.mxu0 0
      %1602 = vmatpush1.bf16.msra.mxu0 %v1589
      %1603 = vmatprep.subr.bf16.mxu0 0
      %1604 = vmatpush1.bf16.msra.mxu0 %v1588
      %1605 = vmatprep.subr.bf16.mxu0 0
      %1606 = vmatpush1.bf16.msra.mxu0 %v1587
      %1607 = vmatprep.subr.bf16.mxu0 0
      %1608 = vmatpush1.bf16.msra.mxu0 %v1586
      %1609 = vmatprep.subr.bf16.mxu0 0
      %1610 = vmatpush1.bf16.msra.mxu0 %v1585
      %1611 = vmatprep.subr.bf16.mxu0 0
      %1612 = vmatpush1.bf16.msra.mxu0 %v1584
      %1613 = vmatprep.subr.bf16.mxu0 0
      %1614 = vmatpush1.bf16.msra.mxu0 %v1583
      %1615 = vmatprep.subr.bf16.mxu0 0
      %1616 = vmatpush2.bf16.msra.mxu0 0
      %1617 = vmatprep.subr.bf16.mxu0 0
      %1618 = vmatpush2.bf16.msra.mxu0 0
      %1619 = vmatprep.subr.bf16.mxu0 0
      %1620 = vmatpush2.bf16.msra.mxu0 0
      %1621 = vmatprep.subr.bf16.mxu0 0
      %1622 = vmatpush2.bf16.msra.mxu0 0
      %1623 = vmatprep.subr.bf16.mxu0 0
      %1624 = vmatpush2.bf16.msra.mxu0 0
      %1625 = vmatprep.subr.bf16.mxu0 0
      %1626 = vmatpush2.bf16.msra.mxu0 0
      %1627 = vmatprep.subr.bf16.mxu0 0
      %1628 = vmatpush2.bf16.msra.mxu0 0
      %1629 = vmatprep.subr.bf16.mxu0 0
      %1630 = vmatpush2.bf16.msra.mxu0 0
      %1631 = vmatprep.mubr.bf16.mxu0 0
      %1632 = vmatmul.mubr.bf16.gmra.mxu0 %v1543
      %v1633 = vpop.f32.mrf.mxu0
      %v1634 = vadd.f32 0.0, %v1633
      %v1635 = vpop.f32.mrf.mxu0
      %v1636 = vpop.f32.mrf.mxu0
      %v1637 = vadd.f32 0.0, %v1636
      %v1638 = vpop.f32.mrf.mxu0
      %1639 = vmatprep.mubr.bf16.mxu0 0
      %1640 = vmatmul.mubr.bf16.gmra.mxu0 %v1544
      %v1641 = vpop.f32.mrf.mxu0
      %v1642 = vadd.f32 0.0, %v1641
      %v1643 = vpop.f32.mrf.mxu0
      %v1644 = vpop.f32.mrf.mxu0
      %v1645 = vadd.f32 0.0, %v1644
      %v1646 = vpop.f32.mrf.mxu0
      %1647 = vmatprep.mubr.bf16.mxu0 0
      %1648 = vmatmul.mubr.bf16.gmra.mxu0 %v1545
      %v1649 = vpop.f32.mrf.mxu0
      %v1650 = vadd.f32 0.0, %v1649
      %v1651 = vpop.f32.mrf.mxu0
      %v1652 = vpop.f32.mrf.mxu0
      %v1653 = vadd.f32 0.0, %v1652
      %v1654 = vpop.f32.mrf.mxu0
      %1655 = vmatprep.mubr.bf16.mxu0 0
      %1656 = vmatmul.mubr.bf16.gmra.mxu0 %v1546
      %v1657 = vpop.f32.mrf.mxu0
      %v1658 = vadd.f32 0.0, %v1657
      %v1659 = vpop.f32.mrf.mxu0
      %v1660 = vpop.f32.mrf.mxu0
      %v1661 = vadd.f32 0.0, %v1660
      %v1662 = vpop.f32.mrf.mxu0
      %1663 = vdwg.mxu0
      %v1664 = vadd.f32 %v1502, %v1634
      %v1665 = vadd.f32 %v1503, %v1637
      %v1666 = vadd.f32 %v1504, %v1642
      %v1667 = vadd.f32 %v1505, %v1645
      %v1668 = vadd.f32 %v1506, %v1650
      %v1669 = vadd.f32 %v1507, %v1653
      %v1670 = vadd.f32 %v1508, %v1658
      %v1671 = vadd.f32 %v1509, %v1661
      %1672 = vst [vmem:[#allocation2] sm:$0xff] %v1664
      %1673 = vst [vmem:[#allocation2 + $0x8] sm:$0xff] %v1665
      %1674 = vst [vmem:[#allocation2 + $0x10] sm:$0xff] %v1666
      %1675 = vst [vmem:[#allocation2 + $0x18] sm:$0xff] %v1667
      %1676 = vst [vmem:[#allocation2 + $0x20] sm:$0xff] %v1668
      %1677 = vst [vmem:[#allocation2 + $0x28] sm:$0xff] %v1669
      %1678 = vst [vmem:[#allocation2 + $0x30] sm:$0xff] %v1670
      %1679 = vst [vmem:[#allocation2 + $0x38] sm:$0xff] %v1671
      %v1680 = vld [vmem:[%s563 + $0x8] sm:$0xf]
      %v1681 = vld [vmem:[%s563 + $0xc] sm:$0xf]
      %v1682 = vld [vmem:[%s563 + $0x10] sm:$0xf]
      %v1683 = vld [vmem:[%s563 + $0x14] sm:$0xf]
      %v1684 = vld [vmem:[%s563 + $0x18] sm:$0xf]
      %v1685 = vld [vmem:[%s563 + $0x1c] sm:$0xf]
      %v1686 = vld [vmem:[%s563 + $0x20] sm:$0xf]
      %v1687 = vld [vmem:[%s563 + $0x24] sm:$0xf]
      %v1688 = vld [vmem:[#allocation2] sm:$0xff]
      %v1689 = vld [vmem:[#allocation2 + $0x8] sm:$0xff]
      %v1690 = vld [vmem:[#allocation2 + $0x10] sm:$0xff]
      %v1691 = vld [vmem:[#allocation2 + $0x18] sm:$0xff]
      %v1692 = vld [vmem:[#allocation2 + $0x20] sm:$0xff]
      %v1693 = vld [vmem:[#allocation2 + $0x28] sm:$0xff]
      %v1694 = vld [vmem:[#allocation2 + $0x30] sm:$0xff]
      %v1695 = vld [vmem:[#allocation2 + $0x38] sm:$0xff]
      %s1696 = scalar_lea.vmem %s1, 512
      %v1697 = vld [vmem:[%s1696] sm:$0xf]
      %v1698 = vld [vmem:[%s1696 + $0x4] sm:$0xf]
      %v1699 = vld [vmem:[%s1696 + $0x8] sm:$0xf]
      %v1700 = vld [vmem:[%s1696 + $0xc] sm:$0xf]
      %v1701 = vld [vmem:[%s1696 + $0x10] sm:$0xf]
      %v1702 = vld [vmem:[%s1696 + $0x14] sm:$0xf]
      %v1703 = vld [vmem:[%s1696 + $0x18] sm:$0xf]
      %v1704 = vld [vmem:[%s1696 + $0x1c] sm:$0xf]
      %v1705 = vld [vmem:[%s1696 + $0x20] sm:$0xf]
      %v1706 = vld [vmem:[%s1696 + $0x24] sm:$0xf]
      %v1707 = vld [vmem:[%s1696 + $0x28] sm:$0xf]
      %v1708 = vld [vmem:[%s1696 + $0x2c] sm:$0xf]
      %v1709 = vld [vmem:[%s1696 + $0x30] sm:$0xf]
      %v1710 = vld [vmem:[%s1696 + $0x34] sm:$0xf]
      %v1711 = vld [vmem:[%s1696 + $0x38] sm:$0xf]
      %v1712 = vld [vmem:[%s1696 + $0x3c] sm:$0xf]
      %v1721 = vunpack.c.l.b16 %v1680
      %v1722 = vunpack.c.l.b16 %v1681
      %v1723 = vunpack.c.l.b16 %v1682
      %v1724 = vunpack.c.l.b16 %v1683
      %v1725 = vunpack.c.l.b16 %v1684
      %v1726 = vunpack.c.l.b16 %v1685
      %v1727 = vunpack.c.l.b16 %v1686
      %v1728 = vunpack.c.l.b16 %v1687
      %v1729 = vpack.c.b16 %v1722, %v1721
      %v1730 = vpack.c.b16 %v1724, %v1723
      %v1731 = vpack.c.b16 %v1726, %v1725
      %v1732 = vpack.c.b16 %v1728, %v1727
      %v1753 = vunpack.c.l.b16 %v1697
      %v1754 = vunpack.c.l.b16 %v1698
      %v1755 = vunpack.c.l.b16 %v1699
      %v1756 = vunpack.c.l.b16 %v1700
      %v1757 = vunpack.c.l.b16 %v1701
      %v1758 = vunpack.c.l.b16 %v1702
      %v1759 = vunpack.c.l.b16 %v1703
      %v1760 = vunpack.c.l.b16 %v1704
      %v1761 = vunpack.c.l.b16 %v1705
      %v1762 = vunpack.c.l.b16 %v1706
      %v1763 = vunpack.c.l.b16 %v1707
      %v1764 = vunpack.c.l.b16 %v1708
      %v1765 = vunpack.c.l.b16 %v1709
      %v1766 = vunpack.c.l.b16 %v1710
      %v1767 = vunpack.c.l.b16 %v1711
      %v1768 = vunpack.c.l.b16 %v1712
      %v1769 = vpack.c.b16 %v1754, %v1753
      %v1770 = vpack.c.b16 %v1756, %v1755
      %v1771 = vpack.c.b16 %v1758, %v1757
      %v1772 = vpack.c.b16 %v1760, %v1759
      %v1773 = vpack.c.b16 %v1762, %v1761
      %v1774 = vpack.c.b16 %v1764, %v1763
      %v1775 = vpack.c.b16 %v1766, %v1765
      %v1776 = vpack.c.b16 %v1768, %v1767
      %1785 = vmatprep.subr.bf16.mxu0 0
      %1786 = vmatpush1.bf16.msra.mxu0 %v1776
      %1787 = vmatprep.subr.bf16.mxu0 0
      %1788 = vmatpush1.bf16.msra.mxu0 %v1775
      %1789 = vmatprep.subr.bf16.mxu0 0
      %1790 = vmatpush1.bf16.msra.mxu0 %v1774
      %1791 = vmatprep.subr.bf16.mxu0 0
      %1792 = vmatpush1.bf16.msra.mxu0 %v1773
      %1793 = vmatprep.subr.bf16.mxu0 0
      %1794 = vmatpush1.bf16.msra.mxu0 %v1772
      %1795 = vmatprep.subr.bf16.mxu0 0
      %1796 = vmatpush1.bf16.msra.mxu0 %v1771
      %1797 = vmatprep.subr.bf16.mxu0 0
      %1798 = vmatpush1.bf16.msra.mxu0 %v1770
      %1799 = vmatprep.subr.bf16.mxu0 0
      %1800 = vmatpush1.bf16.msra.mxu0 %v1769
      %1801 = vmatprep.subr.bf16.mxu0 0
      %1802 = vmatpush2.bf16.msra.mxu0 0
      %1803 = vmatprep.subr.bf16.mxu0 0
      %1804 = vmatpush2.bf16.msra.mxu0 0
      %1805 = vmatprep.subr.bf16.mxu0 0
      %1806 = vmatpush2.bf16.msra.mxu0 0
      %1807 = vmatprep.subr.bf16.mxu0 0
      %1808 = vmatpush2.bf16.msra.mxu0 0
      %1809 = vmatprep.subr.bf16.mxu0 0
      %1810 = vmatpush2.bf16.msra.mxu0 0
      %1811 = vmatprep.subr.bf16.mxu0 0
      %1812 = vmatpush2.bf16.msra.mxu0 0
      %1813 = vmatprep.subr.bf16.mxu0 0
      %1814 = vmatpush2.bf16.msra.mxu0 0
      %1815 = vmatprep.subr.bf16.mxu0 0
      %1816 = vmatpush2.bf16.msra.mxu0 0
      %1817 = vmatprep.mubr.bf16.mxu0 0
      %1818 = vmatmul.mubr.bf16.gmra.mxu0 %v1729
      %v1819 = vpop.f32.mrf.mxu0
      %v1820 = vadd.f32 0.0, %v1819
      %v1821 = vpop.f32.mrf.mxu0
      %v1822 = vpop.f32.mrf.mxu0
      %v1823 = vadd.f32 0.0, %v1822
      %v1824 = vpop.f32.mrf.mxu0
      %1825 = vmatprep.mubr.bf16.mxu0 0
      %1826 = vmatmul.mubr.bf16.gmra.mxu0 %v1730
      %v1827 = vpop.f32.mrf.mxu0
      %v1828 = vadd.f32 0.0, %v1827
      %v1829 = vpop.f32.mrf.mxu0
      %v1830 = vpop.f32.mrf.mxu0
      %v1831 = vadd.f32 0.0, %v1830
      %v1832 = vpop.f32.mrf.mxu0
      %1833 = vmatprep.mubr.bf16.mxu0 0
      %1834 = vmatmul.mubr.bf16.gmra.mxu0 %v1731
      %v1835 = vpop.f32.mrf.mxu0
      %v1836 = vadd.f32 0.0, %v1835
      %v1837 = vpop.f32.mrf.mxu0
      %v1838 = vpop.f32.mrf.mxu0
      %v1839 = vadd.f32 0.0, %v1838
      %v1840 = vpop.f32.mrf.mxu0
      %1841 = vmatprep.mubr.bf16.mxu0 0
      %1842 = vmatmul.mubr.bf16.gmra.mxu0 %v1732
      %v1843 = vpop.f32.mrf.mxu0
      %v1844 = vadd.f32 0.0, %v1843
      %v1845 = vpop.f32.mrf.mxu0
      %v1846 = vpop.f32.mrf.mxu0
      %v1847 = vadd.f32 0.0, %v1846
      %v1848 = vpop.f32.mrf.mxu0
      %1849 = vdwg.mxu0
      %v1850 = vadd.f32 %v1688, %v1820
      %v1851 = vadd.f32 %v1689, %v1823
      %v1852 = vadd.f32 %v1690, %v1828
      %v1853 = vadd.f32 %v1691, %v1831
      %v1854 = vadd.f32 %v1692, %v1836
      %v1855 = vadd.f32 %v1693, %v1839
      %v1856 = vadd.f32 %v1694, %v1844
      %v1857 = vadd.f32 %v1695, %v1847
      %1858 = vst [vmem:[#allocation2] sm:$0xff] %v1850
      %1859 = vst [vmem:[#allocation2 + $0x8] sm:$0xff] %v1851
      %1860 = vst [vmem:[#allocation2 + $0x10] sm:$0xff] %v1852
      %1861 = vst [vmem:[#allocation2 + $0x18] sm:$0xff] %v1853
      %1862 = vst [vmem:[#allocation2 + $0x20] sm:$0xff] %v1854
      %1863 = vst [vmem:[#allocation2 + $0x28] sm:$0xff] %v1855
      %1864 = vst [vmem:[#allocation2 + $0x30] sm:$0xff] %v1856
      %1865 = vst [vmem:[#allocation2 + $0x38] sm:$0xff] %v1857
      %v1866 = vld [vmem:[#allocation2] sm:$0xff]
      %v1867 = vld [vmem:[#allocation2 + $0x8] sm:$0xff]
      %v1868 = vld [vmem:[#allocation2 + $0x10] sm:$0xff]
      %v1869 = vld [vmem:[#allocation2 + $0x18] sm:$0xff]
      %v1870 = vld [vmem:[#allocation2 + $0x20] sm:$0xff]
      %v1871 = vld [vmem:[#allocation2 + $0x28] sm:$0xff]
      %v1872 = vld [vmem:[#allocation2 + $0x30] sm:$0xff]
      %v1873 = vld [vmem:[#allocation2 + $0x38] sm:$0xff]
      %v1874 = vpack.c.bf16 %v1867, %v1866
      %v1875 = vpack.c.bf16 %v1869, %v1868
      %v1876 = vpack.c.bf16 %v1871, %v1870
      %v1877 = vpack.c.bf16 %v1873, %v1872
      %v1882 = vunpack.c.l.b16 %v1874
      %v1883 = vunpack.c.h.b16 %v1874
      %v1884 = vunpack.c.l.b16 %v1875
      %v1885 = vunpack.c.h.b16 %v1875
      %v1886 = vunpack.c.l.b16 %v1876
      %v1887 = vunpack.c.h.b16 %v1876
      %v1888 = vunpack.c.l.b16 %v1877
      %v1889 = vunpack.c.h.b16 %v1877
      %v1890 = vpack.c.b16 %v1882, %v1882
      %v1891 = vpack.c.b16 %v1883, %v1883
      %v1892 = vpack.c.b16 %v1884, %v1884
      %v1893 = vpack.c.b16 %v1885, %v1885
      %v1894 = vpack.c.b16 %v1886, %v1886
      %v1895 = vpack.c.b16 %v1887, %v1887
      %v1896 = vpack.c.b16 %v1888, %v1888
      %v1897 = vpack.c.b16 %v1889, %v1889
      %1906 = vst [vmem:[%s177] sm:$0xf] %v1890
      %1907 = vst [vmem:[%s177 + $0x4] sm:$0xf] %v1891
      %1908 = vst [vmem:[%s177 + $0x8] sm:$0xf] %v1892
      %1909 = vst [vmem:[%s177 + $0xc] sm:$0xf] %v1893
      %1910 = vst [vmem:[%s177 + $0x10] sm:$0xf] %v1894
      %1911 = vst [vmem:[%s177 + $0x14] sm:$0xf] %v1895
      %1912 = vst [vmem:[%s177 + $0x18] sm:$0xf] %v1896
      %1913 = vst [vmem:[%s177 + $0x1c] sm:$0xf] %v1897
      %v1914 = vadd.f32 %v1866, %v1867
      %v1915 = vadd.f32 %v1914, %v1868
      %v1916 = vadd.f32 %v1915, %v1869
      %v1917 = vadd.f32 %v1916, %v1870
      %v1918 = vadd.f32 %v1917, %v1871
      %v1919 = vadd.f32 %v1918, %v1872
      %v1920 = vadd.f32 %v1919, %v1873
      %v1921 = vrot.slane %v1920, 4
      %v1922 = vadd.f32 %v1920, %v1921
      %v1923 = vrot.slane %v1922, 2
      %v1924 = vadd.f32 %v1922, %v1923
      %v1925 = vrot.slane %v1924, 1
      %v1926 = vadd.f32 %v1924, %v1925
      %1927 = vst [vmem:[%s181] sm:$0x1] %v1926
      %v1928 = vmul.f32 %v1866, %v1866
      %v1929 = vmul.f32 %v1867, %v1867
      %v1930 = vmul.f32 %v1868, %v1868
      %v1931 = vmul.f32 %v1869, %v1869
      %v1932 = vmul.f32 %v1870, %v1870
      %v1933 = vmul.f32 %v1871, %v1871
      %v1934 = vmul.f32 %v1872, %v1872
      %v1935 = vmul.f32 %v1873, %v1873
      %v1936 = vadd.f32 %v1928, %v1929
      %v1937 = vadd.f32 %v1936, %v1930
      %v1938 = vadd.f32 %v1937, %v1931
      %v1939 = vadd.f32 %v1938, %v1932
      %v1940 = vadd.f32 %v1939, %v1933
      %v1941 = vadd.f32 %v1940, %v1934
      %v1942 = vadd.f32 %v1941, %v1935
      %v1943 = vrot.slane %v1942, 4
      %v1944 = vadd.f32 %v1942, %v1943
      %v1945 = vrot.slane %v1944, 2
      %v1946 = vadd.f32 %v1944, %v1945
      %v1947 = vrot.slane %v1946, 1
      %v1948 = vadd.f32 %v1946, %v1947
      %1949 = vst [vmem:[%s181 + $0x1] sm:$0x1] %v1948
      %p1950 = scmp.lt.s32.totalorder %s15, 1
      %s1951 = scalar_select %p1950, %s15, 1
      %s1952 = smul.addr %s1951, 8
      %s1953 = smul.addr %s1952, 4
      %s1954 = scalar_lea.vmem %s2, %s1953
      %p1955 = scmp.lt.s32.totalorder %s15, 1
      %s1956 = scalar_select %p1955, %s15, 1
      %s1957 = smul.addr %s1956, 2
      %s1958 = scalar_lea.vmem %s3, %s1957
      // Predicated region
      $region29: #{_bottleneck_forward.7} parent=27 // pred_check
        %p1959 = pneg %p80
      $region30: #{_bottleneck_forward.7} parent=27 // pred_check_branch
        %1961 = sbr.rel (%p1959) target = $region32
      $region31: #{_bottleneck_forward.7} parent=27 // pred_region
        _
      $region32: #{_bottleneck_forward.7} parent=27 // pred_fallthru
        _
      // Predicated region
      $region33: #{_bottleneck_forward.7} parent=27 // pred_check
        %p1962 = pneg %p106
      $region34: #{_bottleneck_forward.7} parent=27 // pred_check_branch
        %1964 = sbr.rel (%p1962) target = $region36
      $region35: #{_bottleneck_forward.7} parent=27 // pred_region
        _
      $region36: #{_bottleneck_forward.7} parent=27 // pred_fallthru
        _
    $region28: #{_bottleneck_forward.7} parent=5 // pred_fallthru
      _
    %p1965 = scmp.le.s32.totalorder 2, %s10
    // Predicated region
    $region37: #{_bottleneck_forward.7} parent=5 // pred_check
      %p1966 = pneg %p1965
    $region38: #{_bottleneck_forward.7} parent=5 // pred_check_branch
      %1968 = sbr.rel (%p1966) target = $region40
    $region39: #{_bottleneck_forward.7} parent=5 // pred_region
      %s1969 = ssub.s32 %s10, 2
      // Predicated region
      $region41: #{_bottleneck_forward.7} parent=39 // pred_check
        %p1970 = pneg %p86
      $region42: #{_bottleneck_forward.7} parent=39 // pred_check_branch
        %1972 = sbr.rel (%p1970) target = $region44
      $region43: #{_bottleneck_forward.7} parent=39 // pred_region
        %p1973 = scmp.lt.s32.totalorder %s16, 1
        %s1974 = scalar_select %p1973, %s16, 1
        %s1975 = smul.addr %s1974, 8
        %s1976 = smul.addr %s1975, 4
        %s1977 = scalar_lea.vmem %s2, %s1976
      $region44: #{_bottleneck_forward.7} parent=39 // pred_fallthru
        _
      // Predicated region
      $region45: #{_bottleneck_forward.7} parent=39 // pred_check
        %p1978 = pneg %p112
      $region46: #{_bottleneck_forward.7} parent=39 // pred_check_branch
        %1980 = sbr.rel (%p1978) target = $region48
      $region47: #{_bottleneck_forward.7} parent=39 // pred_region
        %p1981 = scmp.lt.s32.totalorder %s16, 1
        %s1982 = scalar_select %p1981, %s16, 1
        %s1983 = smul.addr %s1982, 2
        %s1984 = scalar_lea.vmem %s3, %s1983
      $region48: #{_bottleneck_forward.7} parent=39 // pred_fallthru
        _
    $region40: #{_bottleneck_forward.7} parent=5 // pred_fallthru
      _
  $region6: #{_bottleneck_forward.7} parent=0 // loop_footer
    %s14 = sadd.s32 1, %s10
  $region7: #{_bottleneck_forward.7} parent=0 // loop_footer_branch
    %9 = sbr.rel target = $region3
  $region8: #{_bottleneck_forward.7} parent=0 // loop_exit
    _

// kernel: _bottleneck_forward.8
$region0: #{_bottleneck_forward.8}
  #allocation0 [shape = 'u32[]', space=smem, size = 0x4, offset = 0x4, fixed_abs, tag = 'smem constant byte address 0x4 - core index']
  #allocation1 [shape = 'u32[144,128]{1,0:T(1,128)}', space=vmem, size = 0x12000, scoped, tag = 'internal scratch']
  %s0 = inlined_call_operand.vmem [shape: bf16[128,128], index: 0, kind: input, shape index: {}]
  %s1 = inlined_call_operand.vmem [shape: f32[2,128], index: 1, kind: input, shape index: {}]
  %s2 = inlined_call_operand.vmem [shape: f32[1,128], index: 2, kind: input, shape index: {}]
  %s3 = inlined_call_operand.vmem [shape: f32[1,128], index: 3, kind: input, shape index: {}]
  %s4 = inlined_call_operand.vmem [shape: bf16[128,128], index: 4, kind: input, shape index: {}]
  %s5 = inlined_call_operand.vmem [shape: bf16[128,128], index: 5, kind: output, shape index: {0}]
  %s6 = inlined_call_operand.vmem [shape: f32[1,2,128], index: 6, kind: output, shape index: {1}]
  %7 = xla_tuple %s5, %s6
  %s8 = sld [smem:[#allocation0]]
  $region38: #{_bottleneck_forward.8} parent=0
    _
  %s10 = ssub.s32 1, %s8
  %s11 = scalar_select 0, %s10, %s8
  // Predicated region
  $region2: #{_bottleneck_forward.8} parent=0 // pred_check
    _
  $region3: #{_bottleneck_forward.8} parent=0 // pred_check_branch
    %13 = sbr.rel (0) target = $region5
  $region4: #{_bottleneck_forward.8} parent=0 // pred_region
    _
  $region5: #{_bottleneck_forward.8} parent=0 // pred_fallthru
    _
  // Predicated region
  $region6: #{_bottleneck_forward.8} parent=0 // pred_check
    _
  $region7: #{_bottleneck_forward.8} parent=0 // pred_check_branch
    %15 = sbr.rel (0) target = $region9
  $region8: #{_bottleneck_forward.8} parent=0 // pred_region
    _
  $region9: #{_bottleneck_forward.8} parent=0 // pred_fallthru
    _
  // Predicated region
  $region10: #{_bottleneck_forward.8} parent=0 // pred_check
    _
  $region11: #{_bottleneck_forward.8} parent=0 // pred_check_branch
    %17 = sbr.rel (0) target = $region13
  $region12: #{_bottleneck_forward.8} parent=0 // pred_region
    _
  $region13: #{_bottleneck_forward.8} parent=0 // pred_fallthru
    _
  // Predicated region
  $region14: #{_bottleneck_forward.8} parent=0 // pred_check
    _
  $region15: #{_bottleneck_forward.8} parent=0 // pred_check_branch
    %19 = sbr.rel (0) target = $region17
  $region16: #{_bottleneck_forward.8} parent=0 // pred_region
    _
  $region17: #{_bottleneck_forward.8} parent=0 // pred_fallthru
    _
  // Predicated region
  $region18: #{_bottleneck_forward.8} parent=0 // pred_check
    _
  $region19: #{_bottleneck_forward.8} parent=0 // pred_check_branch
    %21 = sbr.rel (0) target = $region21
  $region20: #{_bottleneck_forward.8} parent=0 // pred_region
    _
  $region21: #{_bottleneck_forward.8} parent=0 // pred_fallthru
    _
  %v23 = vld [vmem:[%s1] sm:$0x3]
  %v24 = vld [vmem:[%s2] sm:$0x1]
  %v25 = vld [vmem:[%s3] sm:$0x1]
  %v26 = vmul.f32 %v23, 0.0078125
  %v27 = vmul.f32 %v26, %v26
  %v29 = vrot.slane %v27, 7
  %v31 = vsub.f32 %v26, %v29
  %v32 = vmax.f32 %v31, 0.0
  %v33 = vadd.f32 %v32, 1e-05
  %v34 = vrsqrt.pop %v33
  %v37 = vunpack.c.l.s4 1966171168
  %v38 = vunpack.c.0.s8 %v37
  %v39 = vlaneseq
  %v40 = vshrl.u32 %v39, 7
  %v41 = vsub.s32 %v38, %v40
  %v42 = vrot.slane %v34, %v41
  %v43 = vcombine.high %v42, %v42
  %v45 = vunpack.c.l.s4 1966171168
  %v46 = vunpack.c.0.s8 %v45
  %v47 = vlaneseq
  %v48 = vshrl.u32 %v47, 7
  %v49 = vsub.s32 %v46, %v48
  %v50 = vrot.slane %v43, %v49
  %v52 = vmul.f32 %v24, %v50
  %v53 = vmul.f32 %v52, %v26
  %v54 = vsub.f32 %v25, %v53
  %v55 = vld [vmem:[%s0] sm:$0xf]
  %v56 = vld [vmem:[%s0 + $0x4] sm:$0xf]
  %v57 = vld [vmem:[%s0 + $0x8] sm:$0xf]
  %v58 = vld [vmem:[%s0 + $0xc] sm:$0xf]
  %v59 = vld [vmem:[%s0 + $0x10] sm:$0xf]
  %v60 = vld [vmem:[%s0 + $0x14] sm:$0xf]
  %v61 = vld [vmem:[%s0 + $0x18] sm:$0xf]
  %v62 = vld [vmem:[%s0 + $0x1c] sm:$0xf]
  %v63 = vld [vmem:[%s0 + $0x20] sm:$0xf]
  %v64 = vld [vmem:[%s0 + $0x24] sm:$0xf]
  %v65 = vld [vmem:[%s0 + $0x28] sm:$0xf]
  %v66 = vld [vmem:[%s0 + $0x2c] sm:$0xf]
  %v67 = vld [vmem:[%s0 + $0x30] sm:$0xf]
  %v68 = vld [vmem:[%s0 + $0x34] sm:$0xf]
  %v69 = vld [vmem:[%s0 + $0x38] sm:$0xf]
  %v70 = vld [vmem:[%s0 + $0x3c] sm:$0xf]
  %v71 = vunpack.c.l.bf16 %v55
  %v72 = vunpack.c.l.bf16 %v56
  %v73 = vunpack.c.l.bf16 %v57
  %v74 = vunpack.c.l.bf16 %v58
  %v75 = vunpack.c.l.bf16 %v59
  %v76 = vunpack.c.l.bf16 %v60
  %v77 = vunpack.c.l.bf16 %v61
  %v78 = vunpack.c.l.bf16 %v62
  %v79 = vunpack.c.l.bf16 %v63
  %v80 = vunpack.c.l.bf16 %v64
  %v81 = vunpack.c.l.bf16 %v65
  %v82 = vunpack.c.l.bf16 %v66
  %v83 = vunpack.c.l.bf16 %v67
  %v84 = vunpack.c.l.bf16 %v68
  %v85 = vunpack.c.l.bf16 %v69
  %v86 = vunpack.c.l.bf16 %v70
  %v88 = vlaneseq
  %v89 = vshrl.u32 %v88, 7
  %v90 = vsub.s32 0, %v89
  %v91 = vrot.slane %v52, %v90
  %v93 = vmul.f32 %v71, %v91
  %v94 = vmul.f32 %v72, %v91
  %v95 = vmul.f32 %v73, %v91
  %v96 = vmul.f32 %v74, %v91
  %v97 = vmul.f32 %v75, %v91
  %v98 = vmul.f32 %v76, %v91
  %v99 = vmul.f32 %v77, %v91
  %v100 = vmul.f32 %v78, %v91
  %v101 = vmul.f32 %v79, %v91
  %v102 = vmul.f32 %v80, %v91
  %v103 = vmul.f32 %v81, %v91
  %v104 = vmul.f32 %v82, %v91
  %v105 = vmul.f32 %v83, %v91
  %v106 = vmul.f32 %v84, %v91
  %v107 = vmul.f32 %v85, %v91
  %v108 = vmul.f32 %v86, %v91
  %v110 = vlaneseq
  %v111 = vshrl.u32 %v110, 7
  %v112 = vsub.s32 0, %v111
  %v113 = vrot.slane %v54, %v112
  %v115 = vadd.f32 %v93, %v113
  %v116 = vadd.f32 %v94, %v113
  %v117 = vadd.f32 %v95, %v113
  %v118 = vadd.f32 %v96, %v113
  %v119 = vadd.f32 %v97, %v113
  %v120 = vadd.f32 %v98, %v113
  %v121 = vadd.f32 %v99, %v113
  %v122 = vadd.f32 %v100, %v113
  %v123 = vadd.f32 %v101, %v113
  %v124 = vadd.f32 %v102, %v113
  %v125 = vadd.f32 %v103, %v113
  %v126 = vadd.f32 %v104, %v113
  %v127 = vadd.f32 %v105, %v113
  %v128 = vadd.f32 %v106, %v113
  %v129 = vadd.f32 %v107, %v113
  %v130 = vadd.f32 %v108, %v113
  %v131 = vmax.f32 %v115, 0.0
  %v132 = vmax.f32 %v116, 0.0
  %v133 = vmax.f32 %v117, 0.0
  %v134 = vmax.f32 %v118, 0.0
  %v135 = vmax.f32 %v119, 0.0
  %v136 = vmax.f32 %v120, 0.0
  %v137 = vmax.f32 %v121, 0.0
  %v138 = vmax.f32 %v122, 0.0
  %v139 = vmax.f32 %v123, 0.0
  %v140 = vmax.f32 %v124, 0.0
  %v141 = vmax.f32 %v125, 0.0
  %v142 = vmax.f32 %v126, 0.0
  %v143 = vmax.f32 %v127, 0.0
  %v144 = vmax.f32 %v128, 0.0
  %v145 = vmax.f32 %v129, 0.0
  %v146 = vmax.f32 %v130, 0.0
  %v147 = vpack.c.bf16 %v132, %v131
  %v148 = vpack.c.bf16 %v134, %v133
  %v149 = vpack.c.bf16 %v136, %v135
  %v150 = vpack.c.bf16 %v138, %v137
  %v151 = vpack.c.bf16 %v140, %v139
  %v152 = vpack.c.bf16 %v142, %v141
  %v153 = vpack.c.bf16 %v144, %v143
  %v154 = vpack.c.bf16 %v146, %v145
  %v155 = vld [vmem:[%s4] sm:$0xf]
  %v156 = vld [vmem:[%s4 + $0x4] sm:$0xf]
  %v157 = vld [vmem:[%s4 + $0x8] sm:$0xf]
  %v158 = vld [vmem:[%s4 + $0xc] sm:$0xf]
  %v159 = vld [vmem:[%s4 + $0x10] sm:$0xf]
  %v160 = vld [vmem:[%s4 + $0x14] sm:$0xf]
  %v161 = vld [vmem:[%s4 + $0x18] sm:$0xf]
  %v162 = vld [vmem:[%s4 + $0x1c] sm:$0xf]
  %v163 = vld [vmem:[%s4 + $0x20] sm:$0xf]
  %v164 = vld [vmem:[%s4 + $0x24] sm:$0xf]
  %v165 = vld [vmem:[%s4 + $0x28] sm:$0xf]
  %v166 = vld [vmem:[%s4 + $0x2c] sm:$0xf]
  %v167 = vld [vmem:[%s4 + $0x30] sm:$0xf]
  %v168 = vld [vmem:[%s4 + $0x34] sm:$0xf]
  %v169 = vld [vmem:[%s4 + $0x38] sm:$0xf]
  %v170 = vld [vmem:[%s4 + $0x3c] sm:$0xf]
  %v187 = vunpack.c.l.b16 %v155
  %v188 = vunpack.c.l.b16 %v156
  %v189 = vunpack.c.l.b16 %v157
  %v190 = vunpack.c.l.b16 %v158
  %v191 = vunpack.c.l.b16 %v159
  %v192 = vunpack.c.l.b16 %v160
  %v193 = vunpack.c.l.b16 %v161
  %v194 = vunpack.c.l.b16 %v162
  %v195 = vunpack.c.l.b16 %v163
  %v196 = vunpack.c.l.b16 %v164
  %v197 = vunpack.c.l.b16 %v165
  %v198 = vunpack.c.l.b16 %v166
  %v199 = vunpack.c.l.b16 %v167
  %v200 = vunpack.c.l.b16 %v168
  %v201 = vunpack.c.l.b16 %v169
  %v202 = vunpack.c.l.b16 %v170
  %v203 = vpack.c.b16 %v188, %v187
  %v204 = vpack.c.b16 %v190, %v189
  %v205 = vpack.c.b16 %v192, %v191
  %v206 = vpack.c.b16 %v194, %v193
  %v207 = vpack.c.b16 %v196, %v195
  %v208 = vpack.c.b16 %v198, %v197
  %v209 = vpack.c.b16 %v200, %v199
  %v210 = vpack.c.b16 %v202, %v201
  %219 = vmatprep.subr.bf16.mxu0 0
  %220 = vmatpush1.bf16.msra.mxu0 %v210
  %221 = vmatprep.subr.bf16.mxu0 0
  %222 = vmatpush1.bf16.msra.mxu0 %v209
  %223 = vmatprep.subr.bf16.mxu0 0
  %224 = vmatpush1.bf16.msra.mxu0 %v208
  %225 = vmatprep.subr.bf16.mxu0 0
  %226 = vmatpush1.bf16.msra.mxu0 %v207
  %227 = vmatprep.subr.bf16.mxu0 0
  %228 = vmatpush1.bf16.msra.mxu0 %v206
  %229 = vmatprep.subr.bf16.mxu0 0
  %230 = vmatpush1.bf16.msra.mxu0 %v205
  %231 = vmatprep.subr.bf16.mxu0 0
  %232 = vmatpush1.bf16.msra.mxu0 %v204
  %233 = vmatprep.subr.bf16.mxu0 0
  %234 = vmatpush1.bf16.msra.mxu0 %v203
  %235 = vmatprep.subr.bf16.mxu0 0
  %236 = vmatpush2.bf16.msra.mxu0 0
  %237 = vmatprep.subr.bf16.mxu0 0
  %238 = vmatpush2.bf16.msra.mxu0 0
  %239 = vmatprep.subr.bf16.mxu0 0
  %240 = vmatpush2.bf16.msra.mxu0 0
  %241 = vmatprep.subr.bf16.mxu0 0
  %242 = vmatpush2.bf16.msra.mxu0 0
  %243 = vmatprep.subr.bf16.mxu0 0
  %244 = vmatpush2.bf16.msra.mxu0 0
  %245 = vmatprep.subr.bf16.mxu0 0
  %246 = vmatpush2.bf16.msra.mxu0 0
  %247 = vmatprep.subr.bf16.mxu0 0
  %248 = vmatpush2.bf16.msra.mxu0 0
  %249 = vmatprep.subr.bf16.mxu0 0
  %250 = vmatpush2.bf16.msra.mxu0 0
  %251 = vmatprep.mubr.bf16.mxu0 0
  %252 = vmatmul.mubr.bf16.gmra.mxu0 %v147
  %v253 = vpop.f32.mrf.mxu0
  %v254 = vadd.f32 0.0, %v253
  %v255 = vpop.f32.mrf.mxu0
  %v256 = vpop.f32.mrf.mxu0
  %v257 = vadd.f32 0.0, %v256
  %v258 = vpop.f32.mrf.mxu0
  %259 = vmatprep.mubr.bf16.mxu0 0
  %260 = vmatmul.mubr.bf16.gmra.mxu0 %v148
  %v261 = vpop.f32.mrf.mxu0
  %v262 = vadd.f32 0.0, %v261
  %v263 = vpop.f32.mrf.mxu0
  %v264 = vpop.f32.mrf.mxu0
  %v265 = vadd.f32 0.0, %v264
  %v266 = vpop.f32.mrf.mxu0
  %267 = vmatprep.mubr.bf16.mxu0 0
  %268 = vmatmul.mubr.bf16.gmra.mxu0 %v149
  %v269 = vpop.f32.mrf.mxu0
  %v270 = vadd.f32 0.0, %v269
  %v271 = vpop.f32.mrf.mxu0
  %v272 = vpop.f32.mrf.mxu0
  %v273 = vadd.f32 0.0, %v272
  %v274 = vpop.f32.mrf.mxu0
  %275 = vmatprep.mubr.bf16.mxu0 0
  %276 = vmatmul.mubr.bf16.gmra.mxu0 %v150
  %v277 = vpop.f32.mrf.mxu0
  %v278 = vadd.f32 0.0, %v277
  %v279 = vpop.f32.mrf.mxu0
  %v280 = vpop.f32.mrf.mxu0
  %v281 = vadd.f32 0.0, %v280
  %v282 = vpop.f32.mrf.mxu0
  %283 = vmatprep.mubr.bf16.mxu0 0
  %284 = vmatmul.mubr.bf16.gmra.mxu0 %v151
  %v285 = vpop.f32.mrf.mxu0
  %v286 = vadd.f32 0.0, %v285
  %v287 = vpop.f32.mrf.mxu0
  %v288 = vpop.f32.mrf.mxu0
  %v289 = vadd.f32 0.0, %v288
  %v290 = vpop.f32.mrf.mxu0
  %291 = vmatprep.mubr.bf16.mxu0 0
  %292 = vmatmul.mubr.bf16.gmra.mxu0 %v152
  %v293 = vpop.f32.mrf.mxu0
  %v294 = vadd.f32 0.0, %v293
  %v295 = vpop.f32.mrf.mxu0
  %v296 = vpop.f32.mrf.mxu0
  %v297 = vadd.f32 0.0, %v296
  %v298 = vpop.f32.mrf.mxu0
  %299 = vmatprep.mubr.bf16.mxu0 0
  %300 = vmatmul.mubr.bf16.gmra.mxu0 %v153
  %v301 = vpop.f32.mrf.mxu0
  %v302 = vadd.f32 0.0, %v301
  %v303 = vpop.f32.mrf.mxu0
  %v304 = vpop.f32.mrf.mxu0
  %v305 = vadd.f32 0.0, %v304
  %v306 = vpop.f32.mrf.mxu0
  %307 = vmatprep.mubr.bf16.mxu0 0
  %308 = vmatmul.mubr.bf16.gmra.mxu0 %v154
  %v309 = vpop.f32.mrf.mxu0
  %v310 = vadd.f32 0.0, %v309
  %v311 = vpop.f32.mrf.mxu0
  %v312 = vpop.f32.mrf.mxu0
  %v313 = vadd.f32 0.0, %v312
  %v314 = vpop.f32.mrf.mxu0
  %315 = vdwg.mxu0
  %v316 = vpack.c.bf16 %v257, %v254
  %v317 = vpack.c.bf16 %v265, %v262
  %v318 = vpack.c.bf16 %v273, %v270
  %v319 = vpack.c.bf16 %v281, %v278
  %v320 = vpack.c.bf16 %v289, %v286
  %v321 = vpack.c.bf16 %v297, %v294
  %v322 = vpack.c.bf16 %v305, %v302
  %v323 = vpack.c.bf16 %v313, %v310
  %v332 = vunpack.c.l.b16 %v316
  %v333 = vunpack.c.h.b16 %v316
  %v334 = vunpack.c.l.b16 %v317
  %v335 = vunpack.c.h.b16 %v317
  %v336 = vunpack.c.l.b16 %v318
  %v337 = vunpack.c.h.b16 %v318
  %v338 = vunpack.c.l.b16 %v319
  %v339 = vunpack.c.h.b16 %v319
  %v340 = vunpack.c.l.b16 %v320
  %v341 = vunpack.c.h.b16 %v320
  %v342 = vunpack.c.l.b16 %v321
  %v343 = vunpack.c.h.b16 %v321
  %v344 = vunpack.c.l.b16 %v322
  %v345 = vunpack.c.h.b16 %v322
  %v346 = vunpack.c.l.b16 %v323
  %v347 = vunpack.c.h.b16 %v323
  %v348 = vpack.c.b16 %v332, %v332
  %v349 = vpack.c.b16 %v333, %v333
  %v350 = vpack.c.b16 %v334, %v334
  %v351 = vpack.c.b16 %v335, %v335
  %v352 = vpack.c.b16 %v336, %v336
  %v353 = vpack.c.b16 %v337, %v337
  %v354 = vpack.c.b16 %v338, %v338
  %v355 = vpack.c.b16 %v339, %v339
  %v356 = vpack.c.b16 %v340, %v340
  %v357 = vpack.c.b16 %v341, %v341
  %v358 = vpack.c.b16 %v342, %v342
  %v359 = vpack.c.b16 %v343, %v343
  %v360 = vpack.c.b16 %v344, %v344
  %v361 = vpack.c.b16 %v345, %v345
  %v362 = vpack.c.b16 %v346, %v346
  %v363 = vpack.c.b16 %v347, %v347
  %380 = vst [vmem:[%s5] sm:$0xf] %v348
  %381 = vst [vmem:[%s5 + $0x4] sm:$0xf] %v349
  %382 = vst [vmem:[%s5 + $0x8] sm:$0xf] %v350
  %383 = vst [vmem:[%s5 + $0xc] sm:$0xf] %v351
  %384 = vst [vmem:[%s5 + $0x10] sm:$0xf] %v352
  %385 = vst [vmem:[%s5 + $0x14] sm:$0xf] %v353
  %386 = vst [vmem:[%s5 + $0x18] sm:$0xf] %v354
  %387 = vst [vmem:[%s5 + $0x1c] sm:$0xf] %v355
  %388 = vst [vmem:[%s5 + $0x20] sm:$0xf] %v356
  %389 = vst [vmem:[%s5 + $0x24] sm:$0xf] %v357
  %390 = vst [vmem:[%s5 + $0x28] sm:$0xf] %v358
  %391 = vst [vmem:[%s5 + $0x2c] sm:$0xf] %v359
  %392 = vst [vmem:[%s5 + $0x30] sm:$0xf] %v360
  %393 = vst [vmem:[%s5 + $0x34] sm:$0xf] %v361
  %394 = vst [vmem:[%s5 + $0x38] sm:$0xf] %v362
  %395 = vst [vmem:[%s5 + $0x3c] sm:$0xf] %v363
  %v396 = vadd.f32 %v254, %v257
  %v397 = vadd.f32 %v396, %v262
  %v398 = vadd.f32 %v397, %v265
  %v399 = vadd.f32 %v398, %v270
  %v400 = vadd.f32 %v399, %v273
  %v401 = vadd.f32 %v400, %v278
  %v402 = vadd.f32 %v401, %v281
  %v403 = vadd.f32 %v402, %v286
  %v404 = vadd.f32 %v403, %v289
  %v405 = vadd.f32 %v404, %v294
  %v406 = vadd.f32 %v405, %v297
  %v407 = vadd.f32 %v406, %v302
  %v408 = vadd.f32 %v407, %v305
  %v409 = vadd.f32 %v408, %v310
  %v410 = vadd.f32 %v409, %v313
  %v411 = vrot.slane %v410, 4
  %v412 = vadd.f32 %v410, %v411
  %v413 = vrot.slane %v412, 2
  %v414 = vadd.f32 %v412, %v413
  %v415 = vrot.slane %v414, 1
  %v416 = vadd.f32 %v414, %v415
  %417 = vst [vmem:[%s6] sm:$0x1] %v416
  %v418 = vmul.f32 %v254, %v254
  %v419 = vmul.f32 %v257, %v257
  %v420 = vmul.f32 %v262, %v262
  %v421 = vmul.f32 %v265, %v265
  %v422 = vmul.f32 %v270, %v270
  %v423 = vmul.f32 %v273, %v273
  %v424 = vmul.f32 %v278, %v278
  %v425 = vmul.f32 %v281, %v281
  %v426 = vmul.f32 %v286, %v286
  %v427 = vmul.f32 %v289, %v289
  %v428 = vmul.f32 %v294, %v294
  %v429 = vmul.f32 %v297, %v297
  %v430 = vmul.f32 %v302, %v302
  %v431 = vmul.f32 %v305, %v305
  %v432 = vmul.f32 %v310, %v310
  %v433 = vmul.f32 %v313, %v313
  %v434 = vadd.f32 %v418, %v419
  %v435 = vadd.f32 %v434, %v420
  %v436 = vadd.f32 %v435, %v421
  %v437 = vadd.f32 %v436, %v422
  %v438 = vadd.f32 %v437, %v423
  %v439 = vadd.f32 %v438, %v424
  %v440 = vadd.f32 %v439, %v425
  %v441 = vadd.f32 %v440, %v426
  %v442 = vadd.f32 %v441, %v427
  %v443 = vadd.f32 %v442, %v428
  %v444 = vadd.f32 %v443, %v429
  %v445 = vadd.f32 %v444, %v430
  %v446 = vadd.f32 %v445, %v431
  %v447 = vadd.f32 %v446, %v432
  %v448 = vadd.f32 %v447, %v433
  %v449 = vrot.slane %v448, 4
  %v450 = vadd.f32 %v448, %v449
  %v451 = vrot.slane %v450, 2
  %v452 = vadd.f32 %v450, %v451
  %v453 = vrot.slane %v452, 1
  %v454 = vadd.f32 %v452, %v453
  %455 = vst [vmem:[%s6 + $0x1] sm:$0x1] %v454
  // Predicated region
  $region22: #{_bottleneck_forward.8} parent=0 // pred_check
    _
  $region23: #{_bottleneck_forward.8} parent=0 // pred_check_branch
    %457 = sbr.rel (0) target = $region25
  $region24: #{_bottleneck_forward.8} parent=0 // pred_region
    _
  $region25: #{_bottleneck_forward.8} parent=0 // pred_fallthru
    _
  // Predicated region
  $region26: #{_bottleneck_forward.8} parent=0 // pred_check
    _
  $region27: #{_bottleneck_forward.8} parent=0 // pred_check_branch
    %459 = sbr.rel (0) target = $region29
  $region28: #{_bottleneck_forward.8} parent=0 // pred_region
    _
  $region29: #{_bottleneck_forward.8} parent=0 // pred_fallthru
    _
  // Predicated region
  $region30: #{_bottleneck_forward.8} parent=0 // pred_check
    _
  $region31: #{_bottleneck_forward.8} parent=0 // pred_check_branch
    %461 = sbr.rel (0) target = $region33
  $region32: #{_bottleneck_forward.8} parent=0 // pred_region
    _
  $region33: #{_bottleneck_forward.8} parent=0 // pred_fallthru
    _
  // Predicated region
  $region34: #{_bottleneck_forward.8} parent=0 // pred_check
    _
  $region35: #{_bottleneck_forward.8} parent=0 // pred_check_branch
    %463 = sbr.rel (0) target = $region37
  $region36: #{_bottleneck_forward.8} parent=0 // pred_region
    _
  $region37: #{_bottleneck_forward.8} parent=0 // pred_fallthru
    _

</llo_original>
